<compile_context>
chip_gen: v7x
topology: tpu7x:2x2x1
jax: 0.10.0
libtpu: 0.0.40
codegen_flags: <defaults>
</compile_context>

<pallas_src>
import jax
import jax.numpy as jnp
from jax.experimental import pallas as pl
from jax.experimental.pallas import tpu as pltpu


# ----------------------------------------------------------------------------
# Fused kernel: conv1/conv2/conv3 (+ReLU) -> max over points -> fc1/fc2/fc3
# (+ReLU, + identity).  Grid iterates over blocks of Bb batch elements.
# ----------------------------------------------------------------------------
def stn3d_kernel(x_ref, w1_ref, b1_ref, w2_ref, b2_ref, w3_ref, b3_ref,
                 w4_ref, b4_ref, w5_ref, b5_ref, w6_ref, b6_ref, o_ref):
    Bb, N, _ = x_ref.shape
    x = x_ref[...].reshape(Bb * N, 3)                       # (Bb*N, 3) f32

    # conv1: kernel (1,3) == per-point linear over the 3 coordinates.
    # Done as 3 broadcast FMAs on the VPU; keeps the MXU free and avoids a
    # K=3 contraction (which pads to the full MXU K dim).
    w1 = w1_ref[...]                                        # (3, 64) f32
    h1 = (x[:, 0:1] * w1[0:1, :]
          + x[:, 1:2] * w1[1:2, :]
          + x[:, 2:3] * w1[2:3, :]
          + b1_ref[...])                                    # (Bb*N, 64)
    h1 = jnp.maximum(h1, 0.0).astype(jnp.bfloat16)

    # conv2 / conv3: 1x1 convs == per-point matmuls, bf16 operands, f32 acc.
    h2 = jnp.dot(h1, w2_ref[...],
                 preferred_element_type=jnp.float32) + b2_ref[...]
    h2 = jnp.maximum(h2, 0.0).astype(jnp.bfloat16)          # (Bb*N, 128)
    h3 = jnp.dot(h2, w3_ref[...],
                 preferred_element_type=jnp.float32) + b3_ref[...]
    h3 = jnp.maximum(h3, 0.0)                               # (Bb*N, 1024) f32

    # MaxPool2d((num_points, 1)) == max over the point axis.
    g = jnp.max(h3.reshape(Bb, N, 1024), axis=1)            # (Bb, 1024) f32

    # FC head (per-row, so it fuses cleanly into the same grid step).
    g16 = g.astype(jnp.bfloat16)
    h4 = jnp.maximum(
        jnp.dot(g16, w4_ref[...], preferred_element_type=jnp.float32)
        + b4_ref[...], 0.0).astype(jnp.bfloat16)            # (Bb, 512)
    h5 = jnp.maximum(
        jnp.dot(h4, w5_ref[...], preferred_element_type=jnp.float32)
        + b5_ref[...], 0.0).astype(jnp.bfloat16)            # (Bb, 256)
    out = jnp.dot(h5, w6_ref[...],
                  preferred_element_type=jnp.float32) + b6_ref[...]   # (Bb, 9)

    # Identity residual: eye(3) flattened is 1.0 at lanes 0, 4, 8 -> build it
    # as an in-kernel constant instead of DMA-ing a tiled (B, 9) input.
    lane = jax.lax.broadcasted_iota(jnp.int32, out.shape, 1)
    eye_flat = jnp.where(lane % 4 == 0, 1.0, 0.0).astype(jnp.float32)
    o_ref[...] = out + eye_flat


# ----------------------------------------------------------------------------
# Batch-block sizing: fold batch into the matmul M dim (target M >= 256 for
# the 256x256 MXU on v6e/v7x) while capping the (Bb*N, 1024) f32 activation
# to ~8 MiB so it fits the default scoped VMEM on every generation (v7x has
# only 64 MiB physical VMEM).  Prefer >= 2 grid steps when each step still
# fills the MXU, so both v7x TensorCores get work.
# ----------------------------------------------------------------------------
def _choose_block_batch(B, N):
    rows_cap = 2048
    bb = max(1, min(B, rows_cap // max(N, 1)))
    while bb > 1 and B % bb != 0:       # keep bb a divisor of B (no padding)
        bb -= 1
    if bb == B and B > 1 and B % 2 == 0 and (B // 2) * N >= 256:
        bb = B // 2
    return bb


# ----------------------------------------------------------------------------
# Parameter construction (deterministic, PyTorch-style uniform init;
# fc3 weights/bias are zeroed as in the module __init__).
# ----------------------------------------------------------------------------
def init_params(key, k=3):
    assert k == 3
    ks = jax.random.split(key, 10)

    def uni(key, shape, fan_in):
        bound = 1.0 / jnp.sqrt(float(fan_in))
        return jax.random.uniform(key, shape, jnp.float32, -bound, bound)

    return {
        # conv1: Conv2d(1, 64, (1, 3)) -> weight (64,1,1,3) stored as (3, 64)
        "w1": uni(ks[0], (3, 64), 3),
        "b1": uni(ks[1], (1, 64), 3),
        # conv2: Conv2d(64, 128, (1,1)) -> (64, 128)
        "w2": uni(ks[2], (64, 128), 64),
        "b2": uni(ks[3], (1, 128), 64),
        # conv3: Conv2d(128, 1024, (1,1)) -> (128, 1024)
        "w3": uni(ks[4], (128, 1024), 128),
        "b3": uni(ks[5], (1, 1024), 128),
        # fc1: Linear(1024, 512)
        "w4": uni(ks[6], (1024, 512), 1024),
        "b4": uni(ks[7], (1, 512), 1024),
        # fc2: Linear(512, 256)
        "w5": uni(ks[8], (512, 256), 512),
        "b5": uni(ks[9], (1, 256), 512),
        # fc3: Linear(256, 9) -- zero init per module __init__
        "w6": jnp.zeros((256, 9), jnp.float32),
        "b6": jnp.zeros((1, 9), jnp.float32),
    }


# ----------------------------------------------------------------------------
# Wrapper: single pallas_call over batch blocks.
# ----------------------------------------------------------------------------
def stn3d_forward(x_nchw, params, k=3):
    B, C, N, K = x_nchw.shape
    assert C == 1 and K == 3 and k == 3
    x = x_nchw.reshape(B, N, K).astype(jnp.float32)   # (B, N, 3)

    bb = _choose_block_batch(B, N)
    grid = (B // bb,)

    bf = jnp.bfloat16
    w2 = params["w2"].astype(bf)
    w3 = params["w3"].astype(bf)
    w4 = params["w4"].astype(bf)
    w5 = params["w5"].astype(bf)
    w6 = params["w6"].astype(bf)

    # Weight/bias blocks have constant index maps, so Pallas keeps them
    # resident across grid steps.  (pl.Buffered(1) would shave a little VMEM
    # but is skipped to keep lowering maximally portable.)
    const = lambda b: (0, 0)
    out_flat = pl.pallas_call(
        stn3d_kernel,
        out_shape=jax.ShapeDtypeStruct((B, k * k), jnp.float32),
        grid_spec=pltpu.PrefetchScalarGridSpec(
            num_scalar_prefetch=0,
            grid=grid,
            in_specs=[
                pl.BlockSpec((bb, N, 3), lambda b: (b, 0, 0)),
                pl.BlockSpec((3, 64), const),
                pl.BlockSpec((1, 64), const),
                pl.BlockSpec((64, 128), const),
                pl.BlockSpec((1, 128), const),
                pl.BlockSpec((128, 1024), const),
                pl.BlockSpec((1, 1024), const),
                pl.BlockSpec((1024, 512), const),
                pl.BlockSpec((1, 512), const),
                pl.BlockSpec((512, 256), const),
                pl.BlockSpec((1, 256), const),
                pl.BlockSpec((256, k * k), const),
                pl.BlockSpec((1, k * k), const),
            ],
            out_specs=pl.BlockSpec((bb, k * k), lambda b: (b, 0)),
        ),
        compiler_params=pltpu.CompilerParams(
            dimension_semantics=("parallel",)),
    )(x, params["w1"], params["b1"], w2, params["b2"], w3, params["b3"],
      w4, params["b4"], w5, params["b5"], w6, params["b6"])

    return out_flat.reshape(B, k, k)


# ----------------------------------------------------------------------------
# Plain-JAX reference.  matmul_dtype=bfloat16 mirrors the kernel's precision
# recipe (bf16 operands, f32 accumulation); float32 is the exact reference.
# ----------------------------------------------------------------------------
def stn3d_ref(x_nchw, params, k=3, matmul_dtype=jnp.float32):
    B, C, N, K = x_nchw.shape
    x = x_nchw.reshape(B, N, K).astype(jnp.float32)

    def mm(a, w):
        return jnp.dot(a.astype(matmul_dtype), w.astype(matmul_dtype),
                       preferred_element_type=jnp.float32)

    h = jax.nn.relu(x @ params["w1"] + params["b1"])          # conv1 in f32
    h = jax.nn.relu(mm(h, params["w2"]) + params["b2"])
    h = jax.nn.relu(mm(h, params["w3"]) + params["b3"])
    g = jnp.max(h, axis=1)
    h = jax.nn.relu(mm(g, params["w4"]) + params["b4"])
    h = jax.nn.relu(mm(h, params["w5"]) + params["b5"])
    out = mm(h, params["w6"]) + params["b6"]
    out = out + jnp.eye(k, dtype=jnp.float32).reshape(1, k * k)
    return out.reshape(B, k, k)


if __name__ == "__main__":
    key = jax.random.PRNGKey(0)
    k_x, k_p = jax.random.split(key)

    B, num_points, k = 2, 64, 3
    # PyTorch NCHW input for k=3: (B, channels=1, num_points, 3)
    x = jax.random.normal(k_x, (B, 1, num_points, 3), dtype=jnp.float32)
    params = init_params(k_p, k=k)

    # The module zero-inits fc3, which makes the output trivially the identity.
    # Use a nonzero fc3 for the numerical check so the whole datapath is
    # exercised, then also verify the module-faithful (zero fc3) init.
    k_w6, k_b6 = jax.random.split(jax.random.fold_in(k_p, 1))
    params_test = dict(params)
    params_test["w6"] = jax.random.uniform(k_w6, (256, k * k), jnp.float32,
                                           -1.0 / 16, 1.0 / 16)
    params_test["b6"] = jax.random.uniform(k_b6, (1, k * k), jnp.float32,
                                           -1.0 / 16, 1.0 / 16)

    out = jax.block_until_ready(stn3d_forward(x, params_test, k=k))
    assert out.shape == (B, k, k)

    # Tight check vs a reference using the same bf16-operand / f32-accum recipe.
    ref_match = stn3d_ref(x, params_test, k=k, matmul_dtype=jnp.bfloat16)
    assert jnp.allclose(out, ref_match, atol=5e-3, rtol=5e-3), \
        "mismatch vs matched-precision reference"

    # Loose check vs the exact f32 reference (bf16 matmul quantization).
    ref_f32 = stn3d_ref(x, params_test, k=k, matmul_dtype=jnp.float32)
    assert jnp.allclose(out, ref_f32, atol=1e-1, rtol=1e-1), \
        "mismatch vs f32 reference"

    # Module-faithful init (zero fc3): output must be the 3x3 identity per row.
    out_init = jax.block_until_ready(stn3d_forward(x, params, k=k))
    eye = jnp.broadcast_to(jnp.eye(3, dtype=jnp.float32), (B, 3, 3))
    assert jnp.allclose(out_init, eye, atol=1e-6), "zero-init fc3 != identity"

    print("KERNEL_OK")
</pallas_src>

<mosaic_0001>
module attributes {stable_mosaic.version = 11 : i64} {
  func.func @stn3d_kernel(%arg0: i32, %arg1: memref<2x64x3xf32, #tpu.memory_space<vmem>>, %arg2: memref<3x64xf32, #tpu.memory_space<vmem>>, %arg3: memref<1x64xf32, #tpu.memory_space<vmem>>, %arg4: memref<64x128xbf16, #tpu.memory_space<vmem>>, %arg5: memref<1x128xf32, #tpu.memory_space<vmem>>, %arg6: memref<128x1024xbf16, #tpu.memory_space<vmem>>, %arg7: memref<1x1024xf32, #tpu.memory_space<vmem>>, %arg8: memref<1024x512xbf16, #tpu.memory_space<vmem>>, %arg9: memref<1x512xf32, #tpu.memory_space<vmem>>, %arg10: memref<512x256xbf16, #tpu.memory_space<vmem>>, %arg11: memref<1x256xf32, #tpu.memory_space<vmem>>, %arg12: memref<256x9xbf16, #tpu.memory_space<vmem>>, %arg13: memref<1x9xf32, #tpu.memory_space<vmem>>, %arg14: memref<2x9xf32, #tpu.memory_space<vmem>>) attributes {dimension_semantics = [#tpu.dimension_semantics<parallel>], iteration_bounds = array<i64: 1>, scalar_prefetch = 0 : i64, scratch_operands = 0 : i64, tpu.core_type = #tpu.core_type<tc>, window_params = [{transform_indices = @transform_0, window_bounds = array<i64: 2, 64, 3>}, {pipeline_mode = #tpu.pipeline_mode<synchronous>, transform_indices = @transform_1, window_bounds = array<i64: 3, 64>}, {pipeline_mode = #tpu.pipeline_mode<synchronous>, transform_indices = @transform_2, window_bounds = array<i64: 1, 64>}, {pipeline_mode = #tpu.pipeline_mode<synchronous>, transform_indices = @transform_3, window_bounds = array<i64: 64, 128>}, {pipeline_mode = #tpu.pipeline_mode<synchronous>, transform_indices = @transform_4, window_bounds = array<i64: 1, 128>}, {pipeline_mode = #tpu.pipeline_mode<synchronous>, transform_indices = @transform_5, window_bounds = array<i64: 128, 1024>}, {pipeline_mode = #tpu.pipeline_mode<synchronous>, transform_indices = @transform_6, window_bounds = array<i64: 1, 1024>}, {pipeline_mode = #tpu.pipeline_mode<synchronous>, transform_indices = @transform_7, window_bounds = array<i64: 1024, 512>}, {pipeline_mode = #tpu.pipeline_mode<synchronous>, transform_indices = @transform_8, window_bounds = array<i64: 1, 512>}, {pipeline_mode = #tpu.pipeline_mode<synchronous>, transform_indices = @transform_9, window_bounds = array<i64: 512, 256>}, {pipeline_mode = #tpu.pipeline_mode<synchronous>, transform_indices = @transform_10, window_bounds = array<i64: 1, 256>}, {pipeline_mode = #tpu.pipeline_mode<synchronous>, transform_indices = @transform_11, window_bounds = array<i64: 256, 9>}, {pipeline_mode = #tpu.pipeline_mode<synchronous>, transform_indices = @transform_12, window_bounds = array<i64: 1, 9>}, {transform_indices = @transform_13, window_bounds = array<i64: 2, 9>}]} {
    %c0 = arith.constant 0 : index
    %c0_0 = arith.constant 0 : index
    %c0_1 = arith.constant 0 : index
    %0 = vector.load %arg1[%c0, %c0_0, %c0_1] : memref<2x64x3xf32, #tpu.memory_space<vmem>>, vector<2x64x3xf32>
    %1 = vector.shape_cast %0 : vector<2x64x3xf32> to vector<128x3xf32>
    %c0_2 = arith.constant 0 : index
    %c0_3 = arith.constant 0 : index
    %2 = vector.load %arg2[%c0_2, %c0_3] : memref<3x64xf32, #tpu.memory_space<vmem>>, vector<3x64xf32>
    %3 = vector.extract_strided_slice %1 {offsets = [0, 0], sizes = [128, 1], strides = [1, 1]} : vector<128x3xf32> to vector<128x1xf32>
    %4 = vector.extract_strided_slice %2 {offsets = [0, 0], sizes = [1, 64], strides = [1, 1]} : vector<3x64xf32> to vector<1x64xf32>
    %5 = vector.broadcast %3 : vector<128x1xf32> to vector<128x64xf32>
    %6 = vector.broadcast %4 : vector<1x64xf32> to vector<128x64xf32>
    %7 = arith.mulf %5, %6 : vector<128x64xf32>
    %8 = vector.extract_strided_slice %1 {offsets = [0, 1], sizes = [128, 1], strides = [1, 1]} : vector<128x3xf32> to vector<128x1xf32>
    %9 = vector.extract_strided_slice %2 {offsets = [1, 0], sizes = [1, 64], strides = [1, 1]} : vector<3x64xf32> to vector<1x64xf32>
    %10 = vector.broadcast %8 : vector<128x1xf32> to vector<128x64xf32>
    %11 = vector.broadcast %9 : vector<1x64xf32> to vector<128x64xf32>
    %12 = arith.mulf %10, %11 : vector<128x64xf32>
    %13 = arith.addf %7, %12 : vector<128x64xf32>
    %14 = vector.extract_strided_slice %1 {offsets = [0, 2], sizes = [128, 1], strides = [1, 1]} : vector<128x3xf32> to vector<128x1xf32>
    %15 = vector.extract_strided_slice %2 {offsets = [2, 0], sizes = [1, 64], strides = [1, 1]} : vector<3x64xf32> to vector<1x64xf32>
    %16 = vector.broadcast %14 : vector<128x1xf32> to vector<128x64xf32>
    %17 = vector.broadcast %15 : vector<1x64xf32> to vector<128x64xf32>
    %18 = arith.mulf %16, %17 : vector<128x64xf32>
    %19 = arith.addf %13, %18 : vector<128x64xf32>
    %c0_4 = arith.constant 0 : index
    %c0_5 = arith.constant 0 : index
    %20 = vector.load %arg3[%c0_4, %c0_5] : memref<1x64xf32, #tpu.memory_space<vmem>>, vector<1x64xf32>
    %21 = vector.broadcast %20 : vector<1x64xf32> to vector<128x64xf32>
    %22 = arith.addf %19, %21 : vector<128x64xf32>
    %cst = arith.constant 0.000000e+00 : f32
    %23 = vector.broadcast %cst : f32 to vector<128x64xf32>
    %24 = arith.maximumf %22, %23 : vector<128x64xf32>
    %25 = arith.truncf %24 : vector<128x64xf32> to vector<128x64xbf16>
    %c0_6 = arith.constant 0 : index
    %c0_7 = arith.constant 0 : index
    %26 = vector.load %arg4[%c0_6, %c0_7] : memref<64x128xbf16, #tpu.memory_space<vmem>>, vector<64x128xbf16>
    %cst_8 = arith.constant dense<0.000000e+00> : vector<128x128xf32>
    %27 = tpu.matmul %25, %26, %cst_8 {dimension_numbers = #tpu.dot_dimension_numbers<[1], [0], [0], [1], [0, 0, 1, 1], [], []>} : vector<128x64xbf16>, vector<64x128xbf16>, vector<128x128xf32> -> vector<128x128xf32>
    %c0_9 = arith.constant 0 : index
    %c0_10 = arith.constant 0 : index
    %28 = vector.load %arg5[%c0_9, %c0_10] : memref<1x128xf32, #tpu.memory_space<vmem>>, vector<1x128xf32>
    %29 = vector.broadcast %28 : vector<1x128xf32> to vector<128x128xf32>
    %30 = arith.addf %27, %29 : vector<128x128xf32>
    %cst_11 = arith.constant 0.000000e+00 : f32
    %31 = vector.broadcast %cst_11 : f32 to vector<128x128xf32>
    %32 = arith.maximumf %30, %31 : vector<128x128xf32>
    %33 = arith.truncf %32 : vector<128x128xf32> to vector<128x128xbf16>
    %c0_12 = arith.constant 0 : index
    %c0_13 = arith.constant 0 : index
    %34 = vector.load %arg6[%c0_12, %c0_13] : memref<128x1024xbf16, #tpu.memory_space<vmem>>, vector<128x1024xbf16>
    %cst_14 = arith.constant dense<0.000000e+00> : vector<128x1024xf32>
    %35 = tpu.matmul %33, %34, %cst_14 {dimension_numbers = #tpu.dot_dimension_numbers<[1], [0], [0], [1], [0, 0, 1, 1], [], []>} : vector<128x128xbf16>, vector<128x1024xbf16>, vector<128x1024xf32> -> vector<128x1024xf32>
    %c0_15 = arith.constant 0 : index
    %c0_16 = arith.constant 0 : index
    %36 = vector.load %arg7[%c0_15, %c0_16] : memref<1x1024xf32, #tpu.memory_space<vmem>>, vector<1x1024xf32>
    %37 = vector.broadcast %36 : vector<1x1024xf32> to vector<128x1024xf32>
    %38 = arith.addf %35, %37 : vector<128x1024xf32>
    %cst_17 = arith.constant 0.000000e+00 : f32
    %39 = vector.broadcast %cst_17 : f32 to vector<128x1024xf32>
    %40 = arith.maximumf %38, %39 : vector<128x1024xf32>
    %41 = vector.shape_cast %40 : vector<128x1024xf32> to vector<2x64x1024xf32>
    %cst_18 = arith.constant dense<0xFF800000> : vector<2x1024xf32>
    %42 = vector.multi_reduction <maximumf>, %41, %cst_18 [1] : vector<2x64x1024xf32> to vector<2x1024xf32>
    %43 = arith.truncf %42 : vector<2x1024xf32> to vector<2x1024xbf16>
    %c0_19 = arith.constant 0 : index
    %c0_20 = arith.constant 0 : index
    %44 = vector.load %arg8[%c0_19, %c0_20] : memref<1024x512xbf16, #tpu.memory_space<vmem>>, vector<1024x512xbf16>
    %cst_21 = arith.constant dense<0.000000e+00> : vector<2x512xf32>
    %45 = tpu.matmul %43, %44, %cst_21 {dimension_numbers = #tpu.dot_dimension_numbers<[1], [0], [0], [1], [0, 0, 1, 1], [], []>} : vector<2x1024xbf16>, vector<1024x512xbf16>, vector<2x512xf32> -> vector<2x512xf32>
    %c0_22 = arith.constant 0 : index
    %c0_23 = arith.constant 0 : index
    %46 = vector.load %arg9[%c0_22, %c0_23] : memref<1x512xf32, #tpu.memory_space<vmem>>, vector<1x512xf32>
    %47 = vector.broadcast %46 : vector<1x512xf32> to vector<2x512xf32>
    %48 = arith.addf %45, %47 : vector<2x512xf32>
    %cst_24 = arith.constant 0.000000e+00 : f32
    %49 = vector.broadcast %cst_24 : f32 to vector<2x512xf32>
    %50 = arith.maximumf %48, %49 : vector<2x512xf32>
    %51 = arith.truncf %50 : vector<2x512xf32> to vector<2x512xbf16>
    %c0_25 = arith.constant 0 : index
    %c0_26 = arith.constant 0 : index
    %52 = vector.load %arg10[%c0_25, %c0_26] : memref<512x256xbf16, #tpu.memory_space<vmem>>, vector<512x256xbf16>
    %cst_27 = arith.constant dense<0.000000e+00> : vector<2x256xf32>
    %53 = tpu.matmul %51, %52, %cst_27 {dimension_numbers = #tpu.dot_dimension_numbers<[1], [0], [0], [1], [0, 0, 1, 1], [], []>} : vector<2x512xbf16>, vector<512x256xbf16>, vector<2x256xf32> -> vector<2x256xf32>
    %c0_28 = arith.constant 0 : index
    %c0_29 = arith.constant 0 : index
    %54 = vector.load %arg11[%c0_28, %c0_29] : memref<1x256xf32, #tpu.memory_space<vmem>>, vector<1x256xf32>
    %55 = vector.broadcast %54 : vector<1x256xf32> to vector<2x256xf32>
    %56 = arith.addf %53, %55 : vector<2x256xf32>
    %cst_30 = arith.constant 0.000000e+00 : f32
    %57 = vector.broadcast %cst_30 : f32 to vector<2x256xf32>
    %58 = arith.maximumf %56, %57 : vector<2x256xf32>
    %59 = arith.truncf %58 : vector<2x256xf32> to vector<2x256xbf16>
    %c0_31 = arith.constant 0 : index
    %c0_32 = arith.constant 0 : index
    %60 = vector.load %arg12[%c0_31, %c0_32] : memref<256x9xbf16, #tpu.memory_space<vmem>>, vector<256x9xbf16>
    %cst_33 = arith.constant dense<0.000000e+00> : vector<2x9xf32>
    %61 = tpu.matmul %59, %60, %cst_33 {dimension_numbers = #tpu.dot_dimension_numbers<[1], [0], [0], [1], [0, 0, 1, 1], [], []>} : vector<2x256xbf16>, vector<256x9xbf16>, vector<2x9xf32> -> vector<2x9xf32>
    %c0_34 = arith.constant 0 : index
    %c0_35 = arith.constant 0 : index
    %62 = vector.load %arg13[%c0_34, %c0_35] : memref<1x9xf32, #tpu.memory_space<vmem>>, vector<1x9xf32>
    %63 = vector.broadcast %62 : vector<1x9xf32> to vector<2x9xf32>
    %64 = arith.addf %61, %63 : vector<2x9xf32>
    %65 = tpu.iota {dimensions = array<i32: 1>} : vector<2x9xi32>
    %c4_i32 = arith.constant 4 : i32
    %c0_i32 = arith.constant 0 : i32
    %66 = arith.cmpi eq, %c4_i32, %c0_i32 : i32
    %c1_i32 = arith.constant 1 : i32
    %67 = arith.select %66, %c1_i32, %c4_i32 : i32
    %68 = vector.broadcast %67 : i32 to vector<2x9xi32>
    %69 = arith.remsi %65, %68 : vector<2x9xi32>
    %c0_i32_36 = arith.constant 0 : i32
    %70 = vector.broadcast %c0_i32_36 : i32 to vector<2x9xi32>
    %71 = arith.cmpi ne, %69, %70 : vector<2x9xi32>
    %c0_i32_37 = arith.constant 0 : i32
    %72 = vector.broadcast %c0_i32_37 : i32 to vector<2x9xi32>
    %73 = arith.cmpi slt, %69, %72 : vector<2x9xi32>
    %c0_i32_38 = arith.constant 0 : i32
    %74 = arith.cmpi slt, %67, %c0_i32_38 : i32
    %75 = vector.broadcast %74 : i1 to vector<2x9xi1>
    %76 = vector.broadcast %75 : vector<2x9xi1> to vector<2x9xi1>
    %77 = arith.xori %73, %76 : vector<2x9xi1>
    %78 = arith.andi %77, %71 : vector<2x9xi1>
    %79 = vector.broadcast %67 : i32 to vector<2x9xi32>
    %80 = arith.addi %69, %79 : vector<2x9xi32>
    %81 = arith.select %78, %80, %69 : vector<2x9xi1>, vector<2x9xi32>
    %c0_i32_39 = arith.constant 0 : i32
    %82 = vector.broadcast %c0_i32_39 : i32 to vector<2x9xi32>
    %83 = arith.cmpi eq, %81, %82 : vector<2x9xi32>
    %cst_40 = arith.constant 1.000000e+00 : f32
    %cst_41 = arith.constant 0.000000e+00 : f32
    %84 = vector.broadcast %cst_40 : f32 to vector<2x9xf32>
    %85 = vector.broadcast %cst_41 : f32 to vector<2x9xf32>
    %86 = arith.select %83, %84, %85 : vector<2x9xi1>, vector<2x9xf32>
    %87 = arith.addf %64, %86 : vector<2x9xf32>
    %c0_42 = arith.constant 0 : index
    %c0_43 = arith.constant 0 : index
    %88 = vector.load %arg14[%c0_42, %c0_43] : memref<2x9xf32, #tpu.memory_space<vmem>>, vector<2x9xf32>
    tpu.vector_store %arg14[%c0_42, %c0_43], %87 {strides = array<i32>} : memref<2x9xf32, #tpu.memory_space<vmem>>, vector<2x9xf32>,
    return
  }
  func.func @transform_0(%arg0: i32) -> (i32, i32, i32) {
    %c0_i32 = arith.constant 0 : i32
    %c0_i32_0 = arith.constant 0 : i32
    %c0_i32_1 = arith.constant 0 : i32
    return %arg0, %c0_i32, %c0_i32_0 : i32, i32, i32
  }
  func.func @transform_1(%arg0: i32) -> (i32, i32) {
    %c0_i32 = arith.constant 0 : i32
    %c0_i32_0 = arith.constant 0 : i32
    %c0_i32_1 = arith.constant 0 : i32
    return %c0_i32, %c0_i32_0 : i32, i32
  }
  func.func @transform_2(%arg0: i32) -> (i32, i32) {
    %c0_i32 = arith.constant 0 : i32
    %c0_i32_0 = arith.constant 0 : i32
    %c0_i32_1 = arith.constant 0 : i32
    return %c0_i32, %c0_i32_0 : i32, i32
  }
  func.func @transform_3(%arg0: i32) -> (i32, i32) {
    %c0_i32 = arith.constant 0 : i32
    %c0_i32_0 = arith.constant 0 : i32
    %c0_i32_1 = arith.constant 0 : i32
    return %c0_i32, %c0_i32_0 : i32, i32
  }
  func.func @transform_4(%arg0: i32) -> (i32, i32) {
    %c0_i32 = arith.constant 0 : i32
    %c0_i32_0 = arith.constant 0 : i32
    %c0_i32_1 = arith.constant 0 : i32
    return %c0_i32, %c0_i32_0 : i32, i32
  }
  func.func @transform_5(%arg0: i32) -> (i32, i32) {
    %c0_i32 = arith.constant 0 : i32
    %c0_i32_0 = arith.constant 0 : i32
    %c0_i32_1 = arith.constant 0 : i32
    return %c0_i32, %c0_i32_0 : i32, i32
  }
  func.func @transform_6(%arg0: i32) -> (i32, i32) {
    %c0_i32 = arith.constant 0 : i32
    %c0_i32_0 = arith.constant 0 : i32
    %c0_i32_1 = arith.constant 0 : i32
    return %c0_i32, %c0_i32_0 : i32, i32
  }
  func.func @transform_7(%arg0: i32) -> (i32, i32) {
    %c0_i32 = arith.constant 0 : i32
    %c0_i32_0 = arith.constant 0 : i32
    %c0_i32_1 = arith.constant 0 : i32
    return %c0_i32, %c0_i32_0 : i32, i32
  }
  func.func @transform_8(%arg0: i32) -> (i32, i32) {
    %c0_i32 = arith.constant 0 : i32
    %c0_i32_0 = arith.constant 0 : i32
    %c0_i32_1 = arith.constant 0 : i32
    return %c0_i32, %c0_i32_0 : i32, i32
  }
  func.func @transform_9(%arg0: i32) -> (i32, i32) {
    %c0_i32 = arith.constant 0 : i32
    %c0_i32_0 = arith.constant 0 : i32
    %c0_i32_1 = arith.constant 0 : i32
    return %c0_i32, %c0_i32_0 : i32, i32
  }
  func.func @transform_10(%arg0: i32) -> (i32, i32) {
    %c0_i32 = arith.constant 0 : i32
    %c0_i32_0 = arith.constant 0 : i32
    %c0_i32_1 = arith.constant 0 : i32
    return %c0_i32, %c0_i32_0 : i32, i32
  }
  func.func @transform_11(%arg0: i32) -> (i32, i32) {
    %c0_i32 = arith.constant 0 : i32
    %c0_i32_0 = arith.constant 0 : i32
    %c0_i32_1 = arith.constant 0 : i32
    return %c0_i32, %c0_i32_0 : i32, i32
  }
  func.func @transform_12(%arg0: i32) -> (i32, i32) {
    %c0_i32 = arith.constant 0 : i32
    %c0_i32_0 = arith.constant 0 : i32
    %c0_i32_1 = arith.constant 0 : i32
    return %c0_i32, %c0_i32_0 : i32, i32
  }
  func.func @transform_13(%arg0: i32) -> (i32, i32) {
    %c0_i32 = arith.constant 0 : i32
    %c0_i32_0 = arith.constant 0 : i32
    return %arg0, %c0_i32 : i32, i32
  }
}

</mosaic_0001>

<llo_original>
// kernel: tpu_custom_call.1
$region0: #{tpu_custom_call.1}
  #allocation0 [shape = 'u32[]', space=smem, size = 0x4, offset = 0x4, fixed_abs, tag = 'smem constant byte address 0x4 - core index']
  #allocation1 [shape = 'u32[144,128]{1,0:T(1,128)}', space=vmem, size = 0x12000, scoped, tag = 'internal scratch']
  %s0 = inlined_call_operand.vmem [shape: f32[2,64,3], index: 0, kind: input, shape index: {}]
  %s1 = inlined_call_operand.vmem [shape: f32[3,64], index: 1, kind: input, shape index: {}]
  %s2 = inlined_call_operand.vmem [shape: f32[1,64], index: 2, kind: input, shape index: {}]
  %s3 = inlined_call_operand.vmem [shape: bf16[64,128], index: 3, kind: input, shape index: {}]
  %s4 = inlined_call_operand.vmem [shape: f32[1,128], index: 4, kind: input, shape index: {}]
  %s5 = inlined_call_operand.hbm [shape: bf16[128,1024], index: 5, kind: input, shape index: {}]
  %s6 = inlined_call_operand.vmem [shape: f32[1,1024], index: 6, kind: input, shape index: {}]
  %s7 = inlined_call_operand.hbm [shape: bf16[1024,512], index: 7, kind: input, shape index: {}]
  %s8 = inlined_call_operand.vmem [shape: f32[1,512], index: 8, kind: input, shape index: {}]
  %s9 = inlined_call_operand.hbm [shape: bf16[512,256], index: 9, kind: input, shape index: {}]
  %s10 = inlined_call_operand.vmem [shape: f32[1,256], index: 10, kind: input, shape index: {}]
  %s11 = inlined_call_operand.vmem [shape: bf16[256,9], index: 11, kind: input, shape index: {}]
  %s12 = inlined_call_operand.vmem [shape: f32[1,9], index: 12, kind: input, shape index: {}]
  %s13 = inlined_call_operand.hbm [shape: f32[2,9], index: 13, kind: output, shape index: {}]
  %s14 = sld [smem:[#allocation0]]
  $region74: #{tpu_custom_call.1} parent=0
    _
  %s16 = ssub.s32 1, %s14
  %s17 = scalar_select 0, %s16, %s14
  $region1: #{tpu_custom_call.1} parent=0
    #allocation2 [shape = 'u8[262144]{0}', space=vmem, size = 0x40000, scoped, tag = 'input window, operand 5, single buffered']
    #allocation3 [shape = 's32[1]{0}', space=sflag, size = 0x4, scoped, tag = 'scoped memory for tpu_custom_call.1']
    #allocation4 [shape = 's32[1]{0}', space=sflag, size = 0x4, scoped, tag = 'scoped memory for tpu_custom_call.1']
    #allocation5 [shape = 'u8[1048576]{0}', space=vmem, size = 0x100000, scoped, tag = 'input window, operand 7, single buffered']
    #allocation6 [shape = 's32[1]{0}', space=sflag, size = 0x4, scoped, tag = 'scoped memory for tpu_custom_call.1']
    #allocation7 [shape = 'u8[262144]{0}', space=vmem, size = 0x40000, scoped, tag = 'input window, operand 9, single buffered']
    #allocation8 [shape = 'u8[1024]{0}', space=vmem, size = 0x400, scoped, tag = 'output window, operand 0, single buffered']
    %18 = vsyncpa [#allocation3], 0
    %19 = vsyncpa [#allocation6], 0
    %20 = vsyncpa [#allocation4], 0
    // Predicated region
    $region2: #{tpu_custom_call.1} parent=1 // pred_check
      _
    $region3: #{tpu_custom_call.1} parent=1 // pred_check_branch
      %22 = sbr.rel (0) target = $region5
    $region4: #{tpu_custom_call.1} parent=1 // pred_region
      _
    $region5: #{tpu_custom_call.1} parent=1 // pred_fallthru
      _
    // Predicated region
    $region6: #{tpu_custom_call.1} parent=1 // pred_check
      _
    $region7: #{tpu_custom_call.1} parent=1 // pred_check_branch
      %24 = sbr.rel (0) target = $region9
    $region8: #{tpu_custom_call.1} parent=1 // pred_region
      _
    $region9: #{tpu_custom_call.1} parent=1 // pred_fallthru
      _
    // Predicated region
    $region10: #{tpu_custom_call.1} parent=1 // pred_check
      _
    $region11: #{tpu_custom_call.1} parent=1 // pred_check_branch
      %26 = sbr.rel (0) target = $region13
    $region12: #{tpu_custom_call.1} parent=1 // pred_region
      _
    $region13: #{tpu_custom_call.1} parent=1 // pred_fallthru
      _
    // Predicated region
    $region14: #{tpu_custom_call.1} parent=1 // pred_check
      _
    $region15: #{tpu_custom_call.1} parent=1 // pred_check_branch
      %28 = sbr.rel (0) target = $region17
    $region16: #{tpu_custom_call.1} parent=1 // pred_region
      _
    $region17: #{tpu_custom_call.1} parent=1 // pred_fallthru
      _
    // Predicated region
    $region18: #{tpu_custom_call.1} parent=1 // pred_check
      _
    $region19: #{tpu_custom_call.1} parent=1 // pred_check_branch
      %30 = sbr.rel (0) target = $region21
    $region20: #{tpu_custom_call.1} parent=1 // pred_region
      _
    $region21: #{tpu_custom_call.1} parent=1 // pred_fallthru
      _
    // Predicated region
    $region22: #{tpu_custom_call.1} parent=1 // pred_check
      _
    $region23: #{tpu_custom_call.1} parent=1 // pred_check_branch
      %32 = sbr.rel (0) target = $region25
    $region24: #{tpu_custom_call.1} parent=1 // pred_region
      %s34 = ssub.s32 8192, 8192
      %35 = vsyncadd [#allocation3], %s34
      %s36 = sshll.u32 [#allocation2], 4
      %s37 = int_to_ptr.vmem [resolvable:$true] %s36
      %42 = dma.hbm_to_vmem [thread:$0]  %s5, 8192, %s37, [#allocation3], 512, 512, 32
    $region25: #{tpu_custom_call.1} parent=1 // pred_fallthru
      _
    // Predicated region
    $region26: #{tpu_custom_call.1} parent=1 // pred_check
      _
    $region27: #{tpu_custom_call.1} parent=1 // pred_check_branch
      %44 = sbr.rel (0) target = $region29
    $region28: #{tpu_custom_call.1} parent=1 // pred_region
      _
    $region29: #{tpu_custom_call.1} parent=1 // pred_fallthru
      _
    // Predicated region
    $region30: #{tpu_custom_call.1} parent=1 // pred_check
      _
    $region31: #{tpu_custom_call.1} parent=1 // pred_check_branch
      %46 = sbr.rel (0) target = $region33
    $region32: #{tpu_custom_call.1} parent=1 // pred_region
      %s48 = ssub.s32 32768, 32768
      %49 = vsyncadd [#allocation6], %s48
      %s50 = sshll.u32 [#allocation5], 4
      %s51 = int_to_ptr.vmem [resolvable:$true] %s50
      %56 = dma.hbm_to_vmem [thread:$0]  %s7, 32768, %s51, [#allocation6], 256, 256, 16
    $region33: #{tpu_custom_call.1} parent=1 // pred_fallthru
      _
    // Predicated region
    $region34: #{tpu_custom_call.1} parent=1 // pred_check
      _
    $region35: #{tpu_custom_call.1} parent=1 // pred_check_branch
      %58 = sbr.rel (0) target = $region37
    $region36: #{tpu_custom_call.1} parent=1 // pred_region
      _
    $region37: #{tpu_custom_call.1} parent=1 // pred_fallthru
      _
    // Predicated region
    $region38: #{tpu_custom_call.1} parent=1 // pred_check
      _
    $region39: #{tpu_custom_call.1} parent=1 // pred_check_branch
      %60 = sbr.rel (0) target = $region41
    $region40: #{tpu_custom_call.1} parent=1 // pred_region
      %s62 = ssub.s32 8192, 8192
      %63 = vsyncadd [#allocation6], %s62
      %s64 = sshll.u32 [#allocation7], 4
      %s65 = int_to_ptr.vmem [resolvable:$true] %s64
      %70 = dma.hbm_to_vmem [thread:$0]  %s9, 8192, %s65, [#allocation6], 128, 128, 8
    $region41: #{tpu_custom_call.1} parent=1 // pred_fallthru
      _
    // Predicated region
    $region42: #{tpu_custom_call.1} parent=1 // pred_check
      _
    $region43: #{tpu_custom_call.1} parent=1 // pred_check_branch
      %72 = sbr.rel (0) target = $region45
    $region44: #{tpu_custom_call.1} parent=1 // pred_region
      _
    $region45: #{tpu_custom_call.1} parent=1 // pred_fallthru
      _
    // Predicated region
    $region46: #{tpu_custom_call.1} parent=1 // pred_check
      _
    $region47: #{tpu_custom_call.1} parent=1 // pred_check_branch
      %74 = sbr.rel (0) target = $region49
    $region48: #{tpu_custom_call.1} parent=1 // pred_region
      _
    $region49: #{tpu_custom_call.1} parent=1 // pred_fallthru
      _
    // Predicated region
    $region50: #{tpu_custom_call.1} parent=1 // pred_check
      _
    $region51: #{tpu_custom_call.1} parent=1 // pred_check_branch
      %76 = sbr.rel (0) target = $region53
    $region52: #{tpu_custom_call.1} parent=1 // pred_region
      _
    $region53: #{tpu_custom_call.1} parent=1 // pred_fallthru
      _
    // Predicated region
    $region54: #{tpu_custom_call.1} parent=1 // pred_check
      _
    $region55: #{tpu_custom_call.1} parent=1 // pred_check_branch
      %78 = sbr.rel (0) target = $region57
    $region56: #{tpu_custom_call.1} parent=1 // pred_region
      %79 = dma.done [#allocation3], 8192
    $region57: #{tpu_custom_call.1} parent=1 // pred_fallthru
      _
    // Predicated region
    $region58: #{tpu_custom_call.1} parent=1 // pred_check
      _
    $region59: #{tpu_custom_call.1} parent=1 // pred_check_branch
      %81 = sbr.rel (0) target = $region61
    $region60: #{tpu_custom_call.1} parent=1 // pred_region
      %82 = dma.done [#allocation6], 32768
    $region61: #{tpu_custom_call.1} parent=1 // pred_fallthru
      _
    // Predicated region
    $region62: #{tpu_custom_call.1} parent=1 // pred_check
      _
    $region63: #{tpu_custom_call.1} parent=1 // pred_check_branch
      %84 = sbr.rel (0) target = $region65
    $region64: #{tpu_custom_call.1} parent=1 // pred_region
      %85 = dma.done [#allocation6], 8192
    $region65: #{tpu_custom_call.1} parent=1 // pred_fallthru
      _
    %v87 = vld [vmem:[%s0] sm:$0xff]
    %v88 = vld [vmem:[%s0 + $0x8] sm:$0xff]
    %v89 = vld [vmem:[%s0 + $0x10] sm:$0xff]
    %v90 = vld [vmem:[%s0 + $0x18] sm:$0xff]
    %v91 = vld [vmem:[%s0 + $0x20] sm:$0xff]
    %v92 = vld [vmem:[%s0 + $0x28] sm:$0xff]
    %v93 = vld [vmem:[%s0 + $0x30] sm:$0xff]
    %v94 = vld [vmem:[%s0 + $0x38] sm:$0xff]
    %v95 = vld [vmem:[%s0 + $0x40] sm:$0xff]
    %v96 = vld [vmem:[%s0 + $0x48] sm:$0xff]
    %v97 = vld [vmem:[%s0 + $0x50] sm:$0xff]
    %v98 = vld [vmem:[%s0 + $0x58] sm:$0xff]
    %v99 = vld [vmem:[%s0 + $0x60] sm:$0xff]
    %v100 = vld [vmem:[%s0 + $0x68] sm:$0xff]
    %v101 = vld [vmem:[%s0 + $0x70] sm:$0xff]
    %v102 = vld [vmem:[%s0 + $0x78] sm:$0xff]
    %v103 = vld [vmem:[%s1] sm:$0x7]
    %105 = vset.pattern.permute.xlu0 0
    %106 = vperm.xlu0 %105, %v87
    %v107 = vpop.permute.xlu0 %106
    %110 = vset.pattern.permute.xlu0 0
    %111 = vperm.xlu0 %110, %v88
    %v112 = vpop.permute.xlu0 %111
    %115 = vset.pattern.permute.xlu0 0
    %116 = vperm.xlu0 %115, %v89
    %v117 = vpop.permute.xlu0 %116
    %120 = vset.pattern.permute.xlu0 0
    %121 = vperm.xlu0 %120, %v90
    %v122 = vpop.permute.xlu0 %121
    %125 = vset.pattern.permute.xlu0 0
    %126 = vperm.xlu0 %125, %v91
    %v127 = vpop.permute.xlu0 %126
    %130 = vset.pattern.permute.xlu0 0
    %131 = vperm.xlu0 %130, %v92
    %v132 = vpop.permute.xlu0 %131
    %135 = vset.pattern.permute.xlu0 0
    %136 = vperm.xlu0 %135, %v93
    %v137 = vpop.permute.xlu0 %136
    %140 = vset.pattern.permute.xlu0 0
    %141 = vperm.xlu0 %140, %v94
    %v142 = vpop.permute.xlu0 %141
    %145 = vset.pattern.permute.xlu0 0
    %146 = vperm.xlu0 %145, %v95
    %v147 = vpop.permute.xlu0 %146
    %150 = vset.pattern.permute.xlu0 0
    %151 = vperm.xlu0 %150, %v96
    %v152 = vpop.permute.xlu0 %151
    %155 = vset.pattern.permute.xlu0 0
    %156 = vperm.xlu0 %155, %v97
    %v157 = vpop.permute.xlu0 %156
    %160 = vset.pattern.permute.xlu0 0
    %161 = vperm.xlu0 %160, %v98
    %v162 = vpop.permute.xlu0 %161
    %165 = vset.pattern.permute.xlu0 0
    %166 = vperm.xlu0 %165, %v99
    %v167 = vpop.permute.xlu0 %166
    %170 = vset.pattern.permute.xlu0 0
    %171 = vperm.xlu0 %170, %v100
    %v172 = vpop.permute.xlu0 %171
    %175 = vset.pattern.permute.xlu0 0
    %176 = vperm.xlu0 %175, %v101
    %v177 = vpop.permute.xlu0 %176
    %180 = vset.pattern.permute.xlu0 0
    %181 = vperm.xlu0 %180, %v102
    %v182 = vpop.permute.xlu0 %181
    %v184 = vlaneseq
    %v185 = vshrl.u32 %v184, 7
    %v186 = vsub.s32 0, %v185
    %v187 = vrot.slane %v103, %v186
    %v188 = vmul.f32 %v107, %v187
    %v189 = vmul.f32 %v112, %v187
    %v190 = vmul.f32 %v117, %v187
    %v191 = vmul.f32 %v122, %v187
    %v192 = vmul.f32 %v127, %v187
    %v193 = vmul.f32 %v132, %v187
    %v194 = vmul.f32 %v137, %v187
    %v195 = vmul.f32 %v142, %v187
    %v196 = vmul.f32 %v147, %v187
    %v197 = vmul.f32 %v152, %v187
    %v198 = vmul.f32 %v157, %v187
    %v199 = vmul.f32 %v162, %v187
    %v200 = vmul.f32 %v167, %v187
    %v201 = vmul.f32 %v172, %v187
    %v202 = vmul.f32 %v177, %v187
    %v203 = vmul.f32 %v182, %v187
    %204 = vset.pattern.permute.xlu0 1
    %205 = vperm.xlu0 %204, %v87
    %v206 = vpop.permute.xlu0 %205
    %208 = vset.pattern.permute.xlu0 1
    %209 = vperm.xlu0 %208, %v88
    %v210 = vpop.permute.xlu0 %209
    %212 = vset.pattern.permute.xlu0 1
    %213 = vperm.xlu0 %212, %v89
    %v214 = vpop.permute.xlu0 %213
    %216 = vset.pattern.permute.xlu0 1
    %217 = vperm.xlu0 %216, %v90
    %v218 = vpop.permute.xlu0 %217
    %220 = vset.pattern.permute.xlu0 1
    %221 = vperm.xlu0 %220, %v91
    %v222 = vpop.permute.xlu0 %221
    %224 = vset.pattern.permute.xlu0 1
    %225 = vperm.xlu0 %224, %v92
    %v226 = vpop.permute.xlu0 %225
    %228 = vset.pattern.permute.xlu0 1
    %229 = vperm.xlu0 %228, %v93
    %v230 = vpop.permute.xlu0 %229
    %232 = vset.pattern.permute.xlu0 1
    %233 = vperm.xlu0 %232, %v94
    %v234 = vpop.permute.xlu0 %233
    %236 = vset.pattern.permute.xlu0 1
    %237 = vperm.xlu0 %236, %v95
    %v238 = vpop.permute.xlu0 %237
    %240 = vset.pattern.permute.xlu0 1
    %241 = vperm.xlu0 %240, %v96
    %v242 = vpop.permute.xlu0 %241
    %244 = vset.pattern.permute.xlu0 1
    %245 = vperm.xlu0 %244, %v97
    %v246 = vpop.permute.xlu0 %245
    %248 = vset.pattern.permute.xlu0 1
    %249 = vperm.xlu0 %248, %v98
    %v250 = vpop.permute.xlu0 %249
    %252 = vset.pattern.permute.xlu0 1
    %253 = vperm.xlu0 %252, %v99
    %v254 = vpop.permute.xlu0 %253
    %256 = vset.pattern.permute.xlu0 1
    %257 = vperm.xlu0 %256, %v100
    %v258 = vpop.permute.xlu0 %257
    %260 = vset.pattern.permute.xlu0 1
    %261 = vperm.xlu0 %260, %v101
    %v262 = vpop.permute.xlu0 %261
    %264 = vset.pattern.permute.xlu0 1
    %265 = vperm.xlu0 %264, %v102
    %v266 = vpop.permute.xlu0 %265
    %v268 = vlaneseq
    %v269 = vshrl.u32 %v268, 7
    %v270 = vsub.s32 1, %v269
    %v271 = vrot.slane %v103, %v270
    %v272 = vmul.f32 %v206, %v271
    %v273 = vmul.f32 %v210, %v271
    %v274 = vmul.f32 %v214, %v271
    %v275 = vmul.f32 %v218, %v271
    %v276 = vmul.f32 %v222, %v271
    %v277 = vmul.f32 %v226, %v271
    %v278 = vmul.f32 %v230, %v271
    %v279 = vmul.f32 %v234, %v271
    %v280 = vmul.f32 %v238, %v271
    %v281 = vmul.f32 %v242, %v271
    %v282 = vmul.f32 %v246, %v271
    %v283 = vmul.f32 %v250, %v271
    %v284 = vmul.f32 %v254, %v271
    %v285 = vmul.f32 %v258, %v271
    %v286 = vmul.f32 %v262, %v271
    %v287 = vmul.f32 %v266, %v271
    %v288 = vadd.f32 %v188, %v272
    %v289 = vadd.f32 %v189, %v273
    %v290 = vadd.f32 %v190, %v274
    %v291 = vadd.f32 %v191, %v275
    %v292 = vadd.f32 %v192, %v276
    %v293 = vadd.f32 %v193, %v277
    %v294 = vadd.f32 %v194, %v278
    %v295 = vadd.f32 %v195, %v279
    %v296 = vadd.f32 %v196, %v280
    %v297 = vadd.f32 %v197, %v281
    %v298 = vadd.f32 %v198, %v282
    %v299 = vadd.f32 %v199, %v283
    %v300 = vadd.f32 %v200, %v284
    %v301 = vadd.f32 %v201, %v285
    %v302 = vadd.f32 %v202, %v286
    %v303 = vadd.f32 %v203, %v287
    %304 = vset.pattern.permute.xlu0 2
    %305 = vperm.xlu0 %304, %v87
    %v306 = vpop.permute.xlu0 %305
    %308 = vset.pattern.permute.xlu0 2
    %309 = vperm.xlu0 %308, %v88
    %v310 = vpop.permute.xlu0 %309
    %312 = vset.pattern.permute.xlu0 2
    %313 = vperm.xlu0 %312, %v89
    %v314 = vpop.permute.xlu0 %313
    %316 = vset.pattern.permute.xlu0 2
    %317 = vperm.xlu0 %316, %v90
    %v318 = vpop.permute.xlu0 %317
    %320 = vset.pattern.permute.xlu0 2
    %321 = vperm.xlu0 %320, %v91
    %v322 = vpop.permute.xlu0 %321
    %324 = vset.pattern.permute.xlu0 2
    %325 = vperm.xlu0 %324, %v92
    %v326 = vpop.permute.xlu0 %325
    %328 = vset.pattern.permute.xlu0 2
    %329 = vperm.xlu0 %328, %v93
    %v330 = vpop.permute.xlu0 %329
    %332 = vset.pattern.permute.xlu0 2
    %333 = vperm.xlu0 %332, %v94
    %v334 = vpop.permute.xlu0 %333
    %336 = vset.pattern.permute.xlu0 2
    %337 = vperm.xlu0 %336, %v95
    %v338 = vpop.permute.xlu0 %337
    %340 = vset.pattern.permute.xlu0 2
    %341 = vperm.xlu0 %340, %v96
    %v342 = vpop.permute.xlu0 %341
    %344 = vset.pattern.permute.xlu0 2
    %345 = vperm.xlu0 %344, %v97
    %v346 = vpop.permute.xlu0 %345
    %348 = vset.pattern.permute.xlu0 2
    %349 = vperm.xlu0 %348, %v98
    %v350 = vpop.permute.xlu0 %349
    %352 = vset.pattern.permute.xlu0 2
    %353 = vperm.xlu0 %352, %v99
    %v354 = vpop.permute.xlu0 %353
    %356 = vset.pattern.permute.xlu0 2
    %357 = vperm.xlu0 %356, %v100
    %v358 = vpop.permute.xlu0 %357
    %360 = vset.pattern.permute.xlu0 2
    %361 = vperm.xlu0 %360, %v101
    %v362 = vpop.permute.xlu0 %361
    %364 = vset.pattern.permute.xlu0 2
    %365 = vperm.xlu0 %364, %v102
    %v366 = vpop.permute.xlu0 %365
    %v368 = vlaneseq
    %v369 = vshrl.u32 %v368, 7
    %v370 = vsub.s32 2, %v369
    %v371 = vrot.slane %v103, %v370
    %v372 = vmul.f32 %v306, %v371
    %v373 = vmul.f32 %v310, %v371
    %v374 = vmul.f32 %v314, %v371
    %v375 = vmul.f32 %v318, %v371
    %v376 = vmul.f32 %v322, %v371
    %v377 = vmul.f32 %v326, %v371
    %v378 = vmul.f32 %v330, %v371
    %v379 = vmul.f32 %v334, %v371
    %v380 = vmul.f32 %v338, %v371
    %v381 = vmul.f32 %v342, %v371
    %v382 = vmul.f32 %v346, %v371
    %v383 = vmul.f32 %v350, %v371
    %v384 = vmul.f32 %v354, %v371
    %v385 = vmul.f32 %v358, %v371
    %v386 = vmul.f32 %v362, %v371
    %v387 = vmul.f32 %v366, %v371
    %v388 = vadd.f32 %v288, %v372
    %v389 = vadd.f32 %v289, %v373
    %v390 = vadd.f32 %v290, %v374
    %v391 = vadd.f32 %v291, %v375
    %v392 = vadd.f32 %v292, %v376
    %v393 = vadd.f32 %v293, %v377
    %v394 = vadd.f32 %v294, %v378
    %v395 = vadd.f32 %v295, %v379
    %v396 = vadd.f32 %v296, %v380
    %v397 = vadd.f32 %v297, %v381
    %v398 = vadd.f32 %v298, %v382
    %v399 = vadd.f32 %v299, %v383
    %v400 = vadd.f32 %v300, %v384
    %v401 = vadd.f32 %v301, %v385
    %v402 = vadd.f32 %v302, %v386
    %v403 = vadd.f32 %v303, %v387
    %v404 = vld [vmem:[%s2] sm:$0x1]
    %v406 = vlaneseq
    %v407 = vshrl.u32 %v406, 7
    %v408 = vsub.s32 0, %v407
    %v409 = vrot.slane %v404, %v408
    %v411 = vadd.f32 %v388, %v409
    %v412 = vadd.f32 %v389, %v409
    %v413 = vadd.f32 %v390, %v409
    %v414 = vadd.f32 %v391, %v409
    %v415 = vadd.f32 %v392, %v409
    %v416 = vadd.f32 %v393, %v409
    %v417 = vadd.f32 %v394, %v409
    %v418 = vadd.f32 %v395, %v409
    %v419 = vadd.f32 %v396, %v409
    %v420 = vadd.f32 %v397, %v409
    %v421 = vadd.f32 %v398, %v409
    %v422 = vadd.f32 %v399, %v409
    %v423 = vadd.f32 %v400, %v409
    %v424 = vadd.f32 %v401, %v409
    %v425 = vadd.f32 %v402, %v409
    %v426 = vadd.f32 %v403, %v409
    %v427 = vmax.f32 %v411, 0.0
    %v428 = vmax.f32 %v412, 0.0
    %v429 = vmax.f32 %v413, 0.0
    %v430 = vmax.f32 %v414, 0.0
    %v431 = vmax.f32 %v415, 0.0
    %v432 = vmax.f32 %v416, 0.0
    %v433 = vmax.f32 %v417, 0.0
    %v434 = vmax.f32 %v418, 0.0
    %v435 = vmax.f32 %v419, 0.0
    %v436 = vmax.f32 %v420, 0.0
    %v437 = vmax.f32 %v421, 0.0
    %v438 = vmax.f32 %v422, 0.0
    %v439 = vmax.f32 %v423, 0.0
    %v440 = vmax.f32 %v424, 0.0
    %v441 = vmax.f32 %v425, 0.0
    %v442 = vmax.f32 %v426, 0.0
    %v443 = vpack.c.bf16 %v428, %v427
    %v444 = vpack.c.bf16 %v430, %v429
    %v445 = vpack.c.bf16 %v432, %v431
    %v446 = vpack.c.bf16 %v434, %v433
    %v447 = vpack.c.bf16 %v436, %v435
    %v448 = vpack.c.bf16 %v438, %v437
    %v449 = vpack.c.bf16 %v440, %v439
    %v450 = vpack.c.bf16 %v442, %v441
    %v451 = vld [vmem:[%s3] sm:$0xf]
    %v452 = vld [vmem:[%s3 + $0x4] sm:$0xf]
    %v453 = vld [vmem:[%s3 + $0x8] sm:$0xf]
    %v454 = vld [vmem:[%s3 + $0xc] sm:$0xf]
    %v455 = vld [vmem:[%s3 + $0x10] sm:$0xf]
    %v456 = vld [vmem:[%s3 + $0x14] sm:$0xf]
    %v457 = vld [vmem:[%s3 + $0x18] sm:$0xf]
    %v458 = vld [vmem:[%s3 + $0x1c] sm:$0xf]
    %v459 = vld [vmem:[%s4] sm:$0x1]
    %v461 = vlaneseq
    %v462 = vshrl.u32 %v461, 7
    %v463 = vsub.s32 0, %v462
    %v464 = vrot.slane %v459, %v463
    %v474 = vunpack.c.l.b16 %v451
    %v475 = vunpack.c.l.b16 %v452
    %v476 = vunpack.c.l.b16 %v453
    %v477 = vunpack.c.l.b16 %v454
    %v478 = vunpack.c.l.b16 %v455
    %v479 = vunpack.c.l.b16 %v456
    %v480 = vunpack.c.l.b16 %v457
    %v481 = vunpack.c.l.b16 %v458
    %v482 = vpack.c.b16 %v475, %v474
    %v483 = vpack.c.b16 %v477, %v476
    %v484 = vpack.c.b16 %v479, %v478
    %v485 = vpack.c.b16 %v481, %v480
    %vm490 = vcmask 523264
    %v492 = vsel %vm490, %v443, 0
    %v495 = vsel %vm490, %v444, 0
    %v498 = vsel %vm490, %v445, 0
    %v501 = vsel %vm490, %v446, 0
    %v504 = vsel %vm490, %v447, 0
    %v507 = vsel %vm490, %v448, 0
    %v510 = vsel %vm490, %v449, 0
    %v513 = vsel %vm490, %v450, 0
    %515 = vmatprep.subr.bf16.mxu0 0
    %516 = vmatpush1.bf16.msra.mxu0 %v482
    %517 = vmatprep.subr.bf16.mxu0 0
    %518 = vmatpush1.bf16.msra.mxu0 %v483
    %519 = vmatprep.subr.bf16.mxu0 0
    %520 = vmatpush1.bf16.msra.mxu0 %v484
    %521 = vmatprep.subr.bf16.mxu0 0
    %522 = vmatpush1.bf16.msra.mxu0 %v485
    %523 = vmatprep.subr.bf16.mxu0 0
    %524 = vmatpush1.bf16.msra.mxu0 0
    %525 = vmatprep.subr.bf16.mxu0 0
    %526 = vmatpush1.bf16.msra.mxu0 0
    %527 = vmatprep.subr.bf16.mxu0 0
    %528 = vmatpush1.bf16.msra.mxu0 0
    %529 = vmatprep.subr.bf16.mxu0 0
    %530 = vmatpush1.bf16.msra.mxu0 0
    %531 = vmatprep.subr.bf16.mxu0 0
    %532 = vmatpush1.bf16.msra.mxu0 0
    %533 = vmatprep.subr.bf16.mxu0 0
    %534 = vmatpush1.bf16.msra.mxu0 0
    %535 = vmatprep.subr.bf16.mxu0 0
    %536 = vmatpush1.bf16.msra.mxu0 0
    %537 = vmatprep.subr.bf16.mxu0 0
    %538 = vmatpush1.bf16.msra.mxu0 0
    %539 = vmatprep.subr.bf16.mxu0 0
    %540 = vmatpush1.bf16.msra.mxu0 0
    %541 = vmatprep.subr.bf16.mxu0 0
    %542 = vmatpush1.bf16.msra.mxu0 0
    %543 = vmatprep.subr.bf16.mxu0 0
    %544 = vmatpush1.bf16.msra.mxu0 0
    %545 = vmatprep.subr.bf16.mxu0 0
    %546 = vmatpush1.bf16.msra.mxu0 0
    %547 = vmatprep.mubr.bf16.mxu0 0
    %548 = vmatmul.mubr.bf16.gmra.mrb[0].mxu0 %v492
    %v549 = vpop.f32.mrb[0].mxu0
    %v550 = vadd.f32 %v464, %v549
    %v551 = vpop.f32.mrb[0].mxu0
    %v552 = vpop.f32.mrb[0].mxu0
    %v553 = vadd.f32 %v464, %v552
    %v554 = vpop.f32.mrb[0].mxu0
    %555 = vmatprep.mubr.bf16.mxu0 0
    %556 = vmatmul.mubr.bf16.gmra.mrb[0].mxu0 %v495
    %v557 = vpop.f32.mrb[0].mxu0
    %v558 = vadd.f32 %v464, %v557
    %v559 = vpop.f32.mrb[0].mxu0
    %v560 = vpop.f32.mrb[0].mxu0
    %v561 = vadd.f32 %v464, %v560
    %v562 = vpop.f32.mrb[0].mxu0
    %563 = vmatprep.mubr.bf16.mxu0 0
    %564 = vmatmul.mubr.bf16.gmra.mrb[0].mxu0 %v498
    %v565 = vpop.f32.mrb[0].mxu0
    %v566 = vadd.f32 %v464, %v565
    %v567 = vpop.f32.mrb[0].mxu0
    %v568 = vpop.f32.mrb[0].mxu0
    %v569 = vadd.f32 %v464, %v568
    %v570 = vpop.f32.mrb[0].mxu0
    %571 = vmatprep.mubr.bf16.mxu0 0
    %572 = vmatmul.mubr.bf16.gmra.mrb[0].mxu0 %v501
    %v573 = vpop.f32.mrb[0].mxu0
    %v574 = vadd.f32 %v464, %v573
    %v575 = vpop.f32.mrb[0].mxu0
    %v576 = vpop.f32.mrb[0].mxu0
    %v577 = vadd.f32 %v464, %v576
    %v578 = vpop.f32.mrb[0].mxu0
    %579 = vmatprep.mubr.bf16.mxu0 0
    %580 = vmatmul.mubr.bf16.gmra.mrb[0].mxu0 %v504
    %v581 = vpop.f32.mrb[0].mxu0
    %v582 = vadd.f32 %v464, %v581
    %v583 = vpop.f32.mrb[0].mxu0
    %v584 = vpop.f32.mrb[0].mxu0
    %v585 = vadd.f32 %v464, %v584
    %v586 = vpop.f32.mrb[0].mxu0
    %587 = vmatprep.mubr.bf16.mxu0 0
    %588 = vmatmul.mubr.bf16.gmra.mrb[0].mxu0 %v507
    %v589 = vpop.f32.mrb[0].mxu0
    %v590 = vadd.f32 %v464, %v589
    %v591 = vpop.f32.mrb[0].mxu0
    %v592 = vpop.f32.mrb[0].mxu0
    %v593 = vadd.f32 %v464, %v592
    %v594 = vpop.f32.mrb[0].mxu0
    %595 = vmatprep.mubr.bf16.mxu0 0
    %596 = vmatmul.mubr.bf16.gmra.mrb[0].mxu0 %v510
    %v597 = vpop.f32.mrb[0].mxu0
    %v598 = vadd.f32 %v464, %v597
    %v599 = vpop.f32.mrb[0].mxu0
    %v600 = vpop.f32.mrb[0].mxu0
    %v601 = vadd.f32 %v464, %v600
    %v602 = vpop.f32.mrb[0].mxu0
    %603 = vmatprep.mubr.bf16.mxu0 0
    %604 = vmatmul.mubr.bf16.gmra.mrb[0].mxu0 %v513
    %v605 = vpop.f32.mrb[0].mxu0
    %v606 = vadd.f32 %v464, %v605
    %v607 = vpop.f32.mrb[0].mxu0
    %v608 = vpop.f32.mrb[0].mxu0
    %v609 = vadd.f32 %v464, %v608
    %v610 = vpop.f32.mrb[0].mxu0
    %611 = vdwg.mxu0
    %v612 = vmax.f32 %v550, 0.0
    %v613 = vmax.f32 %v553, 0.0
    %v614 = vmax.f32 %v558, 0.0
    %v615 = vmax.f32 %v561, 0.0
    %v616 = vmax.f32 %v566, 0.0
    %v617 = vmax.f32 %v569, 0.0
    %v618 = vmax.f32 %v574, 0.0
    %v619 = vmax.f32 %v577, 0.0
    %v620 = vmax.f32 %v582, 0.0
    %v621 = vmax.f32 %v585, 0.0
    %v622 = vmax.f32 %v590, 0.0
    %v623 = vmax.f32 %v593, 0.0
    %v624 = vmax.f32 %v598, 0.0
    %v625 = vmax.f32 %v601, 0.0
    %v626 = vmax.f32 %v606, 0.0
    %v627 = vmax.f32 %v609, 0.0
    %v628 = vpack.c.bf16 %v613, %v612
    %v629 = vpack.c.bf16 %v615, %v614
    %v630 = vpack.c.bf16 %v617, %v616
    %v631 = vpack.c.bf16 %v619, %v618
    %v632 = vpack.c.bf16 %v621, %v620
    %v633 = vpack.c.bf16 %v623, %v622
    %v634 = vpack.c.bf16 %v625, %v624
    %v635 = vpack.c.bf16 %v627, %v626
    %v636 = vld [vmem:[#allocation2] sm:$0xff]
    %v637 = vld [vmem:[#allocation2 + $0x8] sm:$0xff]
    %v638 = vld [vmem:[#allocation2 + $0x10] sm:$0xff]
    %v639 = vld [vmem:[#allocation2 + $0x18] sm:$0xff]
    %v640 = vld [vmem:[#allocation2 + $0x20] sm:$0xff]
    %v641 = vld [vmem:[#allocation2 + $0x28] sm:$0xff]
    %v642 = vld [vmem:[#allocation2 + $0x30] sm:$0xff]
    %v643 = vld [vmem:[#allocation2 + $0x38] sm:$0xff]
    %v644 = vld [vmem:[#allocation2 + $0x40] sm:$0xff]
    %v645 = vld [vmem:[#allocation2 + $0x48] sm:$0xff]
    %v646 = vld [vmem:[#allocation2 + $0x50] sm:$0xff]
    %v647 = vld [vmem:[#allocation2 + $0x58] sm:$0xff]
    %v648 = vld [vmem:[#allocation2 + $0x60] sm:$0xff]
    %v649 = vld [vmem:[#allocation2 + $0x68] sm:$0xff]
    %v650 = vld [vmem:[#allocation2 + $0x70] sm:$0xff]
    %v651 = vld [vmem:[#allocation2 + $0x78] sm:$0xff]
    %v652 = vld [vmem:[#allocation2 + $0x80] sm:$0xff]
    %v653 = vld [vmem:[#allocation2 + $0x88] sm:$0xff]
    %v654 = vld [vmem:[#allocation2 + $0x90] sm:$0xff]
    %v655 = vld [vmem:[#allocation2 + $0x98] sm:$0xff]
    %v656 = vld [vmem:[#allocation2 + $0xa0] sm:$0xff]
    %v657 = vld [vmem:[#allocation2 + $0xa8] sm:$0xff]
    %v658 = vld [vmem:[#allocation2 + $0xb0] sm:$0xff]
    %v659 = vld [vmem:[#allocation2 + $0xb8] sm:$0xff]
    %v660 = vld [vmem:[#allocation2 + $0xc0] sm:$0xff]
    %v661 = vld [vmem:[#allocation2 + $0xc8] sm:$0xff]
    %v662 = vld [vmem:[#allocation2 + $0xd0] sm:$0xff]
    %v663 = vld [vmem:[#allocation2 + $0xd8] sm:$0xff]
    %v664 = vld [vmem:[#allocation2 + $0xe0] sm:$0xff]
    %v665 = vld [vmem:[#allocation2 + $0xe8] sm:$0xff]
    %v666 = vld [vmem:[#allocation2 + $0xf0] sm:$0xff]
    %v667 = vld [vmem:[#allocation2 + $0xf8] sm:$0xff]
    %v668 = vld [vmem:[#allocation2 + $0x100] sm:$0xff]
    %v669 = vld [vmem:[#allocation2 + $0x108] sm:$0xff]
    %v670 = vld [vmem:[#allocation2 + $0x110] sm:$0xff]
    %v671 = vld [vmem:[#allocation2 + $0x118] sm:$0xff]
    %v672 = vld [vmem:[#allocation2 + $0x120] sm:$0xff]
    %v673 = vld [vmem:[#allocation2 + $0x128] sm:$0xff]
    %v674 = vld [vmem:[#allocation2 + $0x130] sm:$0xff]
    %v675 = vld [vmem:[#allocation2 + $0x138] sm:$0xff]
    %v676 = vld [vmem:[#allocation2 + $0x140] sm:$0xff]
    %v677 = vld [vmem:[#allocation2 + $0x148] sm:$0xff]
    %v678 = vld [vmem:[#allocation2 + $0x150] sm:$0xff]
    %v679 = vld [vmem:[#allocation2 + $0x158] sm:$0xff]
    %v680 = vld [vmem:[#allocation2 + $0x160] sm:$0xff]
    %v681 = vld [vmem:[#allocation2 + $0x168] sm:$0xff]
    %v682 = vld [vmem:[#allocation2 + $0x170] sm:$0xff]
    %v683 = vld [vmem:[#allocation2 + $0x178] sm:$0xff]
    %v684 = vld [vmem:[#allocation2 + $0x180] sm:$0xff]
    %v685 = vld [vmem:[#allocation2 + $0x188] sm:$0xff]
    %v686 = vld [vmem:[#allocation2 + $0x190] sm:$0xff]
    %v687 = vld [vmem:[#allocation2 + $0x198] sm:$0xff]
    %v688 = vld [vmem:[#allocation2 + $0x1a0] sm:$0xff]
    %v689 = vld [vmem:[#allocation2 + $0x1a8] sm:$0xff]
    %v690 = vld [vmem:[#allocation2 + $0x1b0] sm:$0xff]
    %v691 = vld [vmem:[#allocation2 + $0x1b8] sm:$0xff]
    %v692 = vld [vmem:[#allocation2 + $0x1c0] sm:$0xff]
    %v693 = vld [vmem:[#allocation2 + $0x1c8] sm:$0xff]
    %v694 = vld [vmem:[#allocation2 + $0x1d0] sm:$0xff]
    %v695 = vld [vmem:[#allocation2 + $0x1d8] sm:$0xff]
    %v696 = vld [vmem:[#allocation2 + $0x1e0] sm:$0xff]
    %v697 = vld [vmem:[#allocation2 + $0x1e8] sm:$0xff]
    %v698 = vld [vmem:[#allocation2 + $0x1f0] sm:$0xff]
    %v699 = vld [vmem:[#allocation2 + $0x1f8] sm:$0xff]
    %v700 = vld [vmem:[%s6] sm:$0xff]
    %v702 = vlaneseq
    %v703 = vshrl.u32 %v702, 7
    %v704 = vsub.s32 0, %v703
    %v705 = vrot.slane %v700, %v704
    %v706 = vlaneseq
    %v707 = vshrl.u32 %v706, 7
    %v708 = vsub.s32 1, %v707
    %v709 = vrot.slane %v700, %v708
    %v710 = vlaneseq
    %v711 = vshrl.u32 %v710, 7
    %v712 = vsub.s32 2, %v711
    %v713 = vrot.slane %v700, %v712
    %v714 = vlaneseq
    %v715 = vshrl.u32 %v714, 7
    %v716 = vsub.s32 3, %v715
    %v717 = vrot.slane %v700, %v716
    %v718 = vlaneseq
    %v719 = vshrl.u32 %v718, 7
    %v720 = vsub.s32 4, %v719
    %v721 = vrot.slane %v700, %v720
    %v722 = vlaneseq
    %v723 = vshrl.u32 %v722, 7
    %v724 = vsub.s32 5, %v723
    %v725 = vrot.slane %v700, %v724
    %v726 = vlaneseq
    %v727 = vshrl.u32 %v726, 7
    %v728 = vsub.s32 6, %v727
    %v729 = vrot.slane %v700, %v728
    %v730 = vlaneseq
    %v731 = vshrl.u32 %v730, 7
    %v732 = vsub.s32 7, %v731
    %v733 = vrot.slane %v700, %v732
    %v806 = vunpack.c.l.b16 %v636
    %v807 = vunpack.c.h.b16 %v636
    %v808 = vunpack.c.l.b16 %v637
    %v809 = vunpack.c.h.b16 %v637
    %v810 = vunpack.c.l.b16 %v638
    %v811 = vunpack.c.h.b16 %v638
    %v812 = vunpack.c.l.b16 %v639
    %v813 = vunpack.c.h.b16 %v639
    %v814 = vunpack.c.l.b16 %v640
    %v815 = vunpack.c.h.b16 %v640
    %v816 = vunpack.c.l.b16 %v641
    %v817 = vunpack.c.h.b16 %v641
    %v818 = vunpack.c.l.b16 %v642
    %v819 = vunpack.c.h.b16 %v642
    %v820 = vunpack.c.l.b16 %v643
    %v821 = vunpack.c.h.b16 %v643
    %v822 = vunpack.c.l.b16 %v644
    %v823 = vunpack.c.h.b16 %v644
    %v824 = vunpack.c.l.b16 %v645
    %v825 = vunpack.c.h.b16 %v645
    %v826 = vunpack.c.l.b16 %v646
    %v827 = vunpack.c.h.b16 %v646
    %v828 = vunpack.c.l.b16 %v647
    %v829 = vunpack.c.h.b16 %v647
    %v830 = vunpack.c.l.b16 %v648
    %v831 = vunpack.c.h.b16 %v648
    %v832 = vunpack.c.l.b16 %v649
    %v833 = vunpack.c.h.b16 %v649
    %v834 = vunpack.c.l.b16 %v650
    %v835 = vunpack.c.h.b16 %v650
    %v836 = vunpack.c.l.b16 %v651
    %v837 = vunpack.c.h.b16 %v651
    %v838 = vunpack.c.l.b16 %v652
    %v839 = vunpack.c.h.b16 %v652
    %v840 = vunpack.c.l.b16 %v653
    %v841 = vunpack.c.h.b16 %v653
    %v842 = vunpack.c.l.b16 %v654
    %v843 = vunpack.c.h.b16 %v654
    %v844 = vunpack.c.l.b16 %v655
    %v845 = vunpack.c.h.b16 %v655
    %v846 = vunpack.c.l.b16 %v656
    %v847 = vunpack.c.h.b16 %v656
    %v848 = vunpack.c.l.b16 %v657
    %v849 = vunpack.c.h.b16 %v657
    %v850 = vunpack.c.l.b16 %v658
    %v851 = vunpack.c.h.b16 %v658
    %v852 = vunpack.c.l.b16 %v659
    %v853 = vunpack.c.h.b16 %v659
    %v854 = vunpack.c.l.b16 %v660
    %v855 = vunpack.c.h.b16 %v660
    %v856 = vunpack.c.l.b16 %v661
    %v857 = vunpack.c.h.b16 %v661
    %v858 = vunpack.c.l.b16 %v662
    %v859 = vunpack.c.h.b16 %v662
    %v860 = vunpack.c.l.b16 %v663
    %v861 = vunpack.c.h.b16 %v663
    %v862 = vunpack.c.l.b16 %v664
    %v863 = vunpack.c.h.b16 %v664
    %v864 = vunpack.c.l.b16 %v665
    %v865 = vunpack.c.h.b16 %v665
    %v866 = vunpack.c.l.b16 %v666
    %v867 = vunpack.c.h.b16 %v666
    %v868 = vunpack.c.l.b16 %v667
    %v869 = vunpack.c.h.b16 %v667
    %v870 = vunpack.c.l.b16 %v668
    %v871 = vunpack.c.h.b16 %v668
    %v872 = vunpack.c.l.b16 %v669
    %v873 = vunpack.c.h.b16 %v669
    %v874 = vunpack.c.l.b16 %v670
    %v875 = vunpack.c.h.b16 %v670
    %v876 = vunpack.c.l.b16 %v671
    %v877 = vunpack.c.h.b16 %v671
    %v878 = vunpack.c.l.b16 %v672
    %v879 = vunpack.c.h.b16 %v672
    %v880 = vunpack.c.l.b16 %v673
    %v881 = vunpack.c.h.b16 %v673
    %v882 = vunpack.c.l.b16 %v674
    %v883 = vunpack.c.h.b16 %v674
    %v884 = vunpack.c.l.b16 %v675
    %v885 = vunpack.c.h.b16 %v675
    %v886 = vunpack.c.l.b16 %v676
    %v887 = vunpack.c.h.b16 %v676
    %v888 = vunpack.c.l.b16 %v677
    %v889 = vunpack.c.h.b16 %v677
    %v890 = vunpack.c.l.b16 %v678
    %v891 = vunpack.c.h.b16 %v678
    %v892 = vunpack.c.l.b16 %v679
    %v893 = vunpack.c.h.b16 %v679
    %v894 = vunpack.c.l.b16 %v680
    %v895 = vunpack.c.h.b16 %v680
    %v896 = vunpack.c.l.b16 %v681
    %v897 = vunpack.c.h.b16 %v681
    %v898 = vunpack.c.l.b16 %v682
    %v899 = vunpack.c.h.b16 %v682
    %v900 = vunpack.c.l.b16 %v683
    %v901 = vunpack.c.h.b16 %v683
    %v902 = vunpack.c.l.b16 %v684
    %v903 = vunpack.c.h.b16 %v684
    %v904 = vunpack.c.l.b16 %v685
    %v905 = vunpack.c.h.b16 %v685
    %v906 = vunpack.c.l.b16 %v686
    %v907 = vunpack.c.h.b16 %v686
    %v908 = vunpack.c.l.b16 %v687
    %v909 = vunpack.c.h.b16 %v687
    %v910 = vunpack.c.l.b16 %v688
    %v911 = vunpack.c.h.b16 %v688
    %v912 = vunpack.c.l.b16 %v689
    %v913 = vunpack.c.h.b16 %v689
    %v914 = vunpack.c.l.b16 %v690
    %v915 = vunpack.c.h.b16 %v690
    %v916 = vunpack.c.l.b16 %v691
    %v917 = vunpack.c.h.b16 %v691
    %v918 = vunpack.c.l.b16 %v692
    %v919 = vunpack.c.h.b16 %v692
    %v920 = vunpack.c.l.b16 %v693
    %v921 = vunpack.c.h.b16 %v693
    %v922 = vunpack.c.l.b16 %v694
    %v923 = vunpack.c.h.b16 %v694
    %v924 = vunpack.c.l.b16 %v695
    %v925 = vunpack.c.h.b16 %v695
    %v926 = vunpack.c.l.b16 %v696
    %v927 = vunpack.c.h.b16 %v696
    %v928 = vunpack.c.l.b16 %v697
    %v929 = vunpack.c.h.b16 %v697
    %v930 = vunpack.c.l.b16 %v698
    %v931 = vunpack.c.h.b16 %v698
    %v932 = vunpack.c.l.b16 %v699
    %v933 = vunpack.c.h.b16 %v699
    %v934 = vpack.c.b16 %v814, %v806
    %v935 = vpack.c.b16 %v815, %v807
    %v936 = vpack.c.b16 %v816, %v808
    %v937 = vpack.c.b16 %v817, %v809
    %v938 = vpack.c.b16 %v818, %v810
    %v939 = vpack.c.b16 %v819, %v811
    %v940 = vpack.c.b16 %v820, %v812
    %v941 = vpack.c.b16 %v821, %v813
    %v942 = vpack.c.b16 %v830, %v822
    %v943 = vpack.c.b16 %v831, %v823
    %v944 = vpack.c.b16 %v832, %v824
    %v945 = vpack.c.b16 %v833, %v825
    %v946 = vpack.c.b16 %v834, %v826
    %v947 = vpack.c.b16 %v835, %v827
    %v948 = vpack.c.b16 %v836, %v828
    %v949 = vpack.c.b16 %v837, %v829
    %v950 = vpack.c.b16 %v846, %v838
    %v951 = vpack.c.b16 %v847, %v839
    %v952 = vpack.c.b16 %v848, %v840
    %v953 = vpack.c.b16 %v849, %v841
    %v954 = vpack.c.b16 %v850, %v842
    %v955 = vpack.c.b16 %v851, %v843
    %v956 = vpack.c.b16 %v852, %v844
    %v957 = vpack.c.b16 %v853, %v845
    %v958 = vpack.c.b16 %v862, %v854
    %v959 = vpack.c.b16 %v863, %v855
    %v960 = vpack.c.b16 %v864, %v856
    %v961 = vpack.c.b16 %v865, %v857
    %v962 = vpack.c.b16 %v866, %v858
    %v963 = vpack.c.b16 %v867, %v859
    %v964 = vpack.c.b16 %v868, %v860
    %v965 = vpack.c.b16 %v869, %v861
    %v966 = vpack.c.b16 %v878, %v870
    %v967 = vpack.c.b16 %v879, %v871
    %v968 = vpack.c.b16 %v880, %v872
    %v969 = vpack.c.b16 %v881, %v873
    %v970 = vpack.c.b16 %v882, %v874
    %v971 = vpack.c.b16 %v883, %v875
    %v972 = vpack.c.b16 %v884, %v876
    %v973 = vpack.c.b16 %v885, %v877
    %v974 = vpack.c.b16 %v894, %v886
    %v975 = vpack.c.b16 %v895, %v887
    %v976 = vpack.c.b16 %v896, %v888
    %v977 = vpack.c.b16 %v897, %v889
    %v978 = vpack.c.b16 %v898, %v890
    %v979 = vpack.c.b16 %v899, %v891
    %v980 = vpack.c.b16 %v900, %v892
    %v981 = vpack.c.b16 %v901, %v893
    %v982 = vpack.c.b16 %v910, %v902
    %v983 = vpack.c.b16 %v911, %v903
    %v984 = vpack.c.b16 %v912, %v904
    %v985 = vpack.c.b16 %v913, %v905
    %v986 = vpack.c.b16 %v914, %v906
    %v987 = vpack.c.b16 %v915, %v907
    %v988 = vpack.c.b16 %v916, %v908
    %v989 = vpack.c.b16 %v917, %v909
    %v990 = vpack.c.b16 %v926, %v918
    %v991 = vpack.c.b16 %v927, %v919
    %v992 = vpack.c.b16 %v928, %v920
    %v993 = vpack.c.b16 %v929, %v921
    %v994 = vpack.c.b16 %v930, %v922
    %v995 = vpack.c.b16 %v931, %v923
    %v996 = vpack.c.b16 %v932, %v924
    %v997 = vpack.c.b16 %v933, %v925
    %1062 = vmatprep.subr.bf16.mxu0 %v935
    %1063 = vmatpush1.bf16.msra.mxu0 %v934
    %1064 = vmatprep.subr.bf16.mxu0 %v943
    %1065 = vmatpush1.bf16.msra.mxu0 %v942
    %1066 = vmatprep.subr.bf16.mxu0 %v951
    %1067 = vmatpush1.bf16.msra.mxu0 %v950
    %1068 = vmatprep.subr.bf16.mxu0 %v959
    %1069 = vmatpush1.bf16.msra.mxu0 %v958
    %1070 = vmatprep.subr.bf16.mxu0 %v967
    %1071 = vmatpush1.bf16.msra.mxu0 %v966
    %1072 = vmatprep.subr.bf16.mxu0 %v975
    %1073 = vmatpush1.bf16.msra.mxu0 %v974
    %1074 = vmatprep.subr.bf16.mxu0 %v983
    %1075 = vmatpush1.bf16.msra.mxu0 %v982
    %1076 = vmatprep.subr.bf16.mxu0 %v991
    %1077 = vmatpush1.bf16.msra.mxu0 %v990
    %1078 = vmatprep.subr.bf16.mxu0 0
    %1079 = vmatpush1.bf16.msra.mxu0 0
    %1080 = vmatprep.subr.bf16.mxu0 0
    %1081 = vmatpush1.bf16.msra.mxu0 0
    %1082 = vmatprep.subr.bf16.mxu0 0
    %1083 = vmatpush1.bf16.msra.mxu0 0
    %1084 = vmatprep.subr.bf16.mxu0 0
    %1085 = vmatpush1.bf16.msra.mxu0 0
    %1086 = vmatprep.subr.bf16.mxu0 0
    %1087 = vmatpush1.bf16.msra.mxu0 0
    %1088 = vmatprep.subr.bf16.mxu0 0
    %1089 = vmatpush1.bf16.msra.mxu0 0
    %1090 = vmatprep.subr.bf16.mxu0 0
    %1091 = vmatpush1.bf16.msra.mxu0 0
    %1092 = vmatprep.subr.bf16.mxu0 0
    %1093 = vmatpush1.bf16.msra.mxu0 0
    %1094 = vmatprep.mubr.bf16.mxu0 0
    %1095 = vmatmul.mubr.bf16.gmra.mrb[0].mxu0 %v628
    %v1096 = vpop.f32.mrb[0].mxu0
    %v1097 = vadd.f32 %v705, %v1096
    %v1098 = vpop.f32.mrb[0].mxu0
    %v1099 = vadd.f32 %v709, %v1098
    %v1100 = vpop.f32.mrb[0].mxu0
    %v1101 = vadd.f32 %v705, %v1100
    %v1102 = vpop.f32.mrb[0].mxu0
    %v1103 = vadd.f32 %v709, %v1102
    %1104 = vmatprep.mubr.bf16.mxu0 0
    %1105 = vmatmul.mubr.bf16.gmra.mrb[0].mxu0 %v629
    %v1106 = vpop.f32.mrb[0].mxu0
    %v1107 = vadd.f32 %v705, %v1106
    %v1108 = vpop.f32.mrb[0].mxu0
    %v1109 = vadd.f32 %v709, %v1108
    %v1110 = vpop.f32.mrb[0].mxu0
    %v1111 = vadd.f32 %v705, %v1110
    %v1112 = vpop.f32.mrb[0].mxu0
    %v1113 = vadd.f32 %v709, %v1112
    %1114 = vmatprep.mubr.bf16.mxu0 0
    %1115 = vmatmul.mubr.bf16.gmra.mrb[0].mxu0 %v630
    %v1116 = vpop.f32.mrb[0].mxu0
    %v1117 = vadd.f32 %v705, %v1116
    %v1118 = vpop.f32.mrb[0].mxu0
    %v1119 = vadd.f32 %v709, %v1118
    %v1120 = vpop.f32.mrb[0].mxu0
    %v1121 = vadd.f32 %v705, %v1120
    %v1122 = vpop.f32.mrb[0].mxu0
    %v1123 = vadd.f32 %v709, %v1122
    %1124 = vmatprep.mubr.bf16.mxu0 0
    %1125 = vmatmul.mubr.bf16.gmra.mrb[0].mxu0 %v631
    %v1126 = vpop.f32.mrb[0].mxu0
    %v1127 = vadd.f32 %v705, %v1126
    %v1128 = vpop.f32.mrb[0].mxu0
    %v1129 = vadd.f32 %v709, %v1128
    %v1130 = vpop.f32.mrb[0].mxu0
    %v1131 = vadd.f32 %v705, %v1130
    %v1132 = vpop.f32.mrb[0].mxu0
    %v1133 = vadd.f32 %v709, %v1132
    %1134 = vmatprep.mubr.bf16.mxu0 0
    %1135 = vmatmul.mubr.bf16.gmra.mrb[0].mxu0 %v632
    %v1136 = vpop.f32.mrb[0].mxu0
    %v1137 = vadd.f32 %v705, %v1136
    %v1138 = vpop.f32.mrb[0].mxu0
    %v1139 = vadd.f32 %v709, %v1138
    %v1140 = vpop.f32.mrb[0].mxu0
    %v1141 = vadd.f32 %v705, %v1140
    %v1142 = vpop.f32.mrb[0].mxu0
    %v1143 = vadd.f32 %v709, %v1142
    %1144 = vmatprep.mubr.bf16.mxu0 0
    %1145 = vmatmul.mubr.bf16.gmra.mrb[0].mxu0 %v633
    %v1146 = vpop.f32.mrb[0].mxu0
    %v1147 = vadd.f32 %v705, %v1146
    %v1148 = vpop.f32.mrb[0].mxu0
    %v1149 = vadd.f32 %v709, %v1148
    %v1150 = vpop.f32.mrb[0].mxu0
    %v1151 = vadd.f32 %v705, %v1150
    %v1152 = vpop.f32.mrb[0].mxu0
    %v1153 = vadd.f32 %v709, %v1152
    %1154 = vmatprep.mubr.bf16.mxu0 0
    %1155 = vmatmul.mubr.bf16.gmra.mrb[0].mxu0 %v634
    %v1156 = vpop.f32.mrb[0].mxu0
    %v1157 = vadd.f32 %v705, %v1156
    %v1158 = vpop.f32.mrb[0].mxu0
    %v1159 = vadd.f32 %v709, %v1158
    %v1160 = vpop.f32.mrb[0].mxu0
    %v1161 = vadd.f32 %v705, %v1160
    %v1162 = vpop.f32.mrb[0].mxu0
    %v1163 = vadd.f32 %v709, %v1162
    %1164 = vmatprep.mubr.bf16.mxu0 0
    %1165 = vmatmul.mubr.bf16.gmra.mrb[0].mxu0 %v635
    %v1166 = vpop.f32.mrb[0].mxu0
    %v1167 = vadd.f32 %v705, %v1166
    %v1168 = vpop.f32.mrb[0].mxu0
    %v1169 = vadd.f32 %v709, %v1168
    %v1170 = vpop.f32.mrb[0].mxu0
    %v1171 = vadd.f32 %v705, %v1170
    %v1172 = vpop.f32.mrb[0].mxu0
    %v1173 = vadd.f32 %v709, %v1172
    %1174 = vdwg.mxu0
    %1175 = vmatprep.subr.bf16.mxu0 %v937
    %1176 = vmatpush1.bf16.msra.mxu0 %v936
    %1177 = vmatprep.subr.bf16.mxu0 %v945
    %1178 = vmatpush1.bf16.msra.mxu0 %v944
    %1179 = vmatprep.subr.bf16.mxu0 %v953
    %1180 = vmatpush1.bf16.msra.mxu0 %v952
    %1181 = vmatprep.subr.bf16.mxu0 %v961
    %1182 = vmatpush1.bf16.msra.mxu0 %v960
    %1183 = vmatprep.subr.bf16.mxu0 %v969
    %1184 = vmatpush1.bf16.msra.mxu0 %v968
    %1185 = vmatprep.subr.bf16.mxu0 %v977
    %1186 = vmatpush1.bf16.msra.mxu0 %v976
    %1187 = vmatprep.subr.bf16.mxu0 %v985
    %1188 = vmatpush1.bf16.msra.mxu0 %v984
    %1189 = vmatprep.subr.bf16.mxu0 %v993
    %1190 = vmatpush1.bf16.msra.mxu0 %v992
    %1191 = vmatprep.subr.bf16.mxu0 0
    %1192 = vmatpush1.bf16.msra.mxu0 0
    %1193 = vmatprep.subr.bf16.mxu0 0
    %1194 = vmatpush1.bf16.msra.mxu0 0
    %1195 = vmatprep.subr.bf16.mxu0 0
    %1196 = vmatpush1.bf16.msra.mxu0 0
    %1197 = vmatprep.subr.bf16.mxu0 0
    %1198 = vmatpush1.bf16.msra.mxu0 0
    %1199 = vmatprep.subr.bf16.mxu0 0
    %1200 = vmatpush1.bf16.msra.mxu0 0
    %1201 = vmatprep.subr.bf16.mxu0 0
    %1202 = vmatpush1.bf16.msra.mxu0 0
    %1203 = vmatprep.subr.bf16.mxu0 0
    %1204 = vmatpush1.bf16.msra.mxu0 0
    %1205 = vmatprep.subr.bf16.mxu0 0
    %1206 = vmatpush1.bf16.msra.mxu0 0
    %1207 = vmatprep.mubr.bf16.mxu0 0
    %1208 = vmatmul.mubr.bf16.gmra.mrb[0].mxu0 %v628
    %v1209 = vpop.f32.mrb[0].mxu0
    %v1210 = vadd.f32 %v713, %v1209
    %v1211 = vpop.f32.mrb[0].mxu0
    %v1212 = vadd.f32 %v717, %v1211
    %v1213 = vpop.f32.mrb[0].mxu0
    %v1214 = vadd.f32 %v713, %v1213
    %v1215 = vpop.f32.mrb[0].mxu0
    %v1216 = vadd.f32 %v717, %v1215
    %1217 = vmatprep.mubr.bf16.mxu0 0
    %1218 = vmatmul.mubr.bf16.gmra.mrb[0].mxu0 %v629
    %v1219 = vpop.f32.mrb[0].mxu0
    %v1220 = vadd.f32 %v713, %v1219
    %v1221 = vpop.f32.mrb[0].mxu0
    %v1222 = vadd.f32 %v717, %v1221
    %v1223 = vpop.f32.mrb[0].mxu0
    %v1224 = vadd.f32 %v713, %v1223
    %v1225 = vpop.f32.mrb[0].mxu0
    %v1226 = vadd.f32 %v717, %v1225
    %1227 = vmatprep.mubr.bf16.mxu0 0
    %1228 = vmatmul.mubr.bf16.gmra.mrb[0].mxu0 %v630
    %v1229 = vpop.f32.mrb[0].mxu0
    %v1230 = vadd.f32 %v713, %v1229
    %v1231 = vpop.f32.mrb[0].mxu0
    %v1232 = vadd.f32 %v717, %v1231
    %v1233 = vpop.f32.mrb[0].mxu0
    %v1234 = vadd.f32 %v713, %v1233
    %v1235 = vpop.f32.mrb[0].mxu0
    %v1236 = vadd.f32 %v717, %v1235
    %1237 = vmatprep.mubr.bf16.mxu0 0
    %1238 = vmatmul.mubr.bf16.gmra.mrb[0].mxu0 %v631
    %v1239 = vpop.f32.mrb[0].mxu0
    %v1240 = vadd.f32 %v713, %v1239
    %v1241 = vpop.f32.mrb[0].mxu0
    %v1242 = vadd.f32 %v717, %v1241
    %v1243 = vpop.f32.mrb[0].mxu0
    %v1244 = vadd.f32 %v713, %v1243
    %v1245 = vpop.f32.mrb[0].mxu0
    %v1246 = vadd.f32 %v717, %v1245
    %1247 = vmatprep.mubr.bf16.mxu0 0
    %1248 = vmatmul.mubr.bf16.gmra.mrb[0].mxu0 %v632
    %v1249 = vpop.f32.mrb[0].mxu0
    %v1250 = vadd.f32 %v713, %v1249
    %v1251 = vpop.f32.mrb[0].mxu0
    %v1252 = vadd.f32 %v717, %v1251
    %v1253 = vpop.f32.mrb[0].mxu0
    %v1254 = vadd.f32 %v713, %v1253
    %v1255 = vpop.f32.mrb[0].mxu0
    %v1256 = vadd.f32 %v717, %v1255
    %1257 = vmatprep.mubr.bf16.mxu0 0
    %1258 = vmatmul.mubr.bf16.gmra.mrb[0].mxu0 %v633
    %v1259 = vpop.f32.mrb[0].mxu0
    %v1260 = vadd.f32 %v713, %v1259
    %v1261 = vpop.f32.mrb[0].mxu0
    %v1262 = vadd.f32 %v717, %v1261
    %v1263 = vpop.f32.mrb[0].mxu0
    %v1264 = vadd.f32 %v713, %v1263
    %v1265 = vpop.f32.mrb[0].mxu0
    %v1266 = vadd.f32 %v717, %v1265
    %1267 = vmatprep.mubr.bf16.mxu0 0
    %1268 = vmatmul.mubr.bf16.gmra.mrb[0].mxu0 %v634
    %v1269 = vpop.f32.mrb[0].mxu0
    %v1270 = vadd.f32 %v713, %v1269
    %v1271 = vpop.f32.mrb[0].mxu0
    %v1272 = vadd.f32 %v717, %v1271
    %v1273 = vpop.f32.mrb[0].mxu0
    %v1274 = vadd.f32 %v713, %v1273
    %v1275 = vpop.f32.mrb[0].mxu0
    %v1276 = vadd.f32 %v717, %v1275
    %1277 = vmatprep.mubr.bf16.mxu0 0
    %1278 = vmatmul.mubr.bf16.gmra.mrb[0].mxu0 %v635
    %v1279 = vpop.f32.mrb[0].mxu0
    %v1280 = vadd.f32 %v713, %v1279
    %v1281 = vpop.f32.mrb[0].mxu0
    %v1282 = vadd.f32 %v717, %v1281
    %v1283 = vpop.f32.mrb[0].mxu0
    %v1284 = vadd.f32 %v713, %v1283
    %v1285 = vpop.f32.mrb[0].mxu0
    %v1286 = vadd.f32 %v717, %v1285
    %1287 = vdwg.mxu0
    %1288 = vmatprep.subr.bf16.mxu0 %v939
    %1289 = vmatpush1.bf16.msra.mxu0 %v938
    %1290 = vmatprep.subr.bf16.mxu0 %v947
    %1291 = vmatpush1.bf16.msra.mxu0 %v946
    %1292 = vmatprep.subr.bf16.mxu0 %v955
    %1293 = vmatpush1.bf16.msra.mxu0 %v954
    %1294 = vmatprep.subr.bf16.mxu0 %v963
    %1295 = vmatpush1.bf16.msra.mxu0 %v962
    %1296 = vmatprep.subr.bf16.mxu0 %v971
    %1297 = vmatpush1.bf16.msra.mxu0 %v970
    %1298 = vmatprep.subr.bf16.mxu0 %v979
    %1299 = vmatpush1.bf16.msra.mxu0 %v978
    %1300 = vmatprep.subr.bf16.mxu0 %v987
    %1301 = vmatpush1.bf16.msra.mxu0 %v986
    %1302 = vmatprep.subr.bf16.mxu0 %v995
    %1303 = vmatpush1.bf16.msra.mxu0 %v994
    %1304 = vmatprep.subr.bf16.mxu0 0
    %1305 = vmatpush1.bf16.msra.mxu0 0
    %1306 = vmatprep.subr.bf16.mxu0 0
    %1307 = vmatpush1.bf16.msra.mxu0 0
    %1308 = vmatprep.subr.bf16.mxu0 0
    %1309 = vmatpush1.bf16.msra.mxu0 0
    %1310 = vmatprep.subr.bf16.mxu0 0
    %1311 = vmatpush1.bf16.msra.mxu0 0
    %1312 = vmatprep.subr.bf16.mxu0 0
    %1313 = vmatpush1.bf16.msra.mxu0 0
    %1314 = vmatprep.subr.bf16.mxu0 0
    %1315 = vmatpush1.bf16.msra.mxu0 0
    %1316 = vmatprep.subr.bf16.mxu0 0
    %1317 = vmatpush1.bf16.msra.mxu0 0
    %1318 = vmatprep.subr.bf16.mxu0 0
    %1319 = vmatpush1.bf16.msra.mxu0 0
    %1320 = vmatprep.mubr.bf16.mxu0 0
    %1321 = vmatmul.mubr.bf16.gmra.mrb[0].mxu0 %v628
    %v1322 = vpop.f32.mrb[0].mxu0
    %v1323 = vadd.f32 %v721, %v1322
    %v1324 = vpop.f32.mrb[0].mxu0
    %v1325 = vadd.f32 %v725, %v1324
    %v1326 = vpop.f32.mrb[0].mxu0
    %v1327 = vadd.f32 %v721, %v1326
    %v1328 = vpop.f32.mrb[0].mxu0
    %v1329 = vadd.f32 %v725, %v1328
    %1330 = vmatprep.mubr.bf16.mxu0 0
    %1331 = vmatmul.mubr.bf16.gmra.mrb[0].mxu0 %v629
    %v1332 = vpop.f32.mrb[0].mxu0
    %v1333 = vadd.f32 %v721, %v1332
    %v1334 = vpop.f32.mrb[0].mxu0
    %v1335 = vadd.f32 %v725, %v1334
    %v1336 = vpop.f32.mrb[0].mxu0
    %v1337 = vadd.f32 %v721, %v1336
    %v1338 = vpop.f32.mrb[0].mxu0
    %v1339 = vadd.f32 %v725, %v1338
    %1340 = vmatprep.mubr.bf16.mxu0 0
    %1341 = vmatmul.mubr.bf16.gmra.mrb[0].mxu0 %v630
    %v1342 = vpop.f32.mrb[0].mxu0
    %v1343 = vadd.f32 %v721, %v1342
    %v1344 = vpop.f32.mrb[0].mxu0
    %v1345 = vadd.f32 %v725, %v1344
    %v1346 = vpop.f32.mrb[0].mxu0
    %v1347 = vadd.f32 %v721, %v1346
    %v1348 = vpop.f32.mrb[0].mxu0
    %v1349 = vadd.f32 %v725, %v1348
    %1350 = vmatprep.mubr.bf16.mxu0 0
    %1351 = vmatmul.mubr.bf16.gmra.mrb[0].mxu0 %v631
    %v1352 = vpop.f32.mrb[0].mxu0
    %v1353 = vadd.f32 %v721, %v1352
    %v1354 = vpop.f32.mrb[0].mxu0
    %v1355 = vadd.f32 %v725, %v1354
    %v1356 = vpop.f32.mrb[0].mxu0
    %v1357 = vadd.f32 %v721, %v1356
    %v1358 = vpop.f32.mrb[0].mxu0
    %v1359 = vadd.f32 %v725, %v1358
    %1360 = vmatprep.mubr.bf16.mxu0 0
    %1361 = vmatmul.mubr.bf16.gmra.mrb[0].mxu0 %v632
    %v1362 = vpop.f32.mrb[0].mxu0
    %v1363 = vadd.f32 %v721, %v1362
    %v1364 = vpop.f32.mrb[0].mxu0
    %v1365 = vadd.f32 %v725, %v1364
    %v1366 = vpop.f32.mrb[0].mxu0
    %v1367 = vadd.f32 %v721, %v1366
    %v1368 = vpop.f32.mrb[0].mxu0
    %v1369 = vadd.f32 %v725, %v1368
    %1370 = vmatprep.mubr.bf16.mxu0 0
    %1371 = vmatmul.mubr.bf16.gmra.mrb[0].mxu0 %v633
    %v1372 = vpop.f32.mrb[0].mxu0
    %v1373 = vadd.f32 %v721, %v1372
    %v1374 = vpop.f32.mrb[0].mxu0
    %v1375 = vadd.f32 %v725, %v1374
    %v1376 = vpop.f32.mrb[0].mxu0
    %v1377 = vadd.f32 %v721, %v1376
    %v1378 = vpop.f32.mrb[0].mxu0
    %v1379 = vadd.f32 %v725, %v1378
    %1380 = vmatprep.mubr.bf16.mxu0 0
    %1381 = vmatmul.mubr.bf16.gmra.mrb[0].mxu0 %v634
    %v1382 = vpop.f32.mrb[0].mxu0
    %v1383 = vadd.f32 %v721, %v1382
    %v1384 = vpop.f32.mrb[0].mxu0
    %v1385 = vadd.f32 %v725, %v1384
    %v1386 = vpop.f32.mrb[0].mxu0
    %v1387 = vadd.f32 %v721, %v1386
    %v1388 = vpop.f32.mrb[0].mxu0
    %v1389 = vadd.f32 %v725, %v1388
    %1390 = vmatprep.mubr.bf16.mxu0 0
    %1391 = vmatmul.mubr.bf16.gmra.mrb[0].mxu0 %v635
    %v1392 = vpop.f32.mrb[0].mxu0
    %v1393 = vadd.f32 %v721, %v1392
    %v1394 = vpop.f32.mrb[0].mxu0
    %v1395 = vadd.f32 %v725, %v1394
    %v1396 = vpop.f32.mrb[0].mxu0
    %v1397 = vadd.f32 %v721, %v1396
    %v1398 = vpop.f32.mrb[0].mxu0
    %v1399 = vadd.f32 %v725, %v1398
    %1400 = vdwg.mxu0
    %1401 = vmatprep.subr.bf16.mxu0 %v941
    %1402 = vmatpush1.bf16.msra.mxu0 %v940
    %1403 = vmatprep.subr.bf16.mxu0 %v949
    %1404 = vmatpush1.bf16.msra.mxu0 %v948
    %1405 = vmatprep.subr.bf16.mxu0 %v957
    %1406 = vmatpush1.bf16.msra.mxu0 %v956
    %1407 = vmatprep.subr.bf16.mxu0 %v965
    %1408 = vmatpush1.bf16.msra.mxu0 %v964
    %1409 = vmatprep.subr.bf16.mxu0 %v973
    %1410 = vmatpush1.bf16.msra.mxu0 %v972
    %1411 = vmatprep.subr.bf16.mxu0 %v981
    %1412 = vmatpush1.bf16.msra.mxu0 %v980
    %1413 = vmatprep.subr.bf16.mxu0 %v989
    %1414 = vmatpush1.bf16.msra.mxu0 %v988
    %1415 = vmatprep.subr.bf16.mxu0 %v997
    %1416 = vmatpush1.bf16.msra.mxu0 %v996
    %1417 = vmatprep.subr.bf16.mxu0 0
    %1418 = vmatpush1.bf16.msra.mxu0 0
    %1419 = vmatprep.subr.bf16.mxu0 0
    %1420 = vmatpush1.bf16.msra.mxu0 0
    %1421 = vmatprep.subr.bf16.mxu0 0
    %1422 = vmatpush1.bf16.msra.mxu0 0
    %1423 = vmatprep.subr.bf16.mxu0 0
    %1424 = vmatpush1.bf16.msra.mxu0 0
    %1425 = vmatprep.subr.bf16.mxu0 0
    %1426 = vmatpush1.bf16.msra.mxu0 0
    %1427 = vmatprep.subr.bf16.mxu0 0
    %1428 = vmatpush1.bf16.msra.mxu0 0
    %1429 = vmatprep.subr.bf16.mxu0 0
    %1430 = vmatpush1.bf16.msra.mxu0 0
    %1431 = vmatprep.subr.bf16.mxu0 0
    %1432 = vmatpush1.bf16.msra.mxu0 0
    %1433 = vmatprep.mubr.bf16.mxu0 0
    %1434 = vmatmul.mubr.bf16.gmra.mrb[0].mxu0 %v628
    %v1435 = vpop.f32.mrb[0].mxu0
    %v1436 = vadd.f32 %v729, %v1435
    %v1437 = vpop.f32.mrb[0].mxu0
    %v1438 = vadd.f32 %v733, %v1437
    %v1439 = vpop.f32.mrb[0].mxu0
    %v1440 = vadd.f32 %v729, %v1439
    %v1441 = vpop.f32.mrb[0].mxu0
    %v1442 = vadd.f32 %v733, %v1441
    %1443 = vmatprep.mubr.bf16.mxu0 0
    %1444 = vmatmul.mubr.bf16.gmra.mrb[0].mxu0 %v629
    %v1445 = vpop.f32.mrb[0].mxu0
    %v1446 = vadd.f32 %v729, %v1445
    %v1447 = vpop.f32.mrb[0].mxu0
    %v1448 = vadd.f32 %v733, %v1447
    %v1449 = vpop.f32.mrb[0].mxu0
    %v1450 = vadd.f32 %v729, %v1449
    %v1451 = vpop.f32.mrb[0].mxu0
    %v1452 = vadd.f32 %v733, %v1451
    %1453 = vmatprep.mubr.bf16.mxu0 0
    %1454 = vmatmul.mubr.bf16.gmra.mrb[0].mxu0 %v630
    %v1455 = vpop.f32.mrb[0].mxu0
    %v1456 = vadd.f32 %v729, %v1455
    %v1457 = vpop.f32.mrb[0].mxu0
    %v1458 = vadd.f32 %v733, %v1457
    %v1459 = vpop.f32.mrb[0].mxu0
    %v1460 = vadd.f32 %v729, %v1459
    %v1461 = vpop.f32.mrb[0].mxu0
    %v1462 = vadd.f32 %v733, %v1461
    %1463 = vmatprep.mubr.bf16.mxu0 0
    %1464 = vmatmul.mubr.bf16.gmra.mrb[0].mxu0 %v631
    %v1465 = vpop.f32.mrb[0].mxu0
    %v1466 = vadd.f32 %v729, %v1465
    %v1467 = vpop.f32.mrb[0].mxu0
    %v1468 = vadd.f32 %v733, %v1467
    %v1469 = vpop.f32.mrb[0].mxu0
    %v1470 = vadd.f32 %v729, %v1469
    %v1471 = vpop.f32.mrb[0].mxu0
    %v1472 = vadd.f32 %v733, %v1471
    %1473 = vmatprep.mubr.bf16.mxu0 0
    %1474 = vmatmul.mubr.bf16.gmra.mrb[0].mxu0 %v632
    %v1475 = vpop.f32.mrb[0].mxu0
    %v1476 = vadd.f32 %v729, %v1475
    %v1477 = vpop.f32.mrb[0].mxu0
    %v1478 = vadd.f32 %v733, %v1477
    %v1479 = vpop.f32.mrb[0].mxu0
    %v1480 = vadd.f32 %v729, %v1479
    %v1481 = vpop.f32.mrb[0].mxu0
    %v1482 = vadd.f32 %v733, %v1481
    %1483 = vmatprep.mubr.bf16.mxu0 0
    %1484 = vmatmul.mubr.bf16.gmra.mrb[0].mxu0 %v633
    %v1485 = vpop.f32.mrb[0].mxu0
    %v1486 = vadd.f32 %v729, %v1485
    %v1487 = vpop.f32.mrb[0].mxu0
    %v1488 = vadd.f32 %v733, %v1487
    %v1489 = vpop.f32.mrb[0].mxu0
    %v1490 = vadd.f32 %v729, %v1489
    %v1491 = vpop.f32.mrb[0].mxu0
    %v1492 = vadd.f32 %v733, %v1491
    %1493 = vmatprep.mubr.bf16.mxu0 0
    %1494 = vmatmul.mubr.bf16.gmra.mrb[0].mxu0 %v634
    %v1495 = vpop.f32.mrb[0].mxu0
    %v1496 = vadd.f32 %v729, %v1495
    %v1497 = vpop.f32.mrb[0].mxu0
    %v1498 = vadd.f32 %v733, %v1497
    %v1499 = vpop.f32.mrb[0].mxu0
    %v1500 = vadd.f32 %v729, %v1499
    %v1501 = vpop.f32.mrb[0].mxu0
    %v1502 = vadd.f32 %v733, %v1501
    %1503 = vmatprep.mubr.bf16.mxu0 0
    %1504 = vmatmul.mubr.bf16.gmra.mrb[0].mxu0 %v635
    %v1505 = vpop.f32.mrb[0].mxu0
    %v1506 = vadd.f32 %v729, %v1505
    %v1507 = vpop.f32.mrb[0].mxu0
    %v1508 = vadd.f32 %v733, %v1507
    %v1509 = vpop.f32.mrb[0].mxu0
    %v1510 = vadd.f32 %v729, %v1509
    %v1511 = vpop.f32.mrb[0].mxu0
    %v1512 = vadd.f32 %v733, %v1511
    %1513 = vdwg.mxu0
    %v1514 = vmax.f32 %v1097, 0.0
    %v1515 = vmax.f32 %v1099, 0.0
    %v1516 = vmax.f32 %v1210, 0.0
    %v1517 = vmax.f32 %v1212, 0.0
    %v1518 = vmax.f32 %v1323, 0.0
    %v1519 = vmax.f32 %v1325, 0.0
    %v1520 = vmax.f32 %v1436, 0.0
    %v1521 = vmax.f32 %v1438, 0.0
    %v1522 = vmax.f32 %v1101, 0.0
    %v1523 = vmax.f32 %v1103, 0.0
    %v1524 = vmax.f32 %v1214, 0.0
    %v1525 = vmax.f32 %v1216, 0.0
    %v1526 = vmax.f32 %v1327, 0.0
    %v1527 = vmax.f32 %v1329, 0.0
    %v1528 = vmax.f32 %v1440, 0.0
    %v1529 = vmax.f32 %v1442, 0.0
    %v1530 = vmax.f32 %v1107, 0.0
    %v1531 = vmax.f32 %v1109, 0.0
    %v1532 = vmax.f32 %v1220, 0.0
    %v1533 = vmax.f32 %v1222, 0.0
    %v1534 = vmax.f32 %v1333, 0.0
    %v1535 = vmax.f32 %v1335, 0.0
    %v1536 = vmax.f32 %v1446, 0.0
    %v1537 = vmax.f32 %v1448, 0.0
    %v1538 = vmax.f32 %v1111, 0.0
    %v1539 = vmax.f32 %v1113, 0.0
    %v1540 = vmax.f32 %v1224, 0.0
    %v1541 = vmax.f32 %v1226, 0.0
    %v1542 = vmax.f32 %v1337, 0.0
    %v1543 = vmax.f32 %v1339, 0.0
    %v1544 = vmax.f32 %v1450, 0.0
    %v1545 = vmax.f32 %v1452, 0.0
    %v1546 = vmax.f32 %v1117, 0.0
    %v1547 = vmax.f32 %v1119, 0.0
    %v1548 = vmax.f32 %v1230, 0.0
    %v1549 = vmax.f32 %v1232, 0.0
    %v1550 = vmax.f32 %v1343, 0.0
    %v1551 = vmax.f32 %v1345, 0.0
    %v1552 = vmax.f32 %v1456, 0.0
    %v1553 = vmax.f32 %v1458, 0.0
    %v1554 = vmax.f32 %v1121, 0.0
    %v1555 = vmax.f32 %v1123, 0.0
    %v1556 = vmax.f32 %v1234, 0.0
    %v1557 = vmax.f32 %v1236, 0.0
    %v1558 = vmax.f32 %v1347, 0.0
    %v1559 = vmax.f32 %v1349, 0.0
    %v1560 = vmax.f32 %v1460, 0.0
    %v1561 = vmax.f32 %v1462, 0.0
    %v1562 = vmax.f32 %v1127, 0.0
    %v1563 = vmax.f32 %v1129, 0.0
    %v1564 = vmax.f32 %v1240, 0.0
    %v1565 = vmax.f32 %v1242, 0.0
    %v1566 = vmax.f32 %v1353, 0.0
    %v1567 = vmax.f32 %v1355, 0.0
    %v1568 = vmax.f32 %v1466, 0.0
    %v1569 = vmax.f32 %v1468, 0.0
    %v1570 = vmax.f32 %v1131, 0.0
    %v1571 = vmax.f32 %v1133, 0.0
    %v1572 = vmax.f32 %v1244, 0.0
    %v1573 = vmax.f32 %v1246, 0.0
    %v1574 = vmax.f32 %v1357, 0.0
    %v1575 = vmax.f32 %v1359, 0.0
    %v1576 = vmax.f32 %v1470, 0.0
    %v1577 = vmax.f32 %v1472, 0.0
    %v1578 = vmax.f32 %v1137, 0.0
    %v1579 = vmax.f32 %v1139, 0.0
    %v1580 = vmax.f32 %v1250, 0.0
    %v1581 = vmax.f32 %v1252, 0.0
    %v1582 = vmax.f32 %v1363, 0.0
    %v1583 = vmax.f32 %v1365, 0.0
    %v1584 = vmax.f32 %v1476, 0.0
    %v1585 = vmax.f32 %v1478, 0.0
    %v1586 = vmax.f32 %v1141, 0.0
    %v1587 = vmax.f32 %v1143, 0.0
    %v1588 = vmax.f32 %v1254, 0.0
    %v1589 = vmax.f32 %v1256, 0.0
    %v1590 = vmax.f32 %v1367, 0.0
    %v1591 = vmax.f32 %v1369, 0.0
    %v1592 = vmax.f32 %v1480, 0.0
    %v1593 = vmax.f32 %v1482, 0.0
    %v1594 = vmax.f32 %v1147, 0.0
    %v1595 = vmax.f32 %v1149, 0.0
    %v1596 = vmax.f32 %v1260, 0.0
    %v1597 = vmax.f32 %v1262, 0.0
    %v1598 = vmax.f32 %v1373, 0.0
    %v1599 = vmax.f32 %v1375, 0.0
    %v1600 = vmax.f32 %v1486, 0.0
    %v1601 = vmax.f32 %v1488, 0.0
    %v1602 = vmax.f32 %v1151, 0.0
    %v1603 = vmax.f32 %v1153, 0.0
    %v1604 = vmax.f32 %v1264, 0.0
    %v1605 = vmax.f32 %v1266, 0.0
    %v1606 = vmax.f32 %v1377, 0.0
    %v1607 = vmax.f32 %v1379, 0.0
    %v1608 = vmax.f32 %v1490, 0.0
    %v1609 = vmax.f32 %v1492, 0.0
    %v1610 = vmax.f32 %v1157, 0.0
    %v1611 = vmax.f32 %v1159, 0.0
    %v1612 = vmax.f32 %v1270, 0.0
    %v1613 = vmax.f32 %v1272, 0.0
    %v1614 = vmax.f32 %v1383, 0.0
    %v1615 = vmax.f32 %v1385, 0.0
    %v1616 = vmax.f32 %v1496, 0.0
    %v1617 = vmax.f32 %v1498, 0.0
    %v1618 = vmax.f32 %v1161, 0.0
    %v1619 = vmax.f32 %v1163, 0.0
    %v1620 = vmax.f32 %v1274, 0.0
    %v1621 = vmax.f32 %v1276, 0.0
    %v1622 = vmax.f32 %v1387, 0.0
    %v1623 = vmax.f32 %v1389, 0.0
    %v1624 = vmax.f32 %v1500, 0.0
    %v1625 = vmax.f32 %v1502, 0.0
    %v1626 = vmax.f32 %v1167, 0.0
    %v1627 = vmax.f32 %v1169, 0.0
    %v1628 = vmax.f32 %v1280, 0.0
    %v1629 = vmax.f32 %v1282, 0.0
    %v1630 = vmax.f32 %v1393, 0.0
    %v1631 = vmax.f32 %v1395, 0.0
    %v1632 = vmax.f32 %v1506, 0.0
    %v1633 = vmax.f32 %v1508, 0.0
    %v1634 = vmax.f32 %v1171, 0.0
    %v1635 = vmax.f32 %v1173, 0.0
    %v1636 = vmax.f32 %v1284, 0.0
    %v1637 = vmax.f32 %v1286, 0.0
    %v1638 = vmax.f32 %v1397, 0.0
    %v1639 = vmax.f32 %v1399, 0.0
    %v1640 = vmax.f32 %v1510, 0.0
    %v1641 = vmax.f32 %v1512, 0.0
    %v1642 = vmax.f32 %v1514, %v1522
    %v1643 = vmax.f32 %v1642, %v1530
    %v1644 = vmax.f32 %v1643, %v1538
    %v1645 = vmax.f32 %v1644, %v1546
    %v1646 = vmax.f32 %v1645, %v1554
    %v1647 = vmax.f32 %v1646, %v1562
    %v1648 = vmax.f32 %v1647, %v1570
    %v1649 = vrot.slane %v1648, 4
    %v1650 = vmax.f32 %v1648, %v1649
    %v1651 = vrot.slane %v1650, 2
    %v1652 = vmax.f32 %v1650, %v1651
    %v1653 = vrot.slane %v1652, 1
    %v1654 = vmax.f32 %v1652, %v1653
    %v1655 = vmax.f32 %v1515, %v1523
    %v1656 = vmax.f32 %v1655, %v1531
    %v1657 = vmax.f32 %v1656, %v1539
    %v1658 = vmax.f32 %v1657, %v1547
    %v1659 = vmax.f32 %v1658, %v1555
    %v1660 = vmax.f32 %v1659, %v1563
    %v1661 = vmax.f32 %v1660, %v1571
    %v1662 = vrot.slane %v1661, 4
    %v1663 = vmax.f32 %v1661, %v1662
    %v1664 = vrot.slane %v1663, 2
    %v1665 = vmax.f32 %v1663, %v1664
    %v1666 = vrot.slane %v1665, 1
    %v1667 = vmax.f32 %v1665, %v1666
    %v1668 = vmax.f32 %v1516, %v1524
    %v1669 = vmax.f32 %v1668, %v1532
    %v1670 = vmax.f32 %v1669, %v1540
    %v1671 = vmax.f32 %v1670, %v1548
    %v1672 = vmax.f32 %v1671, %v1556
    %v1673 = vmax.f32 %v1672, %v1564
    %v1674 = vmax.f32 %v1673, %v1572
    %v1675 = vrot.slane %v1674, 4
    %v1676 = vmax.f32 %v1674, %v1675
    %v1677 = vrot.slane %v1676, 2
    %v1678 = vmax.f32 %v1676, %v1677
    %v1679 = vrot.slane %v1678, 1
    %v1680 = vmax.f32 %v1678, %v1679
    %v1681 = vmax.f32 %v1517, %v1525
    %v1682 = vmax.f32 %v1681, %v1533
    %v1683 = vmax.f32 %v1682, %v1541
    %v1684 = vmax.f32 %v1683, %v1549
    %v1685 = vmax.f32 %v1684, %v1557
    %v1686 = vmax.f32 %v1685, %v1565
    %v1687 = vmax.f32 %v1686, %v1573
    %v1688 = vrot.slane %v1687, 4
    %v1689 = vmax.f32 %v1687, %v1688
    %v1690 = vrot.slane %v1689, 2
    %v1691 = vmax.f32 %v1689, %v1690
    %v1692 = vrot.slane %v1691, 1
    %v1693 = vmax.f32 %v1691, %v1692
    %v1694 = vmax.f32 %v1518, %v1526
    %v1695 = vmax.f32 %v1694, %v1534
    %v1696 = vmax.f32 %v1695, %v1542
    %v1697 = vmax.f32 %v1696, %v1550
    %v1698 = vmax.f32 %v1697, %v1558
    %v1699 = vmax.f32 %v1698, %v1566
    %v1700 = vmax.f32 %v1699, %v1574
    %v1701 = vrot.slane %v1700, 4
    %v1702 = vmax.f32 %v1700, %v1701
    %v1703 = vrot.slane %v1702, 2
    %v1704 = vmax.f32 %v1702, %v1703
    %v1705 = vrot.slane %v1704, 1
    %v1706 = vmax.f32 %v1704, %v1705
    %v1707 = vmax.f32 %v1519, %v1527
    %v1708 = vmax.f32 %v1707, %v1535
    %v1709 = vmax.f32 %v1708, %v1543
    %v1710 = vmax.f32 %v1709, %v1551
    %v1711 = vmax.f32 %v1710, %v1559
    %v1712 = vmax.f32 %v1711, %v1567
    %v1713 = vmax.f32 %v1712, %v1575
    %v1714 = vrot.slane %v1713, 4
    %v1715 = vmax.f32 %v1713, %v1714
    %v1716 = vrot.slane %v1715, 2
    %v1717 = vmax.f32 %v1715, %v1716
    %v1718 = vrot.slane %v1717, 1
    %v1719 = vmax.f32 %v1717, %v1718
    %v1720 = vmax.f32 %v1520, %v1528
    %v1721 = vmax.f32 %v1720, %v1536
    %v1722 = vmax.f32 %v1721, %v1544
    %v1723 = vmax.f32 %v1722, %v1552
    %v1724 = vmax.f32 %v1723, %v1560
    %v1725 = vmax.f32 %v1724, %v1568
    %v1726 = vmax.f32 %v1725, %v1576
    %v1727 = vrot.slane %v1726, 4
    %v1728 = vmax.f32 %v1726, %v1727
    %v1729 = vrot.slane %v1728, 2
    %v1730 = vmax.f32 %v1728, %v1729
    %v1731 = vrot.slane %v1730, 1
    %v1732 = vmax.f32 %v1730, %v1731
    %v1733 = vmax.f32 %v1521, %v1529
    %v1734 = vmax.f32 %v1733, %v1537
    %v1735 = vmax.f32 %v1734, %v1545
    %v1736 = vmax.f32 %v1735, %v1553
    %v1737 = vmax.f32 %v1736, %v1561
    %v1738 = vmax.f32 %v1737, %v1569
    %v1739 = vmax.f32 %v1738, %v1577
    %v1740 = vrot.slane %v1739, 4
    %v1741 = vmax.f32 %v1739, %v1740
    %v1742 = vrot.slane %v1741, 2
    %v1743 = vmax.f32 %v1741, %v1742
    %v1744 = vrot.slane %v1743, 1
    %v1745 = vmax.f32 %v1743, %v1744
    %v1746 = vmax.f32 %v1578, %v1586
    %v1747 = vmax.f32 %v1746, %v1594
    %v1748 = vmax.f32 %v1747, %v1602
    %v1749 = vmax.f32 %v1748, %v1610
    %v1750 = vmax.f32 %v1749, %v1618
    %v1751 = vmax.f32 %v1750, %v1626
    %v1752 = vmax.f32 %v1751, %v1634
    %v1753 = vrot.slane %v1752, 4
    %v1754 = vmax.f32 %v1752, %v1753
    %v1755 = vrot.slane %v1754, 2
    %v1756 = vmax.f32 %v1754, %v1755
    %v1757 = vrot.slane %v1756, 1
    %v1758 = vmax.f32 %v1756, %v1757
    %v1759 = vmax.f32 %v1579, %v1587
    %v1760 = vmax.f32 %v1759, %v1595
    %v1761 = vmax.f32 %v1760, %v1603
    %v1762 = vmax.f32 %v1761, %v1611
    %v1763 = vmax.f32 %v1762, %v1619
    %v1764 = vmax.f32 %v1763, %v1627
    %v1765 = vmax.f32 %v1764, %v1635
    %v1766 = vrot.slane %v1765, 4
    %v1767 = vmax.f32 %v1765, %v1766
    %v1768 = vrot.slane %v1767, 2
    %v1769 = vmax.f32 %v1767, %v1768
    %v1770 = vrot.slane %v1769, 1
    %v1771 = vmax.f32 %v1769, %v1770
    %v1772 = vmax.f32 %v1580, %v1588
    %v1773 = vmax.f32 %v1772, %v1596
    %v1774 = vmax.f32 %v1773, %v1604
    %v1775 = vmax.f32 %v1774, %v1612
    %v1776 = vmax.f32 %v1775, %v1620
    %v1777 = vmax.f32 %v1776, %v1628
    %v1778 = vmax.f32 %v1777, %v1636
    %v1779 = vrot.slane %v1778, 4
    %v1780 = vmax.f32 %v1778, %v1779
    %v1781 = vrot.slane %v1780, 2
    %v1782 = vmax.f32 %v1780, %v1781
    %v1783 = vrot.slane %v1782, 1
    %v1784 = vmax.f32 %v1782, %v1783
    %v1785 = vmax.f32 %v1581, %v1589
    %v1786 = vmax.f32 %v1785, %v1597
    %v1787 = vmax.f32 %v1786, %v1605
    %v1788 = vmax.f32 %v1787, %v1613
    %v1789 = vmax.f32 %v1788, %v1621
    %v1790 = vmax.f32 %v1789, %v1629
    %v1791 = vmax.f32 %v1790, %v1637
    %v1792 = vrot.slane %v1791, 4
    %v1793 = vmax.f32 %v1791, %v1792
    %v1794 = vrot.slane %v1793, 2
    %v1795 = vmax.f32 %v1793, %v1794
    %v1796 = vrot.slane %v1795, 1
    %v1797 = vmax.f32 %v1795, %v1796
    %v1798 = vmax.f32 %v1582, %v1590
    %v1799 = vmax.f32 %v1798, %v1598
    %v1800 = vmax.f32 %v1799, %v1606
    %v1801 = vmax.f32 %v1800, %v1614
    %v1802 = vmax.f32 %v1801, %v1622
    %v1803 = vmax.f32 %v1802, %v1630
    %v1804 = vmax.f32 %v1803, %v1638
    %v1805 = vrot.slane %v1804, 4
    %v1806 = vmax.f32 %v1804, %v1805
    %v1807 = vrot.slane %v1806, 2
    %v1808 = vmax.f32 %v1806, %v1807
    %v1809 = vrot.slane %v1808, 1
    %v1810 = vmax.f32 %v1808, %v1809
    %v1811 = vmax.f32 %v1583, %v1591
    %v1812 = vmax.f32 %v1811, %v1599
    %v1813 = vmax.f32 %v1812, %v1607
    %v1814 = vmax.f32 %v1813, %v1615
    %v1815 = vmax.f32 %v1814, %v1623
    %v1816 = vmax.f32 %v1815, %v1631
    %v1817 = vmax.f32 %v1816, %v1639
    %v1818 = vrot.slane %v1817, 4
    %v1819 = vmax.f32 %v1817, %v1818
    %v1820 = vrot.slane %v1819, 2
    %v1821 = vmax.f32 %v1819, %v1820
    %v1822 = vrot.slane %v1821, 1
    %v1823 = vmax.f32 %v1821, %v1822
    %v1824 = vmax.f32 %v1584, %v1592
    %v1825 = vmax.f32 %v1824, %v1600
    %v1826 = vmax.f32 %v1825, %v1608
    %v1827 = vmax.f32 %v1826, %v1616
    %v1828 = vmax.f32 %v1827, %v1624
    %v1829 = vmax.f32 %v1828, %v1632
    %v1830 = vmax.f32 %v1829, %v1640
    %v1831 = vrot.slane %v1830, 4
    %v1832 = vmax.f32 %v1830, %v1831
    %v1833 = vrot.slane %v1832, 2
    %v1834 = vmax.f32 %v1832, %v1833
    %v1835 = vrot.slane %v1834, 1
    %v1836 = vmax.f32 %v1834, %v1835
    %v1837 = vmax.f32 %v1585, %v1593
    %v1838 = vmax.f32 %v1837, %v1601
    %v1839 = vmax.f32 %v1838, %v1609
    %v1840 = vmax.f32 %v1839, %v1617
    %v1841 = vmax.f32 %v1840, %v1625
    %v1842 = vmax.f32 %v1841, %v1633
    %v1843 = vmax.f32 %v1842, %v1641
    %v1844 = vrot.slane %v1843, 4
    %v1845 = vmax.f32 %v1843, %v1844
    %v1846 = vrot.slane %v1845, 2
    %v1847 = vmax.f32 %v1845, %v1846
    %v1848 = vrot.slane %v1847, 1
    %v1849 = vmax.f32 %v1847, %v1848
    %v1850 = vpack.c.bf16 %v1654, %v1654
    %v1851 = vpack.c.bf16 %v1667, %v1667
    %v1852 = vpack.c.bf16 %v1680, %v1680
    %v1853 = vpack.c.bf16 %v1693, %v1693
    %v1854 = vpack.c.bf16 %v1706, %v1706
    %v1855 = vpack.c.bf16 %v1719, %v1719
    %v1856 = vpack.c.bf16 %v1732, %v1732
    %v1857 = vpack.c.bf16 %v1745, %v1745
    %v1858 = vpack.c.bf16 %v1758, %v1758
    %v1859 = vpack.c.bf16 %v1771, %v1771
    %v1860 = vpack.c.bf16 %v1784, %v1784
    %v1861 = vpack.c.bf16 %v1797, %v1797
    %v1862 = vpack.c.bf16 %v1810, %v1810
    %v1863 = vpack.c.bf16 %v1823, %v1823
    %v1864 = vpack.c.bf16 %v1836, %v1836
    %v1865 = vpack.c.bf16 %v1849, %v1849
    %v1866 = vld [vmem:[#allocation5] sm:$0xff]
    %v1867 = vld [vmem:[#allocation5 + $0x8] sm:$0xff]
    %v1868 = vld [vmem:[#allocation5 + $0x10] sm:$0xff]
    %v1869 = vld [vmem:[#allocation5 + $0x18] sm:$0xff]
    %v1870 = vld [vmem:[#allocation5 + $0x20] sm:$0xff]
    %v1871 = vld [vmem:[#allocation5 + $0x28] sm:$0xff]
    %v1872 = vld [vmem:[#allocation5 + $0x30] sm:$0xff]
    %v1873 = vld [vmem:[#allocation5 + $0x38] sm:$0xff]
    %v1874 = vld [vmem:[#allocation5 + $0x40] sm:$0xff]
    %v1875 = vld [vmem:[#allocation5 + $0x48] sm:$0xff]
    %v1876 = vld [vmem:[#allocation5 + $0x50] sm:$0xff]
    %v1877 = vld [vmem:[#allocation5 + $0x58] sm:$0xff]
    %v1878 = vld [vmem:[#allocation5 + $0x60] sm:$0xff]
    %v1879 = vld [vmem:[#allocation5 + $0x68] sm:$0xff]
    %v1880 = vld [vmem:[#allocation5 + $0x70] sm:$0xff]
    %v1881 = vld [vmem:[#allocation5 + $0x78] sm:$0xff]
    %v1882 = vld [vmem:[#allocation5 + $0x80] sm:$0xff]
    %v1883 = vld [vmem:[#allocation5 + $0x88] sm:$0xff]
    %v1884 = vld [vmem:[#allocation5 + $0x90] sm:$0xff]
    %v1885 = vld [vmem:[#allocation5 + $0x98] sm:$0xff]
    %v1886 = vld [vmem:[#allocation5 + $0xa0] sm:$0xff]
    %v1887 = vld [vmem:[#allocation5 + $0xa8] sm:$0xff]
    %v1888 = vld [vmem:[#allocation5 + $0xb0] sm:$0xff]
    %v1889 = vld [vmem:[#allocation5 + $0xb8] sm:$0xff]
    %v1890 = vld [vmem:[#allocation5 + $0xc0] sm:$0xff]
    %v1891 = vld [vmem:[#allocation5 + $0xc8] sm:$0xff]
    %v1892 = vld [vmem:[#allocation5 + $0xd0] sm:$0xff]
    %v1893 = vld [vmem:[#allocation5 + $0xd8] sm:$0xff]
    %v1894 = vld [vmem:[#allocation5 + $0xe0] sm:$0xff]
    %v1895 = vld [vmem:[#allocation5 + $0xe8] sm:$0xff]
    %v1896 = vld [vmem:[#allocation5 + $0xf0] sm:$0xff]
    %v1897 = vld [vmem:[#allocation5 + $0xf8] sm:$0xff]
    %v1898 = vld [vmem:[#allocation5 + $0x100] sm:$0xff]
    %v1899 = vld [vmem:[#allocation5 + $0x108] sm:$0xff]
    %v1900 = vld [vmem:[#allocation5 + $0x110] sm:$0xff]
    %v1901 = vld [vmem:[#allocation5 + $0x118] sm:$0xff]
    %v1902 = vld [vmem:[#allocation5 + $0x120] sm:$0xff]
    %v1903 = vld [vmem:[#allocation5 + $0x128] sm:$0xff]
    %v1904 = vld [vmem:[#allocation5 + $0x130] sm:$0xff]
    %v1905 = vld [vmem:[#allocation5 + $0x138] sm:$0xff]
    %v1906 = vld [vmem:[#allocation5 + $0x140] sm:$0xff]
    %v1907 = vld [vmem:[#allocation5 + $0x148] sm:$0xff]
    %v1908 = vld [vmem:[#allocation5 + $0x150] sm:$0xff]
    %v1909 = vld [vmem:[#allocation5 + $0x158] sm:$0xff]
    %v1910 = vld [vmem:[#allocation5 + $0x160] sm:$0xff]
    %v1911 = vld [vmem:[#allocation5 + $0x168] sm:$0xff]
    %v1912 = vld [vmem:[#allocation5 + $0x170] sm:$0xff]
    %v1913 = vld [vmem:[#allocation5 + $0x178] sm:$0xff]
    %v1914 = vld [vmem:[#allocation5 + $0x180] sm:$0xff]
    %v1915 = vld [vmem:[#allocation5 + $0x188] sm:$0xff]
    %v1916 = vld [vmem:[#allocation5 + $0x190] sm:$0xff]
    %v1917 = vld [vmem:[#allocation5 + $0x198] sm:$0xff]
    %v1918 = vld [vmem:[#allocation5 + $0x1a0] sm:$0xff]
    %v1919 = vld [vmem:[#allocation5 + $0x1a8] sm:$0xff]
    %v1920 = vld [vmem:[#allocation5 + $0x1b0] sm:$0xff]
    %v1921 = vld [vmem:[#allocation5 + $0x1b8] sm:$0xff]
    %v1922 = vld [vmem:[#allocation5 + $0x1c0] sm:$0xff]
    %v1923 = vld [vmem:[#allocation5 + $0x1c8] sm:$0xff]
    %v1924 = vld [vmem:[#allocation5 + $0x1d0] sm:$0xff]
    %v1925 = vld [vmem:[#allocation5 + $0x1d8] sm:$0xff]
    %v1926 = vld [vmem:[#allocation5 + $0x1e0] sm:$0xff]
    %v1927 = vld [vmem:[#allocation5 + $0x1e8] sm:$0xff]
    %v1928 = vld [vmem:[#allocation5 + $0x1f0] sm:$0xff]
    %v1929 = vld [vmem:[#allocation5 + $0x1f8] sm:$0xff]
    %v1930 = vld [vmem:[#allocation5 + $0x200] sm:$0xff]
    %v1931 = vld [vmem:[#allocation5 + $0x208] sm:$0xff]
    %v1932 = vld [vmem:[#allocation5 + $0x210] sm:$0xff]
    %v1933 = vld [vmem:[#allocation5 + $0x218] sm:$0xff]
    %v1934 = vld [vmem:[#allocation5 + $0x220] sm:$0xff]
    %v1935 = vld [vmem:[#allocation5 + $0x228] sm:$0xff]
    %v1936 = vld [vmem:[#allocation5 + $0x230] sm:$0xff]
    %v1937 = vld [vmem:[#allocation5 + $0x238] sm:$0xff]
    %v1938 = vld [vmem:[#allocation5 + $0x240] sm:$0xff]
    %v1939 = vld [vmem:[#allocation5 + $0x248] sm:$0xff]
    %v1940 = vld [vmem:[#allocation5 + $0x250] sm:$0xff]
    %v1941 = vld [vmem:[#allocation5 + $0x258] sm:$0xff]
    %v1942 = vld [vmem:[#allocation5 + $0x260] sm:$0xff]
    %v1943 = vld [vmem:[#allocation5 + $0x268] sm:$0xff]
    %v1944 = vld [vmem:[#allocation5 + $0x270] sm:$0xff]
    %v1945 = vld [vmem:[#allocation5 + $0x278] sm:$0xff]
    %v1946 = vld [vmem:[#allocation5 + $0x280] sm:$0xff]
    %v1947 = vld [vmem:[#allocation5 + $0x288] sm:$0xff]
    %v1948 = vld [vmem:[#allocation5 + $0x290] sm:$0xff]
    %v1949 = vld [vmem:[#allocation5 + $0x298] sm:$0xff]
    %v1950 = vld [vmem:[#allocation5 + $0x2a0] sm:$0xff]
    %v1951 = vld [vmem:[#allocation5 + $0x2a8] sm:$0xff]
    %v1952 = vld [vmem:[#allocation5 + $0x2b0] sm:$0xff]
    %v1953 = vld [vmem:[#allocation5 + $0x2b8] sm:$0xff]
    %v1954 = vld [vmem:[#allocation5 + $0x2c0] sm:$0xff]
    %v1955 = vld [vmem:[#allocation5 + $0x2c8] sm:$0xff]
    %v1956 = vld [vmem:[#allocation5 + $0x2d0] sm:$0xff]
    %v1957 = vld [vmem:[#allocation5 + $0x2d8] sm:$0xff]
    %v1958 = vld [vmem:[#allocation5 + $0x2e0] sm:$0xff]
    %v1959 = vld [vmem:[#allocation5 + $0x2e8] sm:$0xff]
    %v1960 = vld [vmem:[#allocation5 + $0x2f0] sm:$0xff]
    %v1961 = vld [vmem:[#allocation5 + $0x2f8] sm:$0xff]
    %v1962 = vld [vmem:[#allocation5 + $0x300] sm:$0xff]
    %v1963 = vld [vmem:[#allocation5 + $0x308] sm:$0xff]
    %v1964 = vld [vmem:[#allocation5 + $0x310] sm:$0xff]
    %v1965 = vld [vmem:[#allocation5 + $0x318] sm:$0xff]
    %v1966 = vld [vmem:[#allocation5 + $0x320] sm:$0xff]
    %v1967 = vld [vmem:[#allocation5 + $0x328] sm:$0xff]
    %v1968 = vld [vmem:[#allocation5 + $0x330] sm:$0xff]
    %v1969 = vld [vmem:[#allocation5 + $0x338] sm:$0xff]
    %v1970 = vld [vmem:[#allocation5 + $0x340] sm:$0xff]
    %v1971 = vld [vmem:[#allocation5 + $0x348] sm:$0xff]
    %v1972 = vld [vmem:[#allocation5 + $0x350] sm:$0xff]
    %v1973 = vld [vmem:[#allocation5 + $0x358] sm:$0xff]
    %v1974 = vld [vmem:[#allocation5 + $0x360] sm:$0xff]
    %v1975 = vld [vmem:[#allocation5 + $0x368] sm:$0xff]
    %v1976 = vld [vmem:[#allocation5 + $0x370] sm:$0xff]
    %v1977 = vld [vmem:[#allocation5 + $0x378] sm:$0xff]
    %v1978 = vld [vmem:[#allocation5 + $0x380] sm:$0xff]
    %v1979 = vld [vmem:[#allocation5 + $0x388] sm:$0xff]
    %v1980 = vld [vmem:[#allocation5 + $0x390] sm:$0xff]
    %v1981 = vld [vmem:[#allocation5 + $0x398] sm:$0xff]
    %v1982 = vld [vmem:[#allocation5 + $0x3a0] sm:$0xff]
    %v1983 = vld [vmem:[#allocation5 + $0x3a8] sm:$0xff]
    %v1984 = vld [vmem:[#allocation5 + $0x3b0] sm:$0xff]
    %v1985 = vld [vmem:[#allocation5 + $0x3b8] sm:$0xff]
    %v1986 = vld [vmem:[#allocation5 + $0x3c0] sm:$0xff]
    %v1987 = vld [vmem:[#allocation5 + $0x3c8] sm:$0xff]
    %v1988 = vld [vmem:[#allocation5 + $0x3d0] sm:$0xff]
    %v1989 = vld [vmem:[#allocation5 + $0x3d8] sm:$0xff]
    %v1990 = vld [vmem:[#allocation5 + $0x3e0] sm:$0xff]
    %v1991 = vld [vmem:[#allocation5 + $0x3e8] sm:$0xff]
    %v1992 = vld [vmem:[#allocation5 + $0x3f0] sm:$0xff]
    %v1993 = vld [vmem:[#allocation5 + $0x3f8] sm:$0xff]
    %v1994 = vld [vmem:[#allocation5 + $0x400] sm:$0xff]
    %v1995 = vld [vmem:[#allocation5 + $0x408] sm:$0xff]
    %v1996 = vld [vmem:[#allocation5 + $0x410] sm:$0xff]
    %v1997 = vld [vmem:[#allocation5 + $0x418] sm:$0xff]
    %v1998 = vld [vmem:[#allocation5 + $0x420] sm:$0xff]
    %v1999 = vld [vmem:[#allocation5 + $0x428] sm:$0xff]
    %v2000 = vld [vmem:[#allocation5 + $0x430] sm:$0xff]
    %v2001 = vld [vmem:[#allocation5 + $0x438] sm:$0xff]
    %v2002 = vld [vmem:[#allocation5 + $0x440] sm:$0xff]
    %v2003 = vld [vmem:[#allocation5 + $0x448] sm:$0xff]
    %v2004 = vld [vmem:[#allocation5 + $0x450] sm:$0xff]
    %v2005 = vld [vmem:[#allocation5 + $0x458] sm:$0xff]
    %v2006 = vld [vmem:[#allocation5 + $0x460] sm:$0xff]
    %v2007 = vld [vmem:[#allocation5 + $0x468] sm:$0xff]
    %v2008 = vld [vmem:[#allocation5 + $0x470] sm:$0xff]
    %v2009 = vld [vmem:[#allocation5 + $0x478] sm:$0xff]
    %v2010 = vld [vmem:[#allocation5 + $0x480] sm:$0xff]
    %v2011 = vld [vmem:[#allocation5 + $0x488] sm:$0xff]
    %v2012 = vld [vmem:[#allocation5 + $0x490] sm:$0xff]
    %v2013 = vld [vmem:[#allocation5 + $0x498] sm:$0xff]
    %v2014 = vld [vmem:[#allocation5 + $0x4a0] sm:$0xff]
    %v2015 = vld [vmem:[#allocation5 + $0x4a8] sm:$0xff]
    %v2016 = vld [vmem:[#allocation5 + $0x4b0] sm:$0xff]
    %v2017 = vld [vmem:[#allocation5 + $0x4b8] sm:$0xff]
    %v2018 = vld [vmem:[#allocation5 + $0x4c0] sm:$0xff]
    %v2019 = vld [vmem:[#allocation5 + $0x4c8] sm:$0xff]
    %v2020 = vld [vmem:[#allocation5 + $0x4d0] sm:$0xff]
    %v2021 = vld [vmem:[#allocation5 + $0x4d8] sm:$0xff]
    %v2022 = vld [vmem:[#allocation5 + $0x4e0] sm:$0xff]
    %v2023 = vld [vmem:[#allocation5 + $0x4e8] sm:$0xff]
    %v2024 = vld [vmem:[#allocation5 + $0x4f0] sm:$0xff]
    %v2025 = vld [vmem:[#allocation5 + $0x4f8] sm:$0xff]
    %v2026 = vld [vmem:[#allocation5 + $0x500] sm:$0xff]
    %v2027 = vld [vmem:[#allocation5 + $0x508] sm:$0xff]
    %v2028 = vld [vmem:[#allocation5 + $0x510] sm:$0xff]
    %v2029 = vld [vmem:[#allocation5 + $0x518] sm:$0xff]
    %v2030 = vld [vmem:[#allocation5 + $0x520] sm:$0xff]
    %v2031 = vld [vmem:[#allocation5 + $0x528] sm:$0xff]
    %v2032 = vld [vmem:[#allocation5 + $0x530] sm:$0xff]
    %v2033 = vld [vmem:[#allocation5 + $0x538] sm:$0xff]
    %v2034 = vld [vmem:[#allocation5 + $0x540] sm:$0xff]
    %v2035 = vld [vmem:[#allocation5 + $0x548] sm:$0xff]
    %v2036 = vld [vmem:[#allocation5 + $0x550] sm:$0xff]
    %v2037 = vld [vmem:[#allocation5 + $0x558] sm:$0xff]
    %v2038 = vld [vmem:[#allocation5 + $0x560] sm:$0xff]
    %v2039 = vld [vmem:[#allocation5 + $0x568] sm:$0xff]
    %v2040 = vld [vmem:[#allocation5 + $0x570] sm:$0xff]
    %v2041 = vld [vmem:[#allocation5 + $0x578] sm:$0xff]
    %v2042 = vld [vmem:[#allocation5 + $0x580] sm:$0xff]
    %v2043 = vld [vmem:[#allocation5 + $0x588] sm:$0xff]
    %v2044 = vld [vmem:[#allocation5 + $0x590] sm:$0xff]
    %v2045 = vld [vmem:[#allocation5 + $0x598] sm:$0xff]
    %v2046 = vld [vmem:[#allocation5 + $0x5a0] sm:$0xff]
    %v2047 = vld [vmem:[#allocation5 + $0x5a8] sm:$0xff]
    %v2048 = vld [vmem:[#allocation5 + $0x5b0] sm:$0xff]
    %v2049 = vld [vmem:[#allocation5 + $0x5b8] sm:$0xff]
    %v2050 = vld [vmem:[#allocation5 + $0x5c0] sm:$0xff]
    %v2051 = vld [vmem:[#allocation5 + $0x5c8] sm:$0xff]
    %v2052 = vld [vmem:[#allocation5 + $0x5d0] sm:$0xff]
    %v2053 = vld [vmem:[#allocation5 + $0x5d8] sm:$0xff]
    %v2054 = vld [vmem:[#allocation5 + $0x5e0] sm:$0xff]
    %v2055 = vld [vmem:[#allocation5 + $0x5e8] sm:$0xff]
    %v2056 = vld [vmem:[#allocation5 + $0x5f0] sm:$0xff]
    %v2057 = vld [vmem:[#allocation5 + $0x5f8] sm:$0xff]
    %v2058 = vld [vmem:[#allocation5 + $0x600] sm:$0xff]
    %v2059 = vld [vmem:[#allocation5 + $0x608] sm:$0xff]
    %v2060 = vld [vmem:[#allocation5 + $0x610] sm:$0xff]
    %v2061 = vld [vmem:[#allocation5 + $0x618] sm:$0xff]
    %v2062 = vld [vmem:[#allocation5 + $0x620] sm:$0xff]
    %v2063 = vld [vmem:[#allocation5 + $0x628] sm:$0xff]
    %v2064 = vld [vmem:[#allocation5 + $0x630] sm:$0xff]
    %v2065 = vld [vmem:[#allocation5 + $0x638] sm:$0xff]
    %v2066 = vld [vmem:[#allocation5 + $0x640] sm:$0xff]
    %v2067 = vld [vmem:[#allocation5 + $0x648] sm:$0xff]
    %v2068 = vld [vmem:[#allocation5 + $0x650] sm:$0xff]
    %v2069 = vld [vmem:[#allocation5 + $0x658] sm:$0xff]
    %v2070 = vld [vmem:[#allocation5 + $0x660] sm:$0xff]
    %v2071 = vld [vmem:[#allocation5 + $0x668] sm:$0xff]
    %v2072 = vld [vmem:[#allocation5 + $0x670] sm:$0xff]
    %v2073 = vld [vmem:[#allocation5 + $0x678] sm:$0xff]
    %v2074 = vld [vmem:[#allocation5 + $0x680] sm:$0xff]
    %v2075 = vld [vmem:[#allocation5 + $0x688] sm:$0xff]
    %v2076 = vld [vmem:[#allocation5 + $0x690] sm:$0xff]
    %v2077 = vld [vmem:[#allocation5 + $0x698] sm:$0xff]
    %v2078 = vld [vmem:[#allocation5 + $0x6a0] sm:$0xff]
    %v2079 = vld [vmem:[#allocation5 + $0x6a8] sm:$0xff]
    %v2080 = vld [vmem:[#allocation5 + $0x6b0] sm:$0xff]
    %v2081 = vld [vmem:[#allocation5 + $0x6b8] sm:$0xff]
    %v2082 = vld [vmem:[#allocation5 + $0x6c0] sm:$0xff]
    %v2083 = vld [vmem:[#allocation5 + $0x6c8] sm:$0xff]
    %v2084 = vld [vmem:[#allocation5 + $0x6d0] sm:$0xff]
    %v2085 = vld [vmem:[#allocation5 + $0x6d8] sm:$0xff]
    %v2086 = vld [vmem:[#allocation5 + $0x6e0] sm:$0xff]
    %v2087 = vld [vmem:[#allocation5 + $0x6e8] sm:$0xff]
    %v2088 = vld [vmem:[#allocation5 + $0x6f0] sm:$0xff]
    %v2089 = vld [vmem:[#allocation5 + $0x6f8] sm:$0xff]
    %v2090 = vld [vmem:[#allocation5 + $0x700] sm:$0xff]
    %v2091 = vld [vmem:[#allocation5 + $0x708] sm:$0xff]
    %v2092 = vld [vmem:[#allocation5 + $0x710] sm:$0xff]
    %v2093 = vld [vmem:[#allocation5 + $0x718] sm:$0xff]
    %v2094 = vld [vmem:[#allocation5 + $0x720] sm:$0xff]
    %v2095 = vld [vmem:[#allocation5 + $0x728] sm:$0xff]
    %v2096 = vld [vmem:[#allocation5 + $0x730] sm:$0xff]
    %v2097 = vld [vmem:[#allocation5 + $0x738] sm:$0xff]
    %v2098 = vld [vmem:[#allocation5 + $0x740] sm:$0xff]
    %v2099 = vld [vmem:[#allocation5 + $0x748] sm:$0xff]
    %v2100 = vld [vmem:[#allocation5 + $0x750] sm:$0xff]
    %v2101 = vld [vmem:[#allocation5 + $0x758] sm:$0xff]
    %v2102 = vld [vmem:[#allocation5 + $0x760] sm:$0xff]
    %v2103 = vld [vmem:[#allocation5 + $0x768] sm:$0xff]
    %v2104 = vld [vmem:[#allocation5 + $0x770] sm:$0xff]
    %v2105 = vld [vmem:[#allocation5 + $0x778] sm:$0xff]
    %v2106 = vld [vmem:[#allocation5 + $0x780] sm:$0xff]
    %v2107 = vld [vmem:[#allocation5 + $0x788] sm:$0xff]
    %v2108 = vld [vmem:[#allocation5 + $0x790] sm:$0xff]
    %v2109 = vld [vmem:[#allocation5 + $0x798] sm:$0xff]
    %v2110 = vld [vmem:[#allocation5 + $0x7a0] sm:$0xff]
    %v2111 = vld [vmem:[#allocation5 + $0x7a8] sm:$0xff]
    %v2112 = vld [vmem:[#allocation5 + $0x7b0] sm:$0xff]
    %v2113 = vld [vmem:[#allocation5 + $0x7b8] sm:$0xff]
    %v2114 = vld [vmem:[#allocation5 + $0x7c0] sm:$0xff]
    %v2115 = vld [vmem:[#allocation5 + $0x7c8] sm:$0xff]
    %v2116 = vld [vmem:[#allocation5 + $0x7d0] sm:$0xff]
    %v2117 = vld [vmem:[#allocation5 + $0x7d8] sm:$0xff]
    %v2118 = vld [vmem:[#allocation5 + $0x7e0] sm:$0xff]
    %v2119 = vld [vmem:[#allocation5 + $0x7e8] sm:$0xff]
    %v2120 = vld [vmem:[#allocation5 + $0x7f0] sm:$0xff]
    %v2121 = vld [vmem:[#allocation5 + $0x7f8] sm:$0xff]
    %v2122 = vld [vmem:[%s8] sm:$0xf]
    %v2124 = vlaneseq
    %v2125 = vshrl.u32 %v2124, 7
    %v2126 = vsub.s32 0, %v2125
    %v2127 = vrot.slane %v2122, %v2126
    %v2128 = vlaneseq
    %v2129 = vshrl.u32 %v2128, 7
    %v2130 = vsub.s32 1, %v2129
    %v2131 = vrot.slane %v2122, %v2130
    %v2132 = vlaneseq
    %v2133 = vshrl.u32 %v2132, 7
    %v2134 = vsub.s32 2, %v2133
    %v2135 = vrot.slane %v2122, %v2134
    %v2136 = vlaneseq
    %v2137 = vshrl.u32 %v2136, 7
    %v2138 = vsub.s32 3, %v2137
    %v2139 = vrot.slane %v2122, %v2138
    %v2160 = vunpack.c.l.b16 %v1850
    %v2161 = vunpack.c.l.b16 %v1851
    %v2162 = vunpack.c.l.b16 %v1852
    %v2163 = vunpack.c.l.b16 %v1853
    %v2164 = vunpack.c.l.b16 %v1854
    %v2165 = vunpack.c.l.b16 %v1855
    %v2166 = vunpack.c.l.b16 %v1856
    %v2167 = vunpack.c.l.b16 %v1857
    %v2168 = vunpack.c.l.b16 %v1858
    %v2169 = vunpack.c.l.b16 %v1859
    %v2170 = vunpack.c.l.b16 %v1860
    %v2171 = vunpack.c.l.b16 %v1861
    %v2172 = vunpack.c.l.b16 %v1862
    %v2173 = vunpack.c.l.b16 %v1863
    %v2174 = vunpack.c.l.b16 %v1864
    %v2175 = vunpack.c.l.b16 %v1865
    %vm2176 = vcmask 1041409
    %v2177 = vsel %vm2176, %v2168, %v2160
    %v2178 = vsel %vm2176, %v2169, %v2161
    %v2179 = vsel %vm2176, %v2170, %v2162
    %v2180 = vsel %vm2176, %v2171, %v2163
    %v2181 = vsel %vm2176, %v2172, %v2164
    %v2182 = vsel %vm2176, %v2173, %v2165
    %v2183 = vsel %vm2176, %v2174, %v2166
    %v2184 = vsel %vm2176, %v2175, %v2167
    %v2185 = vpack.c.b16 %v2177, %v2177
    %v2186 = vpack.c.b16 %v2178, %v2178
    %v2187 = vpack.c.b16 %v2179, %v2179
    %v2188 = vpack.c.b16 %v2180, %v2180
    %v2189 = vpack.c.b16 %v2181, %v2181
    %v2190 = vpack.c.b16 %v2182, %v2182
    %v2191 = vpack.c.b16 %v2183, %v2183
    %v2192 = vpack.c.b16 %v2184, %v2184
    %v2457 = vunpack.c.l.b16 %v1866
    %v2458 = vunpack.c.h.b16 %v1866
    %v2459 = vunpack.c.l.b16 %v1867
    %v2460 = vunpack.c.h.b16 %v1867
    %v2461 = vunpack.c.l.b16 %v1868
    %v2462 = vunpack.c.h.b16 %v1868
    %v2463 = vunpack.c.l.b16 %v1869
    %v2464 = vunpack.c.h.b16 %v1869
    %v2465 = vunpack.c.l.b16 %v1870
    %v2466 = vunpack.c.h.b16 %v1870
    %v2467 = vunpack.c.l.b16 %v1871
    %v2468 = vunpack.c.h.b16 %v1871
    %v2469 = vunpack.c.l.b16 %v1872
    %v2470 = vunpack.c.h.b16 %v1872
    %v2471 = vunpack.c.l.b16 %v1873
    %v2472 = vunpack.c.h.b16 %v1873
    %v2473 = vunpack.c.l.b16 %v1874
    %v2474 = vunpack.c.h.b16 %v1874
    %v2475 = vunpack.c.l.b16 %v1875
    %v2476 = vunpack.c.h.b16 %v1875
    %v2477 = vunpack.c.l.b16 %v1876
    %v2478 = vunpack.c.h.b16 %v1876
    %v2479 = vunpack.c.l.b16 %v1877
    %v2480 = vunpack.c.h.b16 %v1877
    %v2481 = vunpack.c.l.b16 %v1878
    %v2482 = vunpack.c.h.b16 %v1878
    %v2483 = vunpack.c.l.b16 %v1879
    %v2484 = vunpack.c.h.b16 %v1879
    %v2485 = vunpack.c.l.b16 %v1880
    %v2486 = vunpack.c.h.b16 %v1880
    %v2487 = vunpack.c.l.b16 %v1881
    %v2488 = vunpack.c.h.b16 %v1881
    %v2489 = vunpack.c.l.b16 %v1882
    %v2490 = vunpack.c.h.b16 %v1882
    %v2491 = vunpack.c.l.b16 %v1883
    %v2492 = vunpack.c.h.b16 %v1883
    %v2493 = vunpack.c.l.b16 %v1884
    %v2494 = vunpack.c.h.b16 %v1884
    %v2495 = vunpack.c.l.b16 %v1885
    %v2496 = vunpack.c.h.b16 %v1885
    %v2497 = vunpack.c.l.b16 %v1886
    %v2498 = vunpack.c.h.b16 %v1886
    %v2499 = vunpack.c.l.b16 %v1887
    %v2500 = vunpack.c.h.b16 %v1887
    %v2501 = vunpack.c.l.b16 %v1888
    %v2502 = vunpack.c.h.b16 %v1888
    %v2503 = vunpack.c.l.b16 %v1889
    %v2504 = vunpack.c.h.b16 %v1889
    %v2505 = vunpack.c.l.b16 %v1890
    %v2506 = vunpack.c.h.b16 %v1890
    %v2507 = vunpack.c.l.b16 %v1891
    %v2508 = vunpack.c.h.b16 %v1891
    %v2509 = vunpack.c.l.b16 %v1892
    %v2510 = vunpack.c.h.b16 %v1892
    %v2511 = vunpack.c.l.b16 %v1893
    %v2512 = vunpack.c.h.b16 %v1893
    %v2513 = vunpack.c.l.b16 %v1894
    %v2514 = vunpack.c.h.b16 %v1894
    %v2515 = vunpack.c.l.b16 %v1895
    %v2516 = vunpack.c.h.b16 %v1895
    %v2517 = vunpack.c.l.b16 %v1896
    %v2518 = vunpack.c.h.b16 %v1896
    %v2519 = vunpack.c.l.b16 %v1897
    %v2520 = vunpack.c.h.b16 %v1897
    %v2521 = vunpack.c.l.b16 %v1898
    %v2522 = vunpack.c.h.b16 %v1898
    %v2523 = vunpack.c.l.b16 %v1899
    %v2524 = vunpack.c.h.b16 %v1899
    %v2525 = vunpack.c.l.b16 %v1900
    %v2526 = vunpack.c.h.b16 %v1900
    %v2527 = vunpack.c.l.b16 %v1901
    %v2528 = vunpack.c.h.b16 %v1901
    %v2529 = vunpack.c.l.b16 %v1902
    %v2530 = vunpack.c.h.b16 %v1902
    %v2531 = vunpack.c.l.b16 %v1903
    %v2532 = vunpack.c.h.b16 %v1903
    %v2533 = vunpack.c.l.b16 %v1904
    %v2534 = vunpack.c.h.b16 %v1904
    %v2535 = vunpack.c.l.b16 %v1905
    %v2536 = vunpack.c.h.b16 %v1905
    %v2537 = vunpack.c.l.b16 %v1906
    %v2538 = vunpack.c.h.b16 %v1906
    %v2539 = vunpack.c.l.b16 %v1907
    %v2540 = vunpack.c.h.b16 %v1907
    %v2541 = vunpack.c.l.b16 %v1908
    %v2542 = vunpack.c.h.b16 %v1908
    %v2543 = vunpack.c.l.b16 %v1909
    %v2544 = vunpack.c.h.b16 %v1909
    %v2545 = vunpack.c.l.b16 %v1910
    %v2546 = vunpack.c.h.b16 %v1910
    %v2547 = vunpack.c.l.b16 %v1911
    %v2548 = vunpack.c.h.b16 %v1911
    %v2549 = vunpack.c.l.b16 %v1912
    %v2550 = vunpack.c.h.b16 %v1912
    %v2551 = vunpack.c.l.b16 %v1913
    %v2552 = vunpack.c.h.b16 %v1913
    %v2553 = vunpack.c.l.b16 %v1914
    %v2554 = vunpack.c.h.b16 %v1914
    %v2555 = vunpack.c.l.b16 %v1915
    %v2556 = vunpack.c.h.b16 %v1915
    %v2557 = vunpack.c.l.b16 %v1916
    %v2558 = vunpack.c.h.b16 %v1916
    %v2559 = vunpack.c.l.b16 %v1917
    %v2560 = vunpack.c.h.b16 %v1917
    %v2561 = vunpack.c.l.b16 %v1918
    %v2562 = vunpack.c.h.b16 %v1918
    %v2563 = vunpack.c.l.b16 %v1919
    %v2564 = vunpack.c.h.b16 %v1919
    %v2565 = vunpack.c.l.b16 %v1920
    %v2566 = vunpack.c.h.b16 %v1920
    %v2567 = vunpack.c.l.b16 %v1921
    %v2568 = vunpack.c.h.b16 %v1921
    %v2569 = vunpack.c.l.b16 %v1922
    %v2570 = vunpack.c.h.b16 %v1922
    %v2571 = vunpack.c.l.b16 %v1923
    %v2572 = vunpack.c.h.b16 %v1923
    %v2573 = vunpack.c.l.b16 %v1924
    %v2574 = vunpack.c.h.b16 %v1924
    %v2575 = vunpack.c.l.b16 %v1925
    %v2576 = vunpack.c.h.b16 %v1925
    %v2577 = vunpack.c.l.b16 %v1926
    %v2578 = vunpack.c.h.b16 %v1926
    %v2579 = vunpack.c.l.b16 %v1927
    %v2580 = vunpack.c.h.b16 %v1927
    %v2581 = vunpack.c.l.b16 %v1928
    %v2582 = vunpack.c.h.b16 %v1928
    %v2583 = vunpack.c.l.b16 %v1929
    %v2584 = vunpack.c.h.b16 %v1929
    %v2585 = vunpack.c.l.b16 %v1930
    %v2586 = vunpack.c.h.b16 %v1930
    %v2587 = vunpack.c.l.b16 %v1931
    %v2588 = vunpack.c.h.b16 %v1931
    %v2589 = vunpack.c.l.b16 %v1932
    %v2590 = vunpack.c.h.b16 %v1932
    %v2591 = vunpack.c.l.b16 %v1933
    %v2592 = vunpack.c.h.b16 %v1933
    %v2593 = vunpack.c.l.b16 %v1934
    %v2594 = vunpack.c.h.b16 %v1934
    %v2595 = vunpack.c.l.b16 %v1935
    %v2596 = vunpack.c.h.b16 %v1935
    %v2597 = vunpack.c.l.b16 %v1936
    %v2598 = vunpack.c.h.b16 %v1936
    %v2599 = vunpack.c.l.b16 %v1937
    %v2600 = vunpack.c.h.b16 %v1937
    %v2601 = vunpack.c.l.b16 %v1938
    %v2602 = vunpack.c.h.b16 %v1938
    %v2603 = vunpack.c.l.b16 %v1939
    %v2604 = vunpack.c.h.b16 %v1939
    %v2605 = vunpack.c.l.b16 %v1940
    %v2606 = vunpack.c.h.b16 %v1940
    %v2607 = vunpack.c.l.b16 %v1941
    %v2608 = vunpack.c.h.b16 %v1941
    %v2609 = vunpack.c.l.b16 %v1942
    %v2610 = vunpack.c.h.b16 %v1942
    %v2611 = vunpack.c.l.b16 %v1943
    %v2612 = vunpack.c.h.b16 %v1943
    %v2613 = vunpack.c.l.b16 %v1944
    %v2614 = vunpack.c.h.b16 %v1944
    %v2615 = vunpack.c.l.b16 %v1945
    %v2616 = vunpack.c.h.b16 %v1945
    %v2617 = vunpack.c.l.b16 %v1946
    %v2618 = vunpack.c.h.b16 %v1946
    %v2619 = vunpack.c.l.b16 %v1947
    %v2620 = vunpack.c.h.b16 %v1947
    %v2621 = vunpack.c.l.b16 %v1948
    %v2622 = vunpack.c.h.b16 %v1948
    %v2623 = vunpack.c.l.b16 %v1949
    %v2624 = vunpack.c.h.b16 %v1949
    %v2625 = vunpack.c.l.b16 %v1950
    %v2626 = vunpack.c.h.b16 %v1950
    %v2627 = vunpack.c.l.b16 %v1951
    %v2628 = vunpack.c.h.b16 %v1951
    %v2629 = vunpack.c.l.b16 %v1952
    %v2630 = vunpack.c.h.b16 %v1952
    %v2631 = vunpack.c.l.b16 %v1953
    %v2632 = vunpack.c.h.b16 %v1953
    %v2633 = vunpack.c.l.b16 %v1954
    %v2634 = vunpack.c.h.b16 %v1954
    %v2635 = vunpack.c.l.b16 %v1955
    %v2636 = vunpack.c.h.b16 %v1955
    %v2637 = vunpack.c.l.b16 %v1956
    %v2638 = vunpack.c.h.b16 %v1956
    %v2639 = vunpack.c.l.b16 %v1957
    %v2640 = vunpack.c.h.b16 %v1957
    %v2641 = vunpack.c.l.b16 %v1958
    %v2642 = vunpack.c.h.b16 %v1958
    %v2643 = vunpack.c.l.b16 %v1959
    %v2644 = vunpack.c.h.b16 %v1959
    %v2645 = vunpack.c.l.b16 %v1960
    %v2646 = vunpack.c.h.b16 %v1960
    %v2647 = vunpack.c.l.b16 %v1961
    %v2648 = vunpack.c.h.b16 %v1961
    %v2649 = vunpack.c.l.b16 %v1962
    %v2650 = vunpack.c.h.b16 %v1962
    %v2651 = vunpack.c.l.b16 %v1963
    %v2652 = vunpack.c.h.b16 %v1963
    %v2653 = vunpack.c.l.b16 %v1964
    %v2654 = vunpack.c.h.b16 %v1964
    %v2655 = vunpack.c.l.b16 %v1965
    %v2656 = vunpack.c.h.b16 %v1965
    %v2657 = vunpack.c.l.b16 %v1966
    %v2658 = vunpack.c.h.b16 %v1966
    %v2659 = vunpack.c.l.b16 %v1967
    %v2660 = vunpack.c.h.b16 %v1967
    %v2661 = vunpack.c.l.b16 %v1968
    %v2662 = vunpack.c.h.b16 %v1968
    %v2663 = vunpack.c.l.b16 %v1969
    %v2664 = vunpack.c.h.b16 %v1969
    %v2665 = vunpack.c.l.b16 %v1970
    %v2666 = vunpack.c.h.b16 %v1970
    %v2667 = vunpack.c.l.b16 %v1971
    %v2668 = vunpack.c.h.b16 %v1971
    %v2669 = vunpack.c.l.b16 %v1972
    %v2670 = vunpack.c.h.b16 %v1972
    %v2671 = vunpack.c.l.b16 %v1973
    %v2672 = vunpack.c.h.b16 %v1973
    %v2673 = vunpack.c.l.b16 %v1974
    %v2674 = vunpack.c.h.b16 %v1974
    %v2675 = vunpack.c.l.b16 %v1975
    %v2676 = vunpack.c.h.b16 %v1975
    %v2677 = vunpack.c.l.b16 %v1976
    %v2678 = vunpack.c.h.b16 %v1976
    %v2679 = vunpack.c.l.b16 %v1977
    %v2680 = vunpack.c.h.b16 %v1977
    %v2681 = vunpack.c.l.b16 %v1978
    %v2682 = vunpack.c.h.b16 %v1978
    %v2683 = vunpack.c.l.b16 %v1979
    %v2684 = vunpack.c.h.b16 %v1979
    %v2685 = vunpack.c.l.b16 %v1980
    %v2686 = vunpack.c.h.b16 %v1980
    %v2687 = vunpack.c.l.b16 %v1981
    %v2688 = vunpack.c.h.b16 %v1981
    %v2689 = vunpack.c.l.b16 %v1982
    %v2690 = vunpack.c.h.b16 %v1982
    %v2691 = vunpack.c.l.b16 %v1983
    %v2692 = vunpack.c.h.b16 %v1983
    %v2693 = vunpack.c.l.b16 %v1984
    %v2694 = vunpack.c.h.b16 %v1984
    %v2695 = vunpack.c.l.b16 %v1985
    %v2696 = vunpack.c.h.b16 %v1985
    %v2697 = vunpack.c.l.b16 %v1986
    %v2698 = vunpack.c.h.b16 %v1986
    %v2699 = vunpack.c.l.b16 %v1987
    %v2700 = vunpack.c.h.b16 %v1987
    %v2701 = vunpack.c.l.b16 %v1988
    %v2702 = vunpack.c.h.b16 %v1988
    %v2703 = vunpack.c.l.b16 %v1989
    %v2704 = vunpack.c.h.b16 %v1989
    %v2705 = vunpack.c.l.b16 %v1990
    %v2706 = vunpack.c.h.b16 %v1990
    %v2707 = vunpack.c.l.b16 %v1991
    %v2708 = vunpack.c.h.b16 %v1991
    %v2709 = vunpack.c.l.b16 %v1992
    %v2710 = vunpack.c.h.b16 %v1992
    %v2711 = vunpack.c.l.b16 %v1993
    %v2712 = vunpack.c.h.b16 %v1993
    %v2713 = vunpack.c.l.b16 %v1994
    %v2714 = vunpack.c.h.b16 %v1994
    %v2715 = vunpack.c.l.b16 %v1995
    %v2716 = vunpack.c.h.b16 %v1995
    %v2717 = vunpack.c.l.b16 %v1996
    %v2718 = vunpack.c.h.b16 %v1996
    %v2719 = vunpack.c.l.b16 %v1997
    %v2720 = vunpack.c.h.b16 %v1997
    %v2721 = vunpack.c.l.b16 %v1998
    %v2722 = vunpack.c.h.b16 %v1998
    %v2723 = vunpack.c.l.b16 %v1999
    %v2724 = vunpack.c.h.b16 %v1999
    %v2725 = vunpack.c.l.b16 %v2000
    %v2726 = vunpack.c.h.b16 %v2000
    %v2727 = vunpack.c.l.b16 %v2001
    %v2728 = vunpack.c.h.b16 %v2001
    %v2729 = vunpack.c.l.b16 %v2002
    %v2730 = vunpack.c.h.b16 %v2002
    %v2731 = vunpack.c.l.b16 %v2003
    %v2732 = vunpack.c.h.b16 %v2003
    %v2733 = vunpack.c.l.b16 %v2004
    %v2734 = vunpack.c.h.b16 %v2004
    %v2735 = vunpack.c.l.b16 %v2005
    %v2736 = vunpack.c.h.b16 %v2005
    %v2737 = vunpack.c.l.b16 %v2006
    %v2738 = vunpack.c.h.b16 %v2006
    %v2739 = vunpack.c.l.b16 %v2007
    %v2740 = vunpack.c.h.b16 %v2007
    %v2741 = vunpack.c.l.b16 %v2008
    %v2742 = vunpack.c.h.b16 %v2008
    %v2743 = vunpack.c.l.b16 %v2009
    %v2744 = vunpack.c.h.b16 %v2009
    %v2745 = vunpack.c.l.b16 %v2010
    %v2746 = vunpack.c.h.b16 %v2010
    %v2747 = vunpack.c.l.b16 %v2011
    %v2748 = vunpack.c.h.b16 %v2011
    %v2749 = vunpack.c.l.b16 %v2012
    %v2750 = vunpack.c.h.b16 %v2012
    %v2751 = vunpack.c.l.b16 %v2013
    %v2752 = vunpack.c.h.b16 %v2013
    %v2753 = vunpack.c.l.b16 %v2014
    %v2754 = vunpack.c.h.b16 %v2014
    %v2755 = vunpack.c.l.b16 %v2015
    %v2756 = vunpack.c.h.b16 %v2015
    %v2757 = vunpack.c.l.b16 %v2016
    %v2758 = vunpack.c.h.b16 %v2016
    %v2759 = vunpack.c.l.b16 %v2017
    %v2760 = vunpack.c.h.b16 %v2017
    %v2761 = vunpack.c.l.b16 %v2018
    %v2762 = vunpack.c.h.b16 %v2018
    %v2763 = vunpack.c.l.b16 %v2019
    %v2764 = vunpack.c.h.b16 %v2019
    %v2765 = vunpack.c.l.b16 %v2020
    %v2766 = vunpack.c.h.b16 %v2020
    %v2767 = vunpack.c.l.b16 %v2021
    %v2768 = vunpack.c.h.b16 %v2021
    %v2769 = vunpack.c.l.b16 %v2022
    %v2770 = vunpack.c.h.b16 %v2022
    %v2771 = vunpack.c.l.b16 %v2023
    %v2772 = vunpack.c.h.b16 %v2023
    %v2773 = vunpack.c.l.b16 %v2024
    %v2774 = vunpack.c.h.b16 %v2024
    %v2775 = vunpack.c.l.b16 %v2025
    %v2776 = vunpack.c.h.b16 %v2025
    %v2777 = vunpack.c.l.b16 %v2026
    %v2778 = vunpack.c.h.b16 %v2026
    %v2779 = vunpack.c.l.b16 %v2027
    %v2780 = vunpack.c.h.b16 %v2027
    %v2781 = vunpack.c.l.b16 %v2028
    %v2782 = vunpack.c.h.b16 %v2028
    %v2783 = vunpack.c.l.b16 %v2029
    %v2784 = vunpack.c.h.b16 %v2029
    %v2785 = vunpack.c.l.b16 %v2030
    %v2786 = vunpack.c.h.b16 %v2030
    %v2787 = vunpack.c.l.b16 %v2031
    %v2788 = vunpack.c.h.b16 %v2031
    %v2789 = vunpack.c.l.b16 %v2032
    %v2790 = vunpack.c.h.b16 %v2032
    %v2791 = vunpack.c.l.b16 %v2033
    %v2792 = vunpack.c.h.b16 %v2033
    %v2793 = vunpack.c.l.b16 %v2034
    %v2794 = vunpack.c.h.b16 %v2034
    %v2795 = vunpack.c.l.b16 %v2035
    %v2796 = vunpack.c.h.b16 %v2035
    %v2797 = vunpack.c.l.b16 %v2036
    %v2798 = vunpack.c.h.b16 %v2036
    %v2799 = vunpack.c.l.b16 %v2037
    %v2800 = vunpack.c.h.b16 %v2037
    %v2801 = vunpack.c.l.b16 %v2038
    %v2802 = vunpack.c.h.b16 %v2038
    %v2803 = vunpack.c.l.b16 %v2039
    %v2804 = vunpack.c.h.b16 %v2039
    %v2805 = vunpack.c.l.b16 %v2040
    %v2806 = vunpack.c.h.b16 %v2040
    %v2807 = vunpack.c.l.b16 %v2041
    %v2808 = vunpack.c.h.b16 %v2041
    %v2809 = vunpack.c.l.b16 %v2042
    %v2810 = vunpack.c.h.b16 %v2042
    %v2811 = vunpack.c.l.b16 %v2043
    %v2812 = vunpack.c.h.b16 %v2043
    %v2813 = vunpack.c.l.b16 %v2044
    %v2814 = vunpack.c.h.b16 %v2044
    %v2815 = vunpack.c.l.b16 %v2045
    %v2816 = vunpack.c.h.b16 %v2045
    %v2817 = vunpack.c.l.b16 %v2046
    %v2818 = vunpack.c.h.b16 %v2046
    %v2819 = vunpack.c.l.b16 %v2047
    %v2820 = vunpack.c.h.b16 %v2047
    %v2821 = vunpack.c.l.b16 %v2048
    %v2822 = vunpack.c.h.b16 %v2048
    %v2823 = vunpack.c.l.b16 %v2049
    %v2824 = vunpack.c.h.b16 %v2049
    %v2825 = vunpack.c.l.b16 %v2050
    %v2826 = vunpack.c.h.b16 %v2050
    %v2827 = vunpack.c.l.b16 %v2051
    %v2828 = vunpack.c.h.b16 %v2051
    %v2829 = vunpack.c.l.b16 %v2052
    %v2830 = vunpack.c.h.b16 %v2052
    %v2831 = vunpack.c.l.b16 %v2053
    %v2832 = vunpack.c.h.b16 %v2053
    %v2833 = vunpack.c.l.b16 %v2054
    %v2834 = vunpack.c.h.b16 %v2054
    %v2835 = vunpack.c.l.b16 %v2055
    %v2836 = vunpack.c.h.b16 %v2055
    %v2837 = vunpack.c.l.b16 %v2056
    %v2838 = vunpack.c.h.b16 %v2056
    %v2839 = vunpack.c.l.b16 %v2057
    %v2840 = vunpack.c.h.b16 %v2057
    %v2841 = vunpack.c.l.b16 %v2058
    %v2842 = vunpack.c.h.b16 %v2058
    %v2843 = vunpack.c.l.b16 %v2059
    %v2844 = vunpack.c.h.b16 %v2059
    %v2845 = vunpack.c.l.b16 %v2060
    %v2846 = vunpack.c.h.b16 %v2060
    %v2847 = vunpack.c.l.b16 %v2061
    %v2848 = vunpack.c.h.b16 %v2061
    %v2849 = vunpack.c.l.b16 %v2062
    %v2850 = vunpack.c.h.b16 %v2062
    %v2851 = vunpack.c.l.b16 %v2063
    %v2852 = vunpack.c.h.b16 %v2063
    %v2853 = vunpack.c.l.b16 %v2064
    %v2854 = vunpack.c.h.b16 %v2064
    %v2855 = vunpack.c.l.b16 %v2065
    %v2856 = vunpack.c.h.b16 %v2065
    %v2857 = vunpack.c.l.b16 %v2066
    %v2858 = vunpack.c.h.b16 %v2066
    %v2859 = vunpack.c.l.b16 %v2067
    %v2860 = vunpack.c.h.b16 %v2067
    %v2861 = vunpack.c.l.b16 %v2068
    %v2862 = vunpack.c.h.b16 %v2068
    %v2863 = vunpack.c.l.b16 %v2069
    %v2864 = vunpack.c.h.b16 %v2069
    %v2865 = vunpack.c.l.b16 %v2070
    %v2866 = vunpack.c.h.b16 %v2070
    %v2867 = vunpack.c.l.b16 %v2071
    %v2868 = vunpack.c.h.b16 %v2071
    %v2869 = vunpack.c.l.b16 %v2072
    %v2870 = vunpack.c.h.b16 %v2072
    %v2871 = vunpack.c.l.b16 %v2073
    %v2872 = vunpack.c.h.b16 %v2073
    %v2873 = vunpack.c.l.b16 %v2074
    %v2874 = vunpack.c.h.b16 %v2074
    %v2875 = vunpack.c.l.b16 %v2075
    %v2876 = vunpack.c.h.b16 %v2075
    %v2877 = vunpack.c.l.b16 %v2076
    %v2878 = vunpack.c.h.b16 %v2076
    %v2879 = vunpack.c.l.b16 %v2077
    %v2880 = vunpack.c.h.b16 %v2077
    %v2881 = vunpack.c.l.b16 %v2078
    %v2882 = vunpack.c.h.b16 %v2078
    %v2883 = vunpack.c.l.b16 %v2079
    %v2884 = vunpack.c.h.b16 %v2079
    %v2885 = vunpack.c.l.b16 %v2080
    %v2886 = vunpack.c.h.b16 %v2080
    %v2887 = vunpack.c.l.b16 %v2081
    %v2888 = vunpack.c.h.b16 %v2081
    %v2889 = vunpack.c.l.b16 %v2082
    %v2890 = vunpack.c.h.b16 %v2082
    %v2891 = vunpack.c.l.b16 %v2083
    %v2892 = vunpack.c.h.b16 %v2083
    %v2893 = vunpack.c.l.b16 %v2084
    %v2894 = vunpack.c.h.b16 %v2084
    %v2895 = vunpack.c.l.b16 %v2085
    %v2896 = vunpack.c.h.b16 %v2085
    %v2897 = vunpack.c.l.b16 %v2086
    %v2898 = vunpack.c.h.b16 %v2086
    %v2899 = vunpack.c.l.b16 %v2087
    %v2900 = vunpack.c.h.b16 %v2087
    %v2901 = vunpack.c.l.b16 %v2088
    %v2902 = vunpack.c.h.b16 %v2088
    %v2903 = vunpack.c.l.b16 %v2089
    %v2904 = vunpack.c.h.b16 %v2089
    %v2905 = vunpack.c.l.b16 %v2090
    %v2906 = vunpack.c.h.b16 %v2090
    %v2907 = vunpack.c.l.b16 %v2091
    %v2908 = vunpack.c.h.b16 %v2091
    %v2909 = vunpack.c.l.b16 %v2092
    %v2910 = vunpack.c.h.b16 %v2092
    %v2911 = vunpack.c.l.b16 %v2093
    %v2912 = vunpack.c.h.b16 %v2093
    %v2913 = vunpack.c.l.b16 %v2094
    %v2914 = vunpack.c.h.b16 %v2094
    %v2915 = vunpack.c.l.b16 %v2095
    %v2916 = vunpack.c.h.b16 %v2095
    %v2917 = vunpack.c.l.b16 %v2096
    %v2918 = vunpack.c.h.b16 %v2096
    %v2919 = vunpack.c.l.b16 %v2097
    %v2920 = vunpack.c.h.b16 %v2097
    %v2921 = vunpack.c.l.b16 %v2098
    %v2922 = vunpack.c.h.b16 %v2098
    %v2923 = vunpack.c.l.b16 %v2099
    %v2924 = vunpack.c.h.b16 %v2099
    %v2925 = vunpack.c.l.b16 %v2100
    %v2926 = vunpack.c.h.b16 %v2100
    %v2927 = vunpack.c.l.b16 %v2101
    %v2928 = vunpack.c.h.b16 %v2101
    %v2929 = vunpack.c.l.b16 %v2102
    %v2930 = vunpack.c.h.b16 %v2102
    %v2931 = vunpack.c.l.b16 %v2103
    %v2932 = vunpack.c.h.b16 %v2103
    %v2933 = vunpack.c.l.b16 %v2104
    %v2934 = vunpack.c.h.b16 %v2104
    %v2935 = vunpack.c.l.b16 %v2105
    %v2936 = vunpack.c.h.b16 %v2105
    %v2937 = vunpack.c.l.b16 %v2106
    %v2938 = vunpack.c.h.b16 %v2106
    %v2939 = vunpack.c.l.b16 %v2107
    %v2940 = vunpack.c.h.b16 %v2107
    %v2941 = vunpack.c.l.b16 %v2108
    %v2942 = vunpack.c.h.b16 %v2108
    %v2943 = vunpack.c.l.b16 %v2109
    %v2944 = vunpack.c.h.b16 %v2109
    %v2945 = vunpack.c.l.b16 %v2110
    %v2946 = vunpack.c.h.b16 %v2110
    %v2947 = vunpack.c.l.b16 %v2111
    %v2948 = vunpack.c.h.b16 %v2111
    %v2949 = vunpack.c.l.b16 %v2112
    %v2950 = vunpack.c.h.b16 %v2112
    %v2951 = vunpack.c.l.b16 %v2113
    %v2952 = vunpack.c.h.b16 %v2113
    %v2953 = vunpack.c.l.b16 %v2114
    %v2954 = vunpack.c.h.b16 %v2114
    %v2955 = vunpack.c.l.b16 %v2115
    %v2956 = vunpack.c.h.b16 %v2115
    %v2957 = vunpack.c.l.b16 %v2116
    %v2958 = vunpack.c.h.b16 %v2116
    %v2959 = vunpack.c.l.b16 %v2117
    %v2960 = vunpack.c.h.b16 %v2117
    %v2961 = vunpack.c.l.b16 %v2118
    %v2962 = vunpack.c.h.b16 %v2118
    %v2963 = vunpack.c.l.b16 %v2119
    %v2964 = vunpack.c.h.b16 %v2119
    %v2965 = vunpack.c.l.b16 %v2120
    %v2966 = vunpack.c.h.b16 %v2120
    %v2967 = vunpack.c.l.b16 %v2121
    %v2968 = vunpack.c.h.b16 %v2121
    %v2969 = vpack.c.b16 %v2461, %v2457
    %v2970 = vpack.c.b16 %v2462, %v2458
    %v2971 = vpack.c.b16 %v2463, %v2459
    %v2972 = vpack.c.b16 %v2464, %v2460
    %v2973 = vpack.c.b16 %v2469, %v2465
    %v2974 = vpack.c.b16 %v2470, %v2466
    %v2975 = vpack.c.b16 %v2471, %v2467
    %v2976 = vpack.c.b16 %v2472, %v2468
    %v2977 = vpack.c.b16 %v2477, %v2473
    %v2978 = vpack.c.b16 %v2478, %v2474
    %v2979 = vpack.c.b16 %v2479, %v2475
    %v2980 = vpack.c.b16 %v2480, %v2476
    %v2981 = vpack.c.b16 %v2485, %v2481
    %v2982 = vpack.c.b16 %v2486, %v2482
    %v2983 = vpack.c.b16 %v2487, %v2483
    %v2984 = vpack.c.b16 %v2488, %v2484
    %v2985 = vpack.c.b16 %v2493, %v2489
    %v2986 = vpack.c.b16 %v2494, %v2490
    %v2987 = vpack.c.b16 %v2495, %v2491
    %v2988 = vpack.c.b16 %v2496, %v2492
    %v2989 = vpack.c.b16 %v2501, %v2497
    %v2990 = vpack.c.b16 %v2502, %v2498
    %v2991 = vpack.c.b16 %v2503, %v2499
    %v2992 = vpack.c.b16 %v2504, %v2500
    %v2993 = vpack.c.b16 %v2509, %v2505
    %v2994 = vpack.c.b16 %v2510, %v2506
    %v2995 = vpack.c.b16 %v2511, %v2507
    %v2996 = vpack.c.b16 %v2512, %v2508
    %v2997 = vpack.c.b16 %v2517, %v2513
    %v2998 = vpack.c.b16 %v2518, %v2514
    %v2999 = vpack.c.b16 %v2519, %v2515
    %v3000 = vpack.c.b16 %v2520, %v2516
    %v3001 = vpack.c.b16 %v2525, %v2521
    %v3002 = vpack.c.b16 %v2526, %v2522
    %v3003 = vpack.c.b16 %v2527, %v2523
    %v3004 = vpack.c.b16 %v2528, %v2524
    %v3005 = vpack.c.b16 %v2533, %v2529
    %v3006 = vpack.c.b16 %v2534, %v2530
    %v3007 = vpack.c.b16 %v2535, %v2531
    %v3008 = vpack.c.b16 %v2536, %v2532
    %v3009 = vpack.c.b16 %v2541, %v2537
    %v3010 = vpack.c.b16 %v2542, %v2538
    %v3011 = vpack.c.b16 %v2543, %v2539
    %v3012 = vpack.c.b16 %v2544, %v2540
    %v3013 = vpack.c.b16 %v2549, %v2545
    %v3014 = vpack.c.b16 %v2550, %v2546
    %v3015 = vpack.c.b16 %v2551, %v2547
    %v3016 = vpack.c.b16 %v2552, %v2548
    %v3017 = vpack.c.b16 %v2557, %v2553
    %v3018 = vpack.c.b16 %v2558, %v2554
    %v3019 = vpack.c.b16 %v2559, %v2555
    %v3020 = vpack.c.b16 %v2560, %v2556
    %v3021 = vpack.c.b16 %v2565, %v2561
    %v3022 = vpack.c.b16 %v2566, %v2562
    %v3023 = vpack.c.b16 %v2567, %v2563
    %v3024 = vpack.c.b16 %v2568, %v2564
    %v3025 = vpack.c.b16 %v2573, %v2569
    %v3026 = vpack.c.b16 %v2574, %v2570
    %v3027 = vpack.c.b16 %v2575, %v2571
    %v3028 = vpack.c.b16 %v2576, %v2572
    %v3029 = vpack.c.b16 %v2581, %v2577
    %v3030 = vpack.c.b16 %v2582, %v2578
    %v3031 = vpack.c.b16 %v2583, %v2579
    %v3032 = vpack.c.b16 %v2584, %v2580
    %v3033 = vpack.c.b16 %v2589, %v2585
    %v3034 = vpack.c.b16 %v2590, %v2586
    %v3035 = vpack.c.b16 %v2591, %v2587
    %v3036 = vpack.c.b16 %v2592, %v2588
    %v3037 = vpack.c.b16 %v2597, %v2593
    %v3038 = vpack.c.b16 %v2598, %v2594
    %v3039 = vpack.c.b16 %v2599, %v2595
    %v3040 = vpack.c.b16 %v2600, %v2596
    %v3041 = vpack.c.b16 %v2605, %v2601
    %v3042 = vpack.c.b16 %v2606, %v2602
    %v3043 = vpack.c.b16 %v2607, %v2603
    %v3044 = vpack.c.b16 %v2608, %v2604
    %v3045 = vpack.c.b16 %v2613, %v2609
    %v3046 = vpack.c.b16 %v2614, %v2610
    %v3047 = vpack.c.b16 %v2615, %v2611
    %v3048 = vpack.c.b16 %v2616, %v2612
    %v3049 = vpack.c.b16 %v2621, %v2617
    %v3050 = vpack.c.b16 %v2622, %v2618
    %v3051 = vpack.c.b16 %v2623, %v2619
    %v3052 = vpack.c.b16 %v2624, %v2620
    %v3053 = vpack.c.b16 %v2629, %v2625
    %v3054 = vpack.c.b16 %v2630, %v2626
    %v3055 = vpack.c.b16 %v2631, %v2627
    %v3056 = vpack.c.b16 %v2632, %v2628
    %v3057 = vpack.c.b16 %v2637, %v2633
    %v3058 = vpack.c.b16 %v2638, %v2634
    %v3059 = vpack.c.b16 %v2639, %v2635
    %v3060 = vpack.c.b16 %v2640, %v2636
    %v3061 = vpack.c.b16 %v2645, %v2641
    %v3062 = vpack.c.b16 %v2646, %v2642
    %v3063 = vpack.c.b16 %v2647, %v2643
    %v3064 = vpack.c.b16 %v2648, %v2644
    %v3065 = vpack.c.b16 %v2653, %v2649
    %v3066 = vpack.c.b16 %v2654, %v2650
    %v3067 = vpack.c.b16 %v2655, %v2651
    %v3068 = vpack.c.b16 %v2656, %v2652
    %v3069 = vpack.c.b16 %v2661, %v2657
    %v3070 = vpack.c.b16 %v2662, %v2658
    %v3071 = vpack.c.b16 %v2663, %v2659
    %v3072 = vpack.c.b16 %v2664, %v2660
    %v3073 = vpack.c.b16 %v2669, %v2665
    %v3074 = vpack.c.b16 %v2670, %v2666
    %v3075 = vpack.c.b16 %v2671, %v2667
    %v3076 = vpack.c.b16 %v2672, %v2668
    %v3077 = vpack.c.b16 %v2677, %v2673
    %v3078 = vpack.c.b16 %v2678, %v2674
    %v3079 = vpack.c.b16 %v2679, %v2675
    %v3080 = vpack.c.b16 %v2680, %v2676
    %v3081 = vpack.c.b16 %v2685, %v2681
    %v3082 = vpack.c.b16 %v2686, %v2682
    %v3083 = vpack.c.b16 %v2687, %v2683
    %v3084 = vpack.c.b16 %v2688, %v2684
    %v3085 = vpack.c.b16 %v2693, %v2689
    %v3086 = vpack.c.b16 %v2694, %v2690
    %v3087 = vpack.c.b16 %v2695, %v2691
    %v3088 = vpack.c.b16 %v2696, %v2692
    %v3089 = vpack.c.b16 %v2701, %v2697
    %v3090 = vpack.c.b16 %v2702, %v2698
    %v3091 = vpack.c.b16 %v2703, %v2699
    %v3092 = vpack.c.b16 %v2704, %v2700
    %v3093 = vpack.c.b16 %v2709, %v2705
    %v3094 = vpack.c.b16 %v2710, %v2706
    %v3095 = vpack.c.b16 %v2711, %v2707
    %v3096 = vpack.c.b16 %v2712, %v2708
    %v3097 = vpack.c.b16 %v2717, %v2713
    %v3098 = vpack.c.b16 %v2718, %v2714
    %v3099 = vpack.c.b16 %v2719, %v2715
    %v3100 = vpack.c.b16 %v2720, %v2716
    %v3101 = vpack.c.b16 %v2725, %v2721
    %v3102 = vpack.c.b16 %v2726, %v2722
    %v3103 = vpack.c.b16 %v2727, %v2723
    %v3104 = vpack.c.b16 %v2728, %v2724
    %v3105 = vpack.c.b16 %v2733, %v2729
    %v3106 = vpack.c.b16 %v2734, %v2730
    %v3107 = vpack.c.b16 %v2735, %v2731
    %v3108 = vpack.c.b16 %v2736, %v2732
    %v3109 = vpack.c.b16 %v2741, %v2737
    %v3110 = vpack.c.b16 %v2742, %v2738
    %v3111 = vpack.c.b16 %v2743, %v2739
    %v3112 = vpack.c.b16 %v2744, %v2740
    %v3113 = vpack.c.b16 %v2749, %v2745
    %v3114 = vpack.c.b16 %v2750, %v2746
    %v3115 = vpack.c.b16 %v2751, %v2747
    %v3116 = vpack.c.b16 %v2752, %v2748
    %v3117 = vpack.c.b16 %v2757, %v2753
    %v3118 = vpack.c.b16 %v2758, %v2754
    %v3119 = vpack.c.b16 %v2759, %v2755
    %v3120 = vpack.c.b16 %v2760, %v2756
    %v3121 = vpack.c.b16 %v2765, %v2761
    %v3122 = vpack.c.b16 %v2766, %v2762
    %v3123 = vpack.c.b16 %v2767, %v2763
    %v3124 = vpack.c.b16 %v2768, %v2764
    %v3125 = vpack.c.b16 %v2773, %v2769
    %v3126 = vpack.c.b16 %v2774, %v2770
    %v3127 = vpack.c.b16 %v2775, %v2771
    %v3128 = vpack.c.b16 %v2776, %v2772
    %v3129 = vpack.c.b16 %v2781, %v2777
    %v3130 = vpack.c.b16 %v2782, %v2778
    %v3131 = vpack.c.b16 %v2783, %v2779
    %v3132 = vpack.c.b16 %v2784, %v2780
    %v3133 = vpack.c.b16 %v2789, %v2785
    %v3134 = vpack.c.b16 %v2790, %v2786
    %v3135 = vpack.c.b16 %v2791, %v2787
    %v3136 = vpack.c.b16 %v2792, %v2788
    %v3137 = vpack.c.b16 %v2797, %v2793
    %v3138 = vpack.c.b16 %v2798, %v2794
    %v3139 = vpack.c.b16 %v2799, %v2795
    %v3140 = vpack.c.b16 %v2800, %v2796
    %v3141 = vpack.c.b16 %v2805, %v2801
    %v3142 = vpack.c.b16 %v2806, %v2802
    %v3143 = vpack.c.b16 %v2807, %v2803
    %v3144 = vpack.c.b16 %v2808, %v2804
    %v3145 = vpack.c.b16 %v2813, %v2809
    %v3146 = vpack.c.b16 %v2814, %v2810
    %v3147 = vpack.c.b16 %v2815, %v2811
    %v3148 = vpack.c.b16 %v2816, %v2812
    %v3149 = vpack.c.b16 %v2821, %v2817
    %v3150 = vpack.c.b16 %v2822, %v2818
    %v3151 = vpack.c.b16 %v2823, %v2819
    %v3152 = vpack.c.b16 %v2824, %v2820
    %v3153 = vpack.c.b16 %v2829, %v2825
    %v3154 = vpack.c.b16 %v2830, %v2826
    %v3155 = vpack.c.b16 %v2831, %v2827
    %v3156 = vpack.c.b16 %v2832, %v2828
    %v3157 = vpack.c.b16 %v2837, %v2833
    %v3158 = vpack.c.b16 %v2838, %v2834
    %v3159 = vpack.c.b16 %v2839, %v2835
    %v3160 = vpack.c.b16 %v2840, %v2836
    %v3161 = vpack.c.b16 %v2845, %v2841
    %v3162 = vpack.c.b16 %v2846, %v2842
    %v3163 = vpack.c.b16 %v2847, %v2843
    %v3164 = vpack.c.b16 %v2848, %v2844
    %v3165 = vpack.c.b16 %v2853, %v2849
    %v3166 = vpack.c.b16 %v2854, %v2850
    %v3167 = vpack.c.b16 %v2855, %v2851
    %v3168 = vpack.c.b16 %v2856, %v2852
    %v3169 = vpack.c.b16 %v2861, %v2857
    %v3170 = vpack.c.b16 %v2862, %v2858
    %v3171 = vpack.c.b16 %v2863, %v2859
    %v3172 = vpack.c.b16 %v2864, %v2860
    %v3173 = vpack.c.b16 %v2869, %v2865
    %v3174 = vpack.c.b16 %v2870, %v2866
    %v3175 = vpack.c.b16 %v2871, %v2867
    %v3176 = vpack.c.b16 %v2872, %v2868
    %v3177 = vpack.c.b16 %v2877, %v2873
    %v3178 = vpack.c.b16 %v2878, %v2874
    %v3179 = vpack.c.b16 %v2879, %v2875
    %v3180 = vpack.c.b16 %v2880, %v2876
    %v3181 = vpack.c.b16 %v2885, %v2881
    %v3182 = vpack.c.b16 %v2886, %v2882
    %v3183 = vpack.c.b16 %v2887, %v2883
    %v3184 = vpack.c.b16 %v2888, %v2884
    %v3185 = vpack.c.b16 %v2893, %v2889
    %v3186 = vpack.c.b16 %v2894, %v2890
    %v3187 = vpack.c.b16 %v2895, %v2891
    %v3188 = vpack.c.b16 %v2896, %v2892
    %v3189 = vpack.c.b16 %v2901, %v2897
    %v3190 = vpack.c.b16 %v2902, %v2898
    %v3191 = vpack.c.b16 %v2903, %v2899
    %v3192 = vpack.c.b16 %v2904, %v2900
    %v3193 = vpack.c.b16 %v2909, %v2905
    %v3194 = vpack.c.b16 %v2910, %v2906
    %v3195 = vpack.c.b16 %v2911, %v2907
    %v3196 = vpack.c.b16 %v2912, %v2908
    %v3197 = vpack.c.b16 %v2917, %v2913
    %v3198 = vpack.c.b16 %v2918, %v2914
    %v3199 = vpack.c.b16 %v2919, %v2915
    %v3200 = vpack.c.b16 %v2920, %v2916
    %v3201 = vpack.c.b16 %v2925, %v2921
    %v3202 = vpack.c.b16 %v2926, %v2922
    %v3203 = vpack.c.b16 %v2927, %v2923
    %v3204 = vpack.c.b16 %v2928, %v2924
    %v3205 = vpack.c.b16 %v2933, %v2929
    %v3206 = vpack.c.b16 %v2934, %v2930
    %v3207 = vpack.c.b16 %v2935, %v2931
    %v3208 = vpack.c.b16 %v2936, %v2932
    %v3209 = vpack.c.b16 %v2941, %v2937
    %v3210 = vpack.c.b16 %v2942, %v2938
    %v3211 = vpack.c.b16 %v2943, %v2939
    %v3212 = vpack.c.b16 %v2944, %v2940
    %v3213 = vpack.c.b16 %v2949, %v2945
    %v3214 = vpack.c.b16 %v2950, %v2946
    %v3215 = vpack.c.b16 %v2951, %v2947
    %v3216 = vpack.c.b16 %v2952, %v2948
    %v3217 = vpack.c.b16 %v2957, %v2953
    %v3218 = vpack.c.b16 %v2958, %v2954
    %v3219 = vpack.c.b16 %v2959, %v2955
    %v3220 = vpack.c.b16 %v2960, %v2956
    %v3221 = vpack.c.b16 %v2965, %v2961
    %v3222 = vpack.c.b16 %v2966, %v2962
    %v3223 = vpack.c.b16 %v2967, %v2963
    %v3224 = vpack.c.b16 %v2968, %v2964
    %3481 = vmatprep.subr.bf16.mxu0 %v2970
    %3482 = vmatpush1.bf16.msra.mxu0 %v2969
    %3483 = vmatprep.subr.bf16.mxu0 %v2974
    %3484 = vmatpush1.bf16.msra.mxu0 %v2973
    %3485 = vmatprep.subr.bf16.mxu0 %v2978
    %3486 = vmatpush1.bf16.msra.mxu0 %v2977
    %3487 = vmatprep.subr.bf16.mxu0 %v2982
    %3488 = vmatpush1.bf16.msra.mxu0 %v2981
    %3489 = vmatprep.subr.bf16.mxu0 %v2986
    %3490 = vmatpush1.bf16.msra.mxu0 %v2985
    %3491 = vmatprep.subr.bf16.mxu0 %v2990
    %3492 = vmatpush1.bf16.msra.mxu0 %v2989
    %3493 = vmatprep.subr.bf16.mxu0 %v2994
    %3494 = vmatpush1.bf16.msra.mxu0 %v2993
    %3495 = vmatprep.subr.bf16.mxu0 %v2998
    %3496 = vmatpush1.bf16.msra.mxu0 %v2997
    %3497 = vmatprep.subr.bf16.mxu0 %v3002
    %3498 = vmatpush1.bf16.msra.mxu0 %v3001
    %3499 = vmatprep.subr.bf16.mxu0 %v3006
    %3500 = vmatpush1.bf16.msra.mxu0 %v3005
    %3501 = vmatprep.subr.bf16.mxu0 %v3010
    %3502 = vmatpush1.bf16.msra.mxu0 %v3009
    %3503 = vmatprep.subr.bf16.mxu0 %v3014
    %3504 = vmatpush1.bf16.msra.mxu0 %v3013
    %3505 = vmatprep.subr.bf16.mxu0 %v3018
    %3506 = vmatpush1.bf16.msra.mxu0 %v3017
    %3507 = vmatprep.subr.bf16.mxu0 %v3022
    %3508 = vmatpush1.bf16.msra.mxu0 %v3021
    %3509 = vmatprep.subr.bf16.mxu0 %v3026
    %3510 = vmatpush1.bf16.msra.mxu0 %v3025
    %3511 = vmatprep.subr.bf16.mxu0 %v3030
    %3512 = vmatpush1.bf16.msra.mxu0 %v3029
    %3513 = vmatprep.mubr.bf16.mxu0 %v2186
    %3514 = vmatmul.mubr.bf16.gmra.mrb[0].mxu0 %v2185
    %v3515 = vpop.f32.mrb[0].mxu0
    %v3516 = vadd.f32 %v2127, %v3515
    %v3517 = vpop.f32.mrb[0].mxu0
    %v3518 = vadd.f32 %v2131, %v3517
    %v3519 = vpop.f32.mrb[0].mxu0
    %v3520 = vpop.f32.mrb[0].mxu0
    %3521 = vdwg.mxu0
    %3522 = vmatprep.subr.bf16.mxu0 %v3034
    %3523 = vmatpush1.bf16.msra.mxu0 %v3033
    %3524 = vmatprep.subr.bf16.mxu0 %v3038
    %3525 = vmatpush1.bf16.msra.mxu0 %v3037
    %3526 = vmatprep.subr.bf16.mxu0 %v3042
    %3527 = vmatpush1.bf16.msra.mxu0 %v3041
    %3528 = vmatprep.subr.bf16.mxu0 %v3046
    %3529 = vmatpush1.bf16.msra.mxu0 %v3045
    %3530 = vmatprep.subr.bf16.mxu0 %v3050
    %3531 = vmatpush1.bf16.msra.mxu0 %v3049
    %3532 = vmatprep.subr.bf16.mxu0 %v3054
    %3533 = vmatpush1.bf16.msra.mxu0 %v3053
    %3534 = vmatprep.subr.bf16.mxu0 %v3058
    %3535 = vmatpush1.bf16.msra.mxu0 %v3057
    %3536 = vmatprep.subr.bf16.mxu0 %v3062
    %3537 = vmatpush1.bf16.msra.mxu0 %v3061
    %3538 = vmatprep.subr.bf16.mxu0 %v3066
    %3539 = vmatpush1.bf16.msra.mxu0 %v3065
    %3540 = vmatprep.subr.bf16.mxu0 %v3070
    %3541 = vmatpush1.bf16.msra.mxu0 %v3069
    %3542 = vmatprep.subr.bf16.mxu0 %v3074
    %3543 = vmatpush1.bf16.msra.mxu0 %v3073
    %3544 = vmatprep.subr.bf16.mxu0 %v3078
    %3545 = vmatpush1.bf16.msra.mxu0 %v3077
    %3546 = vmatprep.subr.bf16.mxu0 %v3082
    %3547 = vmatpush1.bf16.msra.mxu0 %v3081
    %3548 = vmatprep.subr.bf16.mxu0 %v3086
    %3549 = vmatpush1.bf16.msra.mxu0 %v3085
    %3550 = vmatprep.subr.bf16.mxu0 %v3090
    %3551 = vmatpush1.bf16.msra.mxu0 %v3089
    %3552 = vmatprep.subr.bf16.mxu0 %v3094
    %3553 = vmatpush1.bf16.msra.mxu0 %v3093
    %3554 = vmatprep.mubr.bf16.mxu0 %v2188
    %3555 = vmatmul.mubr.bf16.gmra.mrb[0].mxu0 %v2187
    %v3556 = vpop.f32.mrb[0].mxu0
    %v3557 = vadd.f32 %v3516, %v3556
    %v3558 = vpop.f32.mrb[0].mxu0
    %v3559 = vadd.f32 %v3518, %v3558
    %v3560 = vpop.f32.mrb[0].mxu0
    %v3561 = vpop.f32.mrb[0].mxu0
    %3562 = vdwg.mxu0
    %3563 = vmatprep.subr.bf16.mxu0 %v3098
    %3564 = vmatpush1.bf16.msra.mxu0 %v3097
    %3565 = vmatprep.subr.bf16.mxu0 %v3102
    %3566 = vmatpush1.bf16.msra.mxu0 %v3101
    %3567 = vmatprep.subr.bf16.mxu0 %v3106
    %3568 = vmatpush1.bf16.msra.mxu0 %v3105
    %3569 = vmatprep.subr.bf16.mxu0 %v3110
    %3570 = vmatpush1.bf16.msra.mxu0 %v3109
    %3571 = vmatprep.subr.bf16.mxu0 %v3114
    %3572 = vmatpush1.bf16.msra.mxu0 %v3113
    %3573 = vmatprep.subr.bf16.mxu0 %v3118
    %3574 = vmatpush1.bf16.msra.mxu0 %v3117
    %3575 = vmatprep.subr.bf16.mxu0 %v3122
    %3576 = vmatpush1.bf16.msra.mxu0 %v3121
    %3577 = vmatprep.subr.bf16.mxu0 %v3126
    %3578 = vmatpush1.bf16.msra.mxu0 %v3125
    %3579 = vmatprep.subr.bf16.mxu0 %v3130
    %3580 = vmatpush1.bf16.msra.mxu0 %v3129
    %3581 = vmatprep.subr.bf16.mxu0 %v3134
    %3582 = vmatpush1.bf16.msra.mxu0 %v3133
    %3583 = vmatprep.subr.bf16.mxu0 %v3138
    %3584 = vmatpush1.bf16.msra.mxu0 %v3137
    %3585 = vmatprep.subr.bf16.mxu0 %v3142
    %3586 = vmatpush1.bf16.msra.mxu0 %v3141
    %3587 = vmatprep.subr.bf16.mxu0 %v3146
    %3588 = vmatpush1.bf16.msra.mxu0 %v3145
    %3589 = vmatprep.subr.bf16.mxu0 %v3150
    %3590 = vmatpush1.bf16.msra.mxu0 %v3149
    %3591 = vmatprep.subr.bf16.mxu0 %v3154
    %3592 = vmatpush1.bf16.msra.mxu0 %v3153
    %3593 = vmatprep.subr.bf16.mxu0 %v3158
    %3594 = vmatpush1.bf16.msra.mxu0 %v3157
    %3595 = vmatprep.mubr.bf16.mxu0 %v2190
    %3596 = vmatmul.mubr.bf16.gmra.mrb[0].mxu0 %v2189
    %v3597 = vpop.f32.mrb[0].mxu0
    %v3598 = vadd.f32 %v3557, %v3597
    %v3599 = vpop.f32.mrb[0].mxu0
    %v3600 = vadd.f32 %v3559, %v3599
    %v3601 = vpop.f32.mrb[0].mxu0
    %v3602 = vpop.f32.mrb[0].mxu0
    %3603 = vdwg.mxu0
    %3604 = vmatprep.subr.bf16.mxu0 %v3162
    %3605 = vmatpush1.bf16.msra.mxu0 %v3161
    %3606 = vmatprep.subr.bf16.mxu0 %v3166
    %3607 = vmatpush1.bf16.msra.mxu0 %v3165
    %3608 = vmatprep.subr.bf16.mxu0 %v3170
    %3609 = vmatpush1.bf16.msra.mxu0 %v3169
    %3610 = vmatprep.subr.bf16.mxu0 %v3174
    %3611 = vmatpush1.bf16.msra.mxu0 %v3173
    %3612 = vmatprep.subr.bf16.mxu0 %v3178
    %3613 = vmatpush1.bf16.msra.mxu0 %v3177
    %3614 = vmatprep.subr.bf16.mxu0 %v3182
    %3615 = vmatpush1.bf16.msra.mxu0 %v3181
    %3616 = vmatprep.subr.bf16.mxu0 %v3186
    %3617 = vmatpush1.bf16.msra.mxu0 %v3185
    %3618 = vmatprep.subr.bf16.mxu0 %v3190
    %3619 = vmatpush1.bf16.msra.mxu0 %v3189
    %3620 = vmatprep.subr.bf16.mxu0 %v3194
    %3621 = vmatpush1.bf16.msra.mxu0 %v3193
    %3622 = vmatprep.subr.bf16.mxu0 %v3198
    %3623 = vmatpush1.bf16.msra.mxu0 %v3197
    %3624 = vmatprep.subr.bf16.mxu0 %v3202
    %3625 = vmatpush1.bf16.msra.mxu0 %v3201
    %3626 = vmatprep.subr.bf16.mxu0 %v3206
    %3627 = vmatpush1.bf16.msra.mxu0 %v3205
    %3628 = vmatprep.subr.bf16.mxu0 %v3210
    %3629 = vmatpush1.bf16.msra.mxu0 %v3209
    %3630 = vmatprep.subr.bf16.mxu0 %v3214
    %3631 = vmatpush1.bf16.msra.mxu0 %v3213
    %3632 = vmatprep.subr.bf16.mxu0 %v3218
    %3633 = vmatpush1.bf16.msra.mxu0 %v3217
    %3634 = vmatprep.subr.bf16.mxu0 %v3222
    %3635 = vmatpush1.bf16.msra.mxu0 %v3221
    %3636 = vmatprep.mubr.bf16.mxu0 %v2192
    %3637 = vmatmul.mubr.bf16.gmra.mrb[0].mxu0 %v2191
    %v3638 = vpop.f32.mrb[0].mxu0
    %v3639 = vadd.f32 %v3598, %v3638
    %v3640 = vpop.f32.mrb[0].mxu0
    %v3641 = vadd.f32 %v3600, %v3640
    %v3642 = vpop.f32.mrb[0].mxu0
    %v3643 = vpop.f32.mrb[0].mxu0
    %3644 = vdwg.mxu0
    %3645 = vmatprep.subr.bf16.mxu0 %v2972
    %3646 = vmatpush1.bf16.msra.mxu0 %v2971
    %3647 = vmatprep.subr.bf16.mxu0 %v2976
    %3648 = vmatpush1.bf16.msra.mxu0 %v2975
    %3649 = vmatprep.subr.bf16.mxu0 %v2980
    %3650 = vmatpush1.bf16.msra.mxu0 %v2979
    %3651 = vmatprep.subr.bf16.mxu0 %v2984
    %3652 = vmatpush1.bf16.msra.mxu0 %v2983
    %3653 = vmatprep.subr.bf16.mxu0 %v2988
    %3654 = vmatpush1.bf16.msra.mxu0 %v2987
    %3655 = vmatprep.subr.bf16.mxu0 %v2992
    %3656 = vmatpush1.bf16.msra.mxu0 %v2991
    %3657 = vmatprep.subr.bf16.mxu0 %v2996
    %3658 = vmatpush1.bf16.msra.mxu0 %v2995
    %3659 = vmatprep.subr.bf16.mxu0 %v3000
    %3660 = vmatpush1.bf16.msra.mxu0 %v2999
    %3661 = vmatprep.subr.bf16.mxu0 %v3004
    %3662 = vmatpush1.bf16.msra.mxu0 %v3003
    %3663 = vmatprep.subr.bf16.mxu0 %v3008
    %3664 = vmatpush1.bf16.msra.mxu0 %v3007
    %3665 = vmatprep.subr.bf16.mxu0 %v3012
    %3666 = vmatpush1.bf16.msra.mxu0 %v3011
    %3667 = vmatprep.subr.bf16.mxu0 %v3016
    %3668 = vmatpush1.bf16.msra.mxu0 %v3015
    %3669 = vmatprep.subr.bf16.mxu0 %v3020
    %3670 = vmatpush1.bf16.msra.mxu0 %v3019
    %3671 = vmatprep.subr.bf16.mxu0 %v3024
    %3672 = vmatpush1.bf16.msra.mxu0 %v3023
    %3673 = vmatprep.subr.bf16.mxu0 %v3028
    %3674 = vmatpush1.bf16.msra.mxu0 %v3027
    %3675 = vmatprep.subr.bf16.mxu0 %v3032
    %3676 = vmatpush1.bf16.msra.mxu0 %v3031
    %3677 = vmatprep.mubr.bf16.mxu0 %v2186
    %3678 = vmatmul.mubr.bf16.gmra.mrb[0].mxu0 %v2185
    %v3679 = vpop.f32.mrb[0].mxu0
    %v3680 = vadd.f32 %v2135, %v3679
    %v3681 = vpop.f32.mrb[0].mxu0
    %v3682 = vadd.f32 %v2139, %v3681
    %v3683 = vpop.f32.mrb[0].mxu0
    %v3684 = vpop.f32.mrb[0].mxu0
    %3685 = vdwg.mxu0
    %3686 = vmatprep.subr.bf16.mxu0 %v3036
    %3687 = vmatpush1.bf16.msra.mxu0 %v3035
    %3688 = vmatprep.subr.bf16.mxu0 %v3040
    %3689 = vmatpush1.bf16.msra.mxu0 %v3039
    %3690 = vmatprep.subr.bf16.mxu0 %v3044
    %3691 = vmatpush1.bf16.msra.mxu0 %v3043
    %3692 = vmatprep.subr.bf16.mxu0 %v3048
    %3693 = vmatpush1.bf16.msra.mxu0 %v3047
    %3694 = vmatprep.subr.bf16.mxu0 %v3052
    %3695 = vmatpush1.bf16.msra.mxu0 %v3051
    %3696 = vmatprep.subr.bf16.mxu0 %v3056
    %3697 = vmatpush1.bf16.msra.mxu0 %v3055
    %3698 = vmatprep.subr.bf16.mxu0 %v3060
    %3699 = vmatpush1.bf16.msra.mxu0 %v3059
    %3700 = vmatprep.subr.bf16.mxu0 %v3064
    %3701 = vmatpush1.bf16.msra.mxu0 %v3063
    %3702 = vmatprep.subr.bf16.mxu0 %v3068
    %3703 = vmatpush1.bf16.msra.mxu0 %v3067
    %3704 = vmatprep.subr.bf16.mxu0 %v3072
    %3705 = vmatpush1.bf16.msra.mxu0 %v3071
    %3706 = vmatprep.subr.bf16.mxu0 %v3076
    %3707 = vmatpush1.bf16.msra.mxu0 %v3075
    %3708 = vmatprep.subr.bf16.mxu0 %v3080
    %3709 = vmatpush1.bf16.msra.mxu0 %v3079
    %3710 = vmatprep.subr.bf16.mxu0 %v3084
    %3711 = vmatpush1.bf16.msra.mxu0 %v3083
    %3712 = vmatprep.subr.bf16.mxu0 %v3088
    %3713 = vmatpush1.bf16.msra.mxu0 %v3087
    %3714 = vmatprep.subr.bf16.mxu0 %v3092
    %3715 = vmatpush1.bf16.msra.mxu0 %v3091
    %3716 = vmatprep.subr.bf16.mxu0 %v3096
    %3717 = vmatpush1.bf16.msra.mxu0 %v3095
    %3718 = vmatprep.mubr.bf16.mxu0 %v2188
    %3719 = vmatmul.mubr.bf16.gmra.mrb[0].mxu0 %v2187
    %v3720 = vpop.f32.mrb[0].mxu0
    %v3721 = vadd.f32 %v3680, %v3720
    %v3722 = vpop.f32.mrb[0].mxu0
    %v3723 = vadd.f32 %v3682, %v3722
    %v3724 = vpop.f32.mrb[0].mxu0
    %v3725 = vpop.f32.mrb[0].mxu0
    %3726 = vdwg.mxu0
    %3727 = vmatprep.subr.bf16.mxu0 %v3100
    %3728 = vmatpush1.bf16.msra.mxu0 %v3099
    %3729 = vmatprep.subr.bf16.mxu0 %v3104
    %3730 = vmatpush1.bf16.msra.mxu0 %v3103
    %3731 = vmatprep.subr.bf16.mxu0 %v3108
    %3732 = vmatpush1.bf16.msra.mxu0 %v3107
    %3733 = vmatprep.subr.bf16.mxu0 %v3112
    %3734 = vmatpush1.bf16.msra.mxu0 %v3111
    %3735 = vmatprep.subr.bf16.mxu0 %v3116
    %3736 = vmatpush1.bf16.msra.mxu0 %v3115
    %3737 = vmatprep.subr.bf16.mxu0 %v3120
    %3738 = vmatpush1.bf16.msra.mxu0 %v3119
    %3739 = vmatprep.subr.bf16.mxu0 %v3124
    %3740 = vmatpush1.bf16.msra.mxu0 %v3123
    %3741 = vmatprep.subr.bf16.mxu0 %v3128
    %3742 = vmatpush1.bf16.msra.mxu0 %v3127
    %3743 = vmatprep.subr.bf16.mxu0 %v3132
    %3744 = vmatpush1.bf16.msra.mxu0 %v3131
    %3745 = vmatprep.subr.bf16.mxu0 %v3136
    %3746 = vmatpush1.bf16.msra.mxu0 %v3135
    %3747 = vmatprep.subr.bf16.mxu0 %v3140
    %3748 = vmatpush1.bf16.msra.mxu0 %v3139
    %3749 = vmatprep.subr.bf16.mxu0 %v3144
    %3750 = vmatpush1.bf16.msra.mxu0 %v3143
    %3751 = vmatprep.subr.bf16.mxu0 %v3148
    %3752 = vmatpush1.bf16.msra.mxu0 %v3147
    %3753 = vmatprep.subr.bf16.mxu0 %v3152
    %3754 = vmatpush1.bf16.msra.mxu0 %v3151
    %3755 = vmatprep.subr.bf16.mxu0 %v3156
    %3756 = vmatpush1.bf16.msra.mxu0 %v3155
    %3757 = vmatprep.subr.bf16.mxu0 %v3160
    %3758 = vmatpush1.bf16.msra.mxu0 %v3159
    %3759 = vmatprep.mubr.bf16.mxu0 %v2190
    %3760 = vmatmul.mubr.bf16.gmra.mrb[0].mxu0 %v2189
    %v3761 = vpop.f32.mrb[0].mxu0
    %v3762 = vadd.f32 %v3721, %v3761
    %v3763 = vpop.f32.mrb[0].mxu0
    %v3764 = vadd.f32 %v3723, %v3763
    %v3765 = vpop.f32.mrb[0].mxu0
    %v3766 = vpop.f32.mrb[0].mxu0
    %3767 = vdwg.mxu0
    %3768 = vmatprep.subr.bf16.mxu0 %v3164
    %3769 = vmatpush1.bf16.msra.mxu0 %v3163
    %3770 = vmatprep.subr.bf16.mxu0 %v3168
    %3771 = vmatpush1.bf16.msra.mxu0 %v3167
    %3772 = vmatprep.subr.bf16.mxu0 %v3172
    %3773 = vmatpush1.bf16.msra.mxu0 %v3171
    %3774 = vmatprep.subr.bf16.mxu0 %v3176
    %3775 = vmatpush1.bf16.msra.mxu0 %v3175
    %3776 = vmatprep.subr.bf16.mxu0 %v3180
    %3777 = vmatpush1.bf16.msra.mxu0 %v3179
    %3778 = vmatprep.subr.bf16.mxu0 %v3184
    %3779 = vmatpush1.bf16.msra.mxu0 %v3183
    %3780 = vmatprep.subr.bf16.mxu0 %v3188
    %3781 = vmatpush1.bf16.msra.mxu0 %v3187
    %3782 = vmatprep.subr.bf16.mxu0 %v3192
    %3783 = vmatpush1.bf16.msra.mxu0 %v3191
    %3784 = vmatprep.subr.bf16.mxu0 %v3196
    %3785 = vmatpush1.bf16.msra.mxu0 %v3195
    %3786 = vmatprep.subr.bf16.mxu0 %v3200
    %3787 = vmatpush1.bf16.msra.mxu0 %v3199
    %3788 = vmatprep.subr.bf16.mxu0 %v3204
    %3789 = vmatpush1.bf16.msra.mxu0 %v3203
    %3790 = vmatprep.subr.bf16.mxu0 %v3208
    %3791 = vmatpush1.bf16.msra.mxu0 %v3207
    %3792 = vmatprep.subr.bf16.mxu0 %v3212
    %3793 = vmatpush1.bf16.msra.mxu0 %v3211
    %3794 = vmatprep.subr.bf16.mxu0 %v3216
    %3795 = vmatpush1.bf16.msra.mxu0 %v3215
    %3796 = vmatprep.subr.bf16.mxu0 %v3220
    %3797 = vmatpush1.bf16.msra.mxu0 %v3219
    %3798 = vmatprep.subr.bf16.mxu0 %v3224
    %3799 = vmatpush1.bf16.msra.mxu0 %v3223
    %3800 = vmatprep.mubr.bf16.mxu0 %v2192
    %3801 = vmatmul.mubr.bf16.gmra.mrb[0].mxu0 %v2191
    %v3802 = vpop.f32.mrb[0].mxu0
    %v3803 = vadd.f32 %v3762, %v3802
    %v3804 = vpop.f32.mrb[0].mxu0
    %v3805 = vadd.f32 %v3764, %v3804
    %v3806 = vpop.f32.mrb[0].mxu0
    %v3807 = vpop.f32.mrb[0].mxu0
    %3808 = vdwg.mxu0
    %v3809 = vmax.f32 %v3639, 0.0
    %v3810 = vmax.f32 %v3641, 0.0
    %v3811 = vmax.f32 %v3803, 0.0
    %v3812 = vmax.f32 %v3805, 0.0
    %v3813 = vpack.c.bf16 %v3809, %v3809
    %v3814 = vpack.c.bf16 %v3810, %v3810
    %v3815 = vpack.c.bf16 %v3811, %v3811
    %v3816 = vpack.c.bf16 %v3812, %v3812
    %v3817 = vld [vmem:[#allocation7] sm:$0xff]
    %v3818 = vld [vmem:[#allocation7 + $0x8] sm:$0xff]
    %v3819 = vld [vmem:[#allocation7 + $0x10] sm:$0xff]
    %v3820 = vld [vmem:[#allocation7 + $0x18] sm:$0xff]
    %v3821 = vld [vmem:[#allocation7 + $0x20] sm:$0xff]
    %v3822 = vld [vmem:[#allocation7 + $0x28] sm:$0xff]
    %v3823 = vld [vmem:[#allocation7 + $0x30] sm:$0xff]
    %v3824 = vld [vmem:[#allocation7 + $0x38] sm:$0xff]
    %v3825 = vld [vmem:[#allocation7 + $0x40] sm:$0xff]
    %v3826 = vld [vmem:[#allocation7 + $0x48] sm:$0xff]
    %v3827 = vld [vmem:[#allocation7 + $0x50] sm:$0xff]
    %v3828 = vld [vmem:[#allocation7 + $0x58] sm:$0xff]
    %v3829 = vld [vmem:[#allocation7 + $0x60] sm:$0xff]
    %v3830 = vld [vmem:[#allocation7 + $0x68] sm:$0xff]
    %v3831 = vld [vmem:[#allocation7 + $0x70] sm:$0xff]
    %v3832 = vld [vmem:[#allocation7 + $0x78] sm:$0xff]
    %v3833 = vld [vmem:[#allocation7 + $0x80] sm:$0xff]
    %v3834 = vld [vmem:[#allocation7 + $0x88] sm:$0xff]
    %v3835 = vld [vmem:[#allocation7 + $0x90] sm:$0xff]
    %v3836 = vld [vmem:[#allocation7 + $0x98] sm:$0xff]
    %v3837 = vld [vmem:[#allocation7 + $0xa0] sm:$0xff]
    %v3838 = vld [vmem:[#allocation7 + $0xa8] sm:$0xff]
    %v3839 = vld [vmem:[#allocation7 + $0xb0] sm:$0xff]
    %v3840 = vld [vmem:[#allocation7 + $0xb8] sm:$0xff]
    %v3841 = vld [vmem:[#allocation7 + $0xc0] sm:$0xff]
    %v3842 = vld [vmem:[#allocation7 + $0xc8] sm:$0xff]
    %v3843 = vld [vmem:[#allocation7 + $0xd0] sm:$0xff]
    %v3844 = vld [vmem:[#allocation7 + $0xd8] sm:$0xff]
    %v3845 = vld [vmem:[#allocation7 + $0xe0] sm:$0xff]
    %v3846 = vld [vmem:[#allocation7 + $0xe8] sm:$0xff]
    %v3847 = vld [vmem:[#allocation7 + $0xf0] sm:$0xff]
    %v3848 = vld [vmem:[#allocation7 + $0xf8] sm:$0xff]
    %v3849 = vld [vmem:[#allocation7 + $0x100] sm:$0xff]
    %v3850 = vld [vmem:[#allocation7 + $0x108] sm:$0xff]
    %v3851 = vld [vmem:[#allocation7 + $0x110] sm:$0xff]
    %v3852 = vld [vmem:[#allocation7 + $0x118] sm:$0xff]
    %v3853 = vld [vmem:[#allocation7 + $0x120] sm:$0xff]
    %v3854 = vld [vmem:[#allocation7 + $0x128] sm:$0xff]
    %v3855 = vld [vmem:[#allocation7 + $0x130] sm:$0xff]
    %v3856 = vld [vmem:[#allocation7 + $0x138] sm:$0xff]
    %v3857 = vld [vmem:[#allocation7 + $0x140] sm:$0xff]
    %v3858 = vld [vmem:[#allocation7 + $0x148] sm:$0xff]
    %v3859 = vld [vmem:[#allocation7 + $0x150] sm:$0xff]
    %v3860 = vld [vmem:[#allocation7 + $0x158] sm:$0xff]
    %v3861 = vld [vmem:[#allocation7 + $0x160] sm:$0xff]
    %v3862 = vld [vmem:[#allocation7 + $0x168] sm:$0xff]
    %v3863 = vld [vmem:[#allocation7 + $0x170] sm:$0xff]
    %v3864 = vld [vmem:[#allocation7 + $0x178] sm:$0xff]
    %v3865 = vld [vmem:[#allocation7 + $0x180] sm:$0xff]
    %v3866 = vld [vmem:[#allocation7 + $0x188] sm:$0xff]
    %v3867 = vld [vmem:[#allocation7 + $0x190] sm:$0xff]
    %v3868 = vld [vmem:[#allocation7 + $0x198] sm:$0xff]
    %v3869 = vld [vmem:[#allocation7 + $0x1a0] sm:$0xff]
    %v3870 = vld [vmem:[#allocation7 + $0x1a8] sm:$0xff]
    %v3871 = vld [vmem:[#allocation7 + $0x1b0] sm:$0xff]
    %v3872 = vld [vmem:[#allocation7 + $0x1b8] sm:$0xff]
    %v3873 = vld [vmem:[#allocation7 + $0x1c0] sm:$0xff]
    %v3874 = vld [vmem:[#allocation7 + $0x1c8] sm:$0xff]
    %v3875 = vld [vmem:[#allocation7 + $0x1d0] sm:$0xff]
    %v3876 = vld [vmem:[#allocation7 + $0x1d8] sm:$0xff]
    %v3877 = vld [vmem:[#allocation7 + $0x1e0] sm:$0xff]
    %v3878 = vld [vmem:[#allocation7 + $0x1e8] sm:$0xff]
    %v3879 = vld [vmem:[#allocation7 + $0x1f0] sm:$0xff]
    %v3880 = vld [vmem:[#allocation7 + $0x1f8] sm:$0xff]
    %v3881 = vld [vmem:[%s10] sm:$0x3]
    %v3883 = vlaneseq
    %v3884 = vshrl.u32 %v3883, 7
    %v3885 = vsub.s32 0, %v3884
    %v3886 = vrot.slane %v3881, %v3885
    %v3887 = vlaneseq
    %v3888 = vshrl.u32 %v3887, 7
    %v3889 = vsub.s32 1, %v3888
    %v3890 = vrot.slane %v3881, %v3889
    %v3957 = vunpack.c.l.b16 %v3817
    %v3958 = vunpack.c.h.b16 %v3817
    %v3959 = vunpack.c.l.b16 %v3818
    %v3960 = vunpack.c.h.b16 %v3818
    %v3961 = vunpack.c.l.b16 %v3819
    %v3962 = vunpack.c.h.b16 %v3819
    %v3963 = vunpack.c.l.b16 %v3820
    %v3964 = vunpack.c.h.b16 %v3820
    %v3965 = vunpack.c.l.b16 %v3821
    %v3966 = vunpack.c.h.b16 %v3821
    %v3967 = vunpack.c.l.b16 %v3822
    %v3968 = vunpack.c.h.b16 %v3822
    %v3969 = vunpack.c.l.b16 %v3823
    %v3970 = vunpack.c.h.b16 %v3823
    %v3971 = vunpack.c.l.b16 %v3824
    %v3972 = vunpack.c.h.b16 %v3824
    %v3973 = vunpack.c.l.b16 %v3825
    %v3974 = vunpack.c.h.b16 %v3825
    %v3975 = vunpack.c.l.b16 %v3826
    %v3976 = vunpack.c.h.b16 %v3826
    %v3977 = vunpack.c.l.b16 %v3827
    %v3978 = vunpack.c.h.b16 %v3827
    %v3979 = vunpack.c.l.b16 %v3828
    %v3980 = vunpack.c.h.b16 %v3828
    %v3981 = vunpack.c.l.b16 %v3829
    %v3982 = vunpack.c.h.b16 %v3829
    %v3983 = vunpack.c.l.b16 %v3830
    %v3984 = vunpack.c.h.b16 %v3830
    %v3985 = vunpack.c.l.b16 %v3831
    %v3986 = vunpack.c.h.b16 %v3831
    %v3987 = vunpack.c.l.b16 %v3832
    %v3988 = vunpack.c.h.b16 %v3832
    %v3989 = vunpack.c.l.b16 %v3833
    %v3990 = vunpack.c.h.b16 %v3833
    %v3991 = vunpack.c.l.b16 %v3834
    %v3992 = vunpack.c.h.b16 %v3834
    %v3993 = vunpack.c.l.b16 %v3835
    %v3994 = vunpack.c.h.b16 %v3835
    %v3995 = vunpack.c.l.b16 %v3836
    %v3996 = vunpack.c.h.b16 %v3836
    %v3997 = vunpack.c.l.b16 %v3837
    %v3998 = vunpack.c.h.b16 %v3837
    %v3999 = vunpack.c.l.b16 %v3838
    %v4000 = vunpack.c.h.b16 %v3838
    %v4001 = vunpack.c.l.b16 %v3839
    %v4002 = vunpack.c.h.b16 %v3839
    %v4003 = vunpack.c.l.b16 %v3840
    %v4004 = vunpack.c.h.b16 %v3840
    %v4005 = vunpack.c.l.b16 %v3841
    %v4006 = vunpack.c.h.b16 %v3841
    %v4007 = vunpack.c.l.b16 %v3842
    %v4008 = vunpack.c.h.b16 %v3842
    %v4009 = vunpack.c.l.b16 %v3843
    %v4010 = vunpack.c.h.b16 %v3843
    %v4011 = vunpack.c.l.b16 %v3844
    %v4012 = vunpack.c.h.b16 %v3844
    %v4013 = vunpack.c.l.b16 %v3845
    %v4014 = vunpack.c.h.b16 %v3845
    %v4015 = vunpack.c.l.b16 %v3846
    %v4016 = vunpack.c.h.b16 %v3846
    %v4017 = vunpack.c.l.b16 %v3847
    %v4018 = vunpack.c.h.b16 %v3847
    %v4019 = vunpack.c.l.b16 %v3848
    %v4020 = vunpack.c.h.b16 %v3848
    %v4021 = vunpack.c.l.b16 %v3849
    %v4022 = vunpack.c.h.b16 %v3849
    %v4023 = vunpack.c.l.b16 %v3850
    %v4024 = vunpack.c.h.b16 %v3850
    %v4025 = vunpack.c.l.b16 %v3851
    %v4026 = vunpack.c.h.b16 %v3851
    %v4027 = vunpack.c.l.b16 %v3852
    %v4028 = vunpack.c.h.b16 %v3852
    %v4029 = vunpack.c.l.b16 %v3853
    %v4030 = vunpack.c.h.b16 %v3853
    %v4031 = vunpack.c.l.b16 %v3854
    %v4032 = vunpack.c.h.b16 %v3854
    %v4033 = vunpack.c.l.b16 %v3855
    %v4034 = vunpack.c.h.b16 %v3855
    %v4035 = vunpack.c.l.b16 %v3856
    %v4036 = vunpack.c.h.b16 %v3856
    %v4037 = vunpack.c.l.b16 %v3857
    %v4038 = vunpack.c.h.b16 %v3857
    %v4039 = vunpack.c.l.b16 %v3858
    %v4040 = vunpack.c.h.b16 %v3858
    %v4041 = vunpack.c.l.b16 %v3859
    %v4042 = vunpack.c.h.b16 %v3859
    %v4043 = vunpack.c.l.b16 %v3860
    %v4044 = vunpack.c.h.b16 %v3860
    %v4045 = vunpack.c.l.b16 %v3861
    %v4046 = vunpack.c.h.b16 %v3861
    %v4047 = vunpack.c.l.b16 %v3862
    %v4048 = vunpack.c.h.b16 %v3862
    %v4049 = vunpack.c.l.b16 %v3863
    %v4050 = vunpack.c.h.b16 %v3863
    %v4051 = vunpack.c.l.b16 %v3864
    %v4052 = vunpack.c.h.b16 %v3864
    %v4053 = vunpack.c.l.b16 %v3865
    %v4054 = vunpack.c.h.b16 %v3865
    %v4055 = vunpack.c.l.b16 %v3866
    %v4056 = vunpack.c.h.b16 %v3866
    %v4057 = vunpack.c.l.b16 %v3867
    %v4058 = vunpack.c.h.b16 %v3867
    %v4059 = vunpack.c.l.b16 %v3868
    %v4060 = vunpack.c.h.b16 %v3868
    %v4061 = vunpack.c.l.b16 %v3869
    %v4062 = vunpack.c.h.b16 %v3869
    %v4063 = vunpack.c.l.b16 %v3870
    %v4064 = vunpack.c.h.b16 %v3870
    %v4065 = vunpack.c.l.b16 %v3871
    %v4066 = vunpack.c.h.b16 %v3871
    %v4067 = vunpack.c.l.b16 %v3872
    %v4068 = vunpack.c.h.b16 %v3872
    %v4069 = vunpack.c.l.b16 %v3873
    %v4070 = vunpack.c.h.b16 %v3873
    %v4071 = vunpack.c.l.b16 %v3874
    %v4072 = vunpack.c.h.b16 %v3874
    %v4073 = vunpack.c.l.b16 %v3875
    %v4074 = vunpack.c.h.b16 %v3875
    %v4075 = vunpack.c.l.b16 %v3876
    %v4076 = vunpack.c.h.b16 %v3876
    %v4077 = vunpack.c.l.b16 %v3877
    %v4078 = vunpack.c.h.b16 %v3877
    %v4079 = vunpack.c.l.b16 %v3878
    %v4080 = vunpack.c.h.b16 %v3878
    %v4081 = vunpack.c.l.b16 %v3879
    %v4082 = vunpack.c.h.b16 %v3879
    %v4083 = vunpack.c.l.b16 %v3880
    %v4084 = vunpack.c.h.b16 %v3880
    %v4085 = vpack.c.b16 %v3959, %v3957
    %v4086 = vpack.c.b16 %v3960, %v3958
    %v4087 = vpack.c.b16 %v3963, %v3961
    %v4088 = vpack.c.b16 %v3964, %v3962
    %v4089 = vpack.c.b16 %v3967, %v3965
    %v4090 = vpack.c.b16 %v3968, %v3966
    %v4091 = vpack.c.b16 %v3971, %v3969
    %v4092 = vpack.c.b16 %v3972, %v3970
    %v4093 = vpack.c.b16 %v3975, %v3973
    %v4094 = vpack.c.b16 %v3976, %v3974
    %v4095 = vpack.c.b16 %v3979, %v3977
    %v4096 = vpack.c.b16 %v3980, %v3978
    %v4097 = vpack.c.b16 %v3983, %v3981
    %v4098 = vpack.c.b16 %v3984, %v3982
    %v4099 = vpack.c.b16 %v3987, %v3985
    %v4100 = vpack.c.b16 %v3988, %v3986
    %v4101 = vpack.c.b16 %v3991, %v3989
    %v4102 = vpack.c.b16 %v3992, %v3990
    %v4103 = vpack.c.b16 %v3995, %v3993
    %v4104 = vpack.c.b16 %v3996, %v3994
    %v4105 = vpack.c.b16 %v3999, %v3997
    %v4106 = vpack.c.b16 %v4000, %v3998
    %v4107 = vpack.c.b16 %v4003, %v4001
    %v4108 = vpack.c.b16 %v4004, %v4002
    %v4109 = vpack.c.b16 %v4007, %v4005
    %v4110 = vpack.c.b16 %v4008, %v4006
    %v4111 = vpack.c.b16 %v4011, %v4009
    %v4112 = vpack.c.b16 %v4012, %v4010
    %v4113 = vpack.c.b16 %v4015, %v4013
    %v4114 = vpack.c.b16 %v4016, %v4014
    %v4115 = vpack.c.b16 %v4019, %v4017
    %v4116 = vpack.c.b16 %v4020, %v4018
    %v4117 = vpack.c.b16 %v4023, %v4021
    %v4118 = vpack.c.b16 %v4024, %v4022
    %v4119 = vpack.c.b16 %v4027, %v4025
    %v4120 = vpack.c.b16 %v4028, %v4026
    %v4121 = vpack.c.b16 %v4031, %v4029
    %v4122 = vpack.c.b16 %v4032, %v4030
    %v4123 = vpack.c.b16 %v4035, %v4033
    %v4124 = vpack.c.b16 %v4036, %v4034
    %v4125 = vpack.c.b16 %v4039, %v4037
    %v4126 = vpack.c.b16 %v4040, %v4038
    %v4127 = vpack.c.b16 %v4043, %v4041
    %v4128 = vpack.c.b16 %v4044, %v4042
    %v4129 = vpack.c.b16 %v4047, %v4045
    %v4130 = vpack.c.b16 %v4048, %v4046
    %v4131 = vpack.c.b16 %v4051, %v4049
    %v4132 = vpack.c.b16 %v4052, %v4050
    %v4133 = vpack.c.b16 %v4055, %v4053
    %v4134 = vpack.c.b16 %v4056, %v4054
    %v4135 = vpack.c.b16 %v4059, %v4057
    %v4136 = vpack.c.b16 %v4060, %v4058
    %v4137 = vpack.c.b16 %v4063, %v4061
    %v4138 = vpack.c.b16 %v4064, %v4062
    %v4139 = vpack.c.b16 %v4067, %v4065
    %v4140 = vpack.c.b16 %v4068, %v4066
    %v4141 = vpack.c.b16 %v4071, %v4069
    %v4142 = vpack.c.b16 %v4072, %v4070
    %v4143 = vpack.c.b16 %v4075, %v4073
    %v4144 = vpack.c.b16 %v4076, %v4074
    %v4145 = vpack.c.b16 %v4079, %v4077
    %v4146 = vpack.c.b16 %v4080, %v4078
    %v4147 = vpack.c.b16 %v4083, %v4081
    %v4148 = vpack.c.b16 %v4084, %v4082
    %4213 = vmatprep.subr.bf16.mxu0 %v4086
    %4214 = vmatpush1.bf16.msra.mxu0 %v4085
    %4215 = vmatprep.subr.bf16.mxu0 %v4088
    %4216 = vmatpush1.bf16.msra.mxu0 %v4087
    %4217 = vmatprep.subr.bf16.mxu0 %v4090
    %4218 = vmatpush1.bf16.msra.mxu0 %v4089
    %4219 = vmatprep.subr.bf16.mxu0 %v4092
    %4220 = vmatpush1.bf16.msra.mxu0 %v4091
    %4221 = vmatprep.subr.bf16.mxu0 %v4094
    %4222 = vmatpush1.bf16.msra.mxu0 %v4093
    %4223 = vmatprep.subr.bf16.mxu0 %v4096
    %4224 = vmatpush1.bf16.msra.mxu0 %v4095
    %4225 = vmatprep.subr.bf16.mxu0 %v4098
    %4226 = vmatpush1.bf16.msra.mxu0 %v4097
    %4227 = vmatprep.subr.bf16.mxu0 %v4100
    %4228 = vmatpush1.bf16.msra.mxu0 %v4099
    %4229 = vmatprep.subr.bf16.mxu0 %v4102
    %4230 = vmatpush1.bf16.msra.mxu0 %v4101
    %4231 = vmatprep.subr.bf16.mxu0 %v4104
    %4232 = vmatpush1.bf16.msra.mxu0 %v4103
    %4233 = vmatprep.subr.bf16.mxu0 %v4106
    %4234 = vmatpush1.bf16.msra.mxu0 %v4105
    %4235 = vmatprep.subr.bf16.mxu0 %v4108
    %4236 = vmatpush1.bf16.msra.mxu0 %v4107
    %4237 = vmatprep.subr.bf16.mxu0 %v4110
    %4238 = vmatpush1.bf16.msra.mxu0 %v4109
    %4239 = vmatprep.subr.bf16.mxu0 %v4112
    %4240 = vmatpush1.bf16.msra.mxu0 %v4111
    %4241 = vmatprep.subr.bf16.mxu0 %v4114
    %4242 = vmatpush1.bf16.msra.mxu0 %v4113
    %4243 = vmatprep.subr.bf16.mxu0 %v4116
    %4244 = vmatpush1.bf16.msra.mxu0 %v4115
    %4245 = vmatprep.mubr.bf16.mxu0 %v3814
    %4246 = vmatmul.mubr.bf16.gmra.mrb[0].mxu0 %v3813
    %v4247 = vpop.f32.mrb[0].mxu0
    %v4248 = vadd.f32 %v3886, %v4247
    %v4249 = vpop.f32.mrb[0].mxu0
    %v4250 = vadd.f32 %v3890, %v4249
    %v4251 = vpop.f32.mrb[0].mxu0
    %v4252 = vpop.f32.mrb[0].mxu0
    %4253 = vdwg.mxu0
    %4254 = vmatprep.subr.bf16.mxu0 %v4118
    %4255 = vmatpush1.bf16.msra.mxu0 %v4117
    %4256 = vmatprep.subr.bf16.mxu0 %v4120
    %4257 = vmatpush1.bf16.msra.mxu0 %v4119
    %4258 = vmatprep.subr.bf16.mxu0 %v4122
    %4259 = vmatpush1.bf16.msra.mxu0 %v4121
    %4260 = vmatprep.subr.bf16.mxu0 %v4124
    %4261 = vmatpush1.bf16.msra.mxu0 %v4123
    %4262 = vmatprep.subr.bf16.mxu0 %v4126
    %4263 = vmatpush1.bf16.msra.mxu0 %v4125
    %4264 = vmatprep.subr.bf16.mxu0 %v4128
    %4265 = vmatpush1.bf16.msra.mxu0 %v4127
    %4266 = vmatprep.subr.bf16.mxu0 %v4130
    %4267 = vmatpush1.bf16.msra.mxu0 %v4129
    %4268 = vmatprep.subr.bf16.mxu0 %v4132
    %4269 = vmatpush1.bf16.msra.mxu0 %v4131
    %4270 = vmatprep.subr.bf16.mxu0 %v4134
    %4271 = vmatpush1.bf16.msra.mxu0 %v4133
    %4272 = vmatprep.subr.bf16.mxu0 %v4136
    %4273 = vmatpush1.bf16.msra.mxu0 %v4135
    %4274 = vmatprep.subr.bf16.mxu0 %v4138
    %4275 = vmatpush1.bf16.msra.mxu0 %v4137
    %4276 = vmatprep.subr.bf16.mxu0 %v4140
    %4277 = vmatpush1.bf16.msra.mxu0 %v4139
    %4278 = vmatprep.subr.bf16.mxu0 %v4142
    %4279 = vmatpush1.bf16.msra.mxu0 %v4141
    %4280 = vmatprep.subr.bf16.mxu0 %v4144
    %4281 = vmatpush1.bf16.msra.mxu0 %v4143
    %4282 = vmatprep.subr.bf16.mxu0 %v4146
    %4283 = vmatpush1.bf16.msra.mxu0 %v4145
    %4284 = vmatprep.subr.bf16.mxu0 %v4148
    %4285 = vmatpush1.bf16.msra.mxu0 %v4147
    %4286 = vmatprep.mubr.bf16.mxu0 %v3816
    %4287 = vmatmul.mubr.bf16.gmra.mrb[0].mxu0 %v3815
    %v4288 = vpop.f32.mrb[0].mxu0
    %v4289 = vadd.f32 %v4248, %v4288
    %v4290 = vpop.f32.mrb[0].mxu0
    %v4291 = vadd.f32 %v4250, %v4290
    %v4292 = vpop.f32.mrb[0].mxu0
    %v4293 = vpop.f32.mrb[0].mxu0
    %4294 = vdwg.mxu0
    %v4295 = vmax.f32 %v4289, 0.0
    %v4296 = vmax.f32 %v4291, 0.0
    %v4297 = vpack.c.bf16 %v4295, %v4295
    %v4298 = vpack.c.bf16 %v4296, %v4296
    %v4299 = vld [vmem:[%s11] sm:$0xf]
    %v4300 = vld [vmem:[%s11 + $0x4] sm:$0xf]
    %v4301 = vld [vmem:[%s11 + $0x8] sm:$0xf]
    %v4302 = vld [vmem:[%s11 + $0xc] sm:$0xf]
    %v4303 = vld [vmem:[%s11 + $0x10] sm:$0xf]
    %v4304 = vld [vmem:[%s11 + $0x14] sm:$0xf]
    %v4305 = vld [vmem:[%s11 + $0x18] sm:$0xf]
    %v4306 = vld [vmem:[%s11 + $0x1c] sm:$0xf]
    %v4307 = vld [vmem:[%s11 + $0x20] sm:$0xf]
    %v4308 = vld [vmem:[%s11 + $0x24] sm:$0xf]
    %v4309 = vld [vmem:[%s11 + $0x28] sm:$0xf]
    %v4310 = vld [vmem:[%s11 + $0x2c] sm:$0xf]
    %v4311 = vld [vmem:[%s11 + $0x30] sm:$0xf]
    %v4312 = vld [vmem:[%s11 + $0x34] sm:$0xf]
    %v4313 = vld [vmem:[%s11 + $0x38] sm:$0xf]
    %v4314 = vld [vmem:[%s11 + $0x3c] sm:$0xf]
    %v4315 = vld [vmem:[%s11 + $0x40] sm:$0xf]
    %v4316 = vld [vmem:[%s11 + $0x44] sm:$0xf]
    %v4317 = vld [vmem:[%s11 + $0x48] sm:$0xf]
    %v4318 = vld [vmem:[%s11 + $0x4c] sm:$0xf]
    %v4319 = vld [vmem:[%s11 + $0x50] sm:$0xf]
    %v4320 = vld [vmem:[%s11 + $0x54] sm:$0xf]
    %v4321 = vld [vmem:[%s11 + $0x58] sm:$0xf]
    %v4322 = vld [vmem:[%s11 + $0x5c] sm:$0xf]
    %v4323 = vld [vmem:[%s11 + $0x60] sm:$0xf]
    %v4324 = vld [vmem:[%s11 + $0x64] sm:$0xf]
    %v4325 = vld [vmem:[%s11 + $0x68] sm:$0xf]
    %v4326 = vld [vmem:[%s11 + $0x6c] sm:$0xf]
    %v4327 = vld [vmem:[%s11 + $0x70] sm:$0xf]
    %v4328 = vld [vmem:[%s11 + $0x74] sm:$0xf]
    %v4329 = vld [vmem:[%s11 + $0x78] sm:$0xf]
    %v4330 = vld [vmem:[%s11 + $0x7c] sm:$0xf]
    %v4331 = vld [vmem:[%s12] sm:$0x1]
    %v4333 = vlaneseq
    %v4334 = vshrl.u32 %v4333, 7
    %v4335 = vsub.s32 0, %v4334
    %v4336 = vrot.slane %v4331, %v4335
    %v4370 = vunpack.c.l.b16 %v4299
    %v4371 = vunpack.c.l.b16 %v4300
    %v4372 = vunpack.c.l.b16 %v4301
    %v4373 = vunpack.c.l.b16 %v4302
    %v4374 = vunpack.c.l.b16 %v4303
    %v4375 = vunpack.c.l.b16 %v4304
    %v4376 = vunpack.c.l.b16 %v4305
    %v4377 = vunpack.c.l.b16 %v4306
    %v4378 = vunpack.c.l.b16 %v4307
    %v4379 = vunpack.c.l.b16 %v4308
    %v4380 = vunpack.c.l.b16 %v4309
    %v4381 = vunpack.c.l.b16 %v4310
    %v4382 = vunpack.c.l.b16 %v4311
    %v4383 = vunpack.c.l.b16 %v4312
    %v4384 = vunpack.c.l.b16 %v4313
    %v4385 = vunpack.c.l.b16 %v4314
    %v4386 = vunpack.c.l.b16 %v4315
    %v4387 = vunpack.c.l.b16 %v4316
    %v4388 = vunpack.c.l.b16 %v4317
    %v4389 = vunpack.c.l.b16 %v4318
    %v4390 = vunpack.c.l.b16 %v4319
    %v4391 = vunpack.c.l.b16 %v4320
    %v4392 = vunpack.c.l.b16 %v4321
    %v4393 = vunpack.c.l.b16 %v4322
    %v4394 = vunpack.c.l.b16 %v4323
    %v4395 = vunpack.c.l.b16 %v4324
    %v4396 = vunpack.c.l.b16 %v4325
    %v4397 = vunpack.c.l.b16 %v4326
    %v4398 = vunpack.c.l.b16 %v4327
    %v4399 = vunpack.c.l.b16 %v4328
    %v4400 = vunpack.c.l.b16 %v4329
    %v4401 = vunpack.c.l.b16 %v4330
    %v4402 = vpack.c.b16 %v4371, %v4370
    %v4403 = vpack.c.b16 %v4373, %v4372
    %v4404 = vpack.c.b16 %v4375, %v4374
    %v4405 = vpack.c.b16 %v4377, %v4376
    %v4406 = vpack.c.b16 %v4379, %v4378
    %v4407 = vpack.c.b16 %v4381, %v4380
    %v4408 = vpack.c.b16 %v4383, %v4382
    %v4409 = vpack.c.b16 %v4385, %v4384
    %v4410 = vpack.c.b16 %v4387, %v4386
    %v4411 = vpack.c.b16 %v4389, %v4388
    %v4412 = vpack.c.b16 %v4391, %v4390
    %v4413 = vpack.c.b16 %v4393, %v4392
    %v4414 = vpack.c.b16 %v4395, %v4394
    %v4415 = vpack.c.b16 %v4397, %v4396
    %v4416 = vpack.c.b16 %v4399, %v4398
    %v4417 = vpack.c.b16 %v4401, %v4400
    %4434 = vmatprep.subr.bf16.mxu0 0
    %4435 = vmatpush1.bf16.msra.mxu0 %v4402
    %4436 = vmatprep.subr.bf16.mxu0 0
    %4437 = vmatpush1.bf16.msra.mxu0 %v4403
    %4438 = vmatprep.subr.bf16.mxu0 0
    %4439 = vmatpush1.bf16.msra.mxu0 %v4404
    %4440 = vmatprep.subr.bf16.mxu0 0
    %4441 = vmatpush1.bf16.msra.mxu0 %v4405
    %4442 = vmatprep.subr.bf16.mxu0 0
    %4443 = vmatpush1.bf16.msra.mxu0 %v4406
    %4444 = vmatprep.subr.bf16.mxu0 0
    %4445 = vmatpush1.bf16.msra.mxu0 %v4407
    %4446 = vmatprep.subr.bf16.mxu0 0
    %4447 = vmatpush1.bf16.msra.mxu0 %v4408
    %4448 = vmatprep.subr.bf16.mxu0 0
    %4449 = vmatpush1.bf16.msra.mxu0 %v4409
    %4450 = vmatprep.subr.bf16.mxu0 0
    %4451 = vmatpush1.bf16.msra.mxu0 %v4410
    %4452 = vmatprep.subr.bf16.mxu0 0
    %4453 = vmatpush1.bf16.msra.mxu0 %v4411
    %4454 = vmatprep.subr.bf16.mxu0 0
    %4455 = vmatpush1.bf16.msra.mxu0 %v4412
    %4456 = vmatprep.subr.bf16.mxu0 0
    %4457 = vmatpush1.bf16.msra.mxu0 %v4413
    %4458 = vmatprep.subr.bf16.mxu0 0
    %4459 = vmatpush1.bf16.msra.mxu0 %v4414
    %4460 = vmatprep.subr.bf16.mxu0 0
    %4461 = vmatpush1.bf16.msra.mxu0 %v4415
    %4462 = vmatprep.subr.bf16.mxu0 0
    %4463 = vmatpush1.bf16.msra.mxu0 %v4416
    %4464 = vmatprep.subr.bf16.mxu0 0
    %4465 = vmatpush1.bf16.msra.mxu0 %v4417
    %4466 = vmatprep.mubr.bf16.mxu0 %v4298
    %4467 = vmatmul.mubr.bf16.gmra.mrb[0].mxu0 %v4297
    %v4468 = vpop.f32.mrb[0].mxu0
    %v4469 = vadd.f32 %v4336, %v4468
    %v4470 = vpop.f32.mrb[0].mxu0
    %v4471 = vpop.f32.mrb[0].mxu0
    %v4472 = vpop.f32.mrb[0].mxu0
    %4473 = vdwg.mxu0
    %v4474 = vlaneseq
    %v4475 = vand.u32 %v4474, 127
    %vm4476 = vcmp.lt.s32.totalorder %v4475, 0
    %v4477 = vsub.s32 0, %v4475
    %v4478 = vsel %vm4476, %v4477, %v4475
    %v4479 = vshrl.u32 %v4478, 2
    %v4480 = vand.u32 %v4478, 3
    %v4481 = vsub.s32 0, %v4480
    %v4482 = vsel %vm4476, %v4481, %v4480
    %vm4483 = vcmp.ne.s32.totalorder %v4482, 0
    %vm4484 = vcmp.lt.s32.totalorder %v4482, 0
    %vm4485 = vmand %vm4484, %vm4483
    %v4486 = vadd.s32 %v4482, 4
    %v4487 = vsel %vm4485, %v4486, %v4482
    %vm4488 = vcmp.eq.s32.totalorder %v4487, 0
    %v4489 = vsel %vm4488, 1.0, 0.0
    %v4490 = vadd.f32 %v4469, %v4489
    %vm4491 = vcmask 66560
    %4492 = vst.msk [vmem:[#allocation8] sm:$0x3] %vm4491, %v4490
    // Predicated region
    $region66: #{tpu_custom_call.1} parent=1 // pred_check
      _
    $region67: #{tpu_custom_call.1} parent=1 // pred_check_branch
      %4494 = sbr.rel (0) target = $region69
    $region68: #{tpu_custom_call.1} parent=1 // pred_region
      %s4496 = ssub.s32 32, 32
      %4497 = vsyncadd [#allocation4], %s4496
      %s4499 = sshll.u32 [#allocation8], 4
      %s4500 = int_to_ptr.vmem [resolvable:$true] %s4499
      %4502 = dma.vmem_to_hbm [thread:$0]  %s4500, 32, %s13, [#allocation4]
    $region69: #{tpu_custom_call.1} parent=1 // pred_fallthru
      _
    // Predicated region
    $region70: #{tpu_custom_call.1} parent=1 // pred_check
      _
    $region71: #{tpu_custom_call.1} parent=1 // pred_check_branch
      %4504 = sbr.rel (0) target = $region73
    $region72: #{tpu_custom_call.1} parent=1 // pred_region
      %4505 = dma.done [#allocation4], 32
    $region73: #{tpu_custom_call.1} parent=1 // pred_fallthru
      _
    %4506 = vsyncpa [#allocation3], 1
    %4507 = vsyncpa [#allocation6], 1
    %4508 = vsyncpa [#allocation4], 1

</llo_original>
